<compile_context>
chip_gen: v6e
topology: v6e:2x2x1
jax: 0.10.0
libtpu: 0.0.40
codegen_flags: <defaults>
</compile_context>

<pallas_src>
import functools

import jax
import jax.numpy as jnp
from jax import lax
from jax.experimental import pallas as pl
from jax.experimental.pallas import tpu as pltpu


def cross_attention_kernel(x_ref, info_ref, wqT_ref, wkT_ref, wvT_ref,
                           wpT_ref, bp_ref, o_ref, *, num_heads):
    # x_ref:    (BB, N1, C)   batch-block of `input`
    # info_ref: (BB, N2, C)   batch-block of `information`
    # w*T_ref:  (C, C)        pre-transposed Linear weights (in, out);
    #                         the softmax scale is already folded into WqT.
    # bp_ref:   (1, C)        proj bias
    # o_ref:    (BB, N1, C)
    BB, N1, C = x_ref.shape
    _, N2, _ = info_ref.shape
    D = C // num_heads

    wqT = wqT_ref[...]
    wkT = wkT_ref[...]
    wvT = wvT_ref[...]
    wpT = wpT_ref[...]
    bias = bp_ref[...].astype(jnp.float32)          # (1, C)

    for b in range(BB):                             # static, fully unrolled
        xb = x_ref[b]                               # (N1, C), native dtype
        ib = info_ref[b]                            # (N2, C), native dtype

        # Big C-contraction projections: native-dtype operands (bf16-ready),
        # f32 accumulation, no in-kernel weight transpose. qkv_bias=False.
        q = jnp.dot(xb, wqT, preferred_element_type=jnp.float32).astype(xb.dtype)
        k = jnp.dot(ib, wkT, preferred_element_type=jnp.float32).astype(ib.dtype)
        v = jnp.dot(ib, wvT, preferred_element_type=jnp.float32).astype(ib.dtype)

        acc = jnp.zeros((N1, C), jnp.float32)       # single live accumulator
        for h in range(num_heads):                  # static, fully unrolled
            qh = q[:, h * D:(h + 1) * D]            # (N1, D)
            kh = k[:, h * D:(h + 1) * D]            # (N2, D)
            vh = v[:, h * D:(h + 1) * D]            # (N2, D)

            # Scores: contract last dims directly (no kh.T relayout); the
            # 1/sqrt(D) scale is already folded into WqT.
            s = lax.dot_general(qh, kh, (((1,), (1,)), ((), ())),
                                preferred_element_type=jnp.float32)   # (N1, N2)
            s = s - jnp.max(s, axis=-1, keepdims=True)
            p = jnp.exp(s)
            # One reciprocal per row + broadcast multiply instead of a full
            # (N1, N2) divide.  (approx=True moves it onto the EUP at ~1e-4
            # relative error if that is acceptable.)
            p = p * pl.reciprocal(jnp.sum(p, axis=-1, keepdims=True),
                                  approx=False)
            # attn_drop: p=0.0 -> identity

            ctx_h = jnp.dot(p.astype(vh.dtype), vh,
                            preferred_element_type=jnp.float32)       # (N1, D)
            # Accumulate directly into the output projection: no head concat,
            # no (N1, D) lane-narrow slabs kept alive.
            acc = acc + jnp.dot(ctx_h.astype(wpT.dtype),
                                wpT[h * D:(h + 1) * D, :],
                                preferred_element_type=jnp.float32)   # (N1, C)

        # proj_drop: p=0.0 -> identity
        o_ref[b] = (acc + bias).astype(o_ref.dtype)


def cross_attention(inp, information, wq, wk, wv, wp, bp, *, num_heads,
                    qk_scale=None, batch_block=None):
    B, N1, C = inp.shape
    _, N2, _ = information.shape
    assert C % num_heads == 0
    head_dim = C // num_heads
    scale = qk_scale if qk_scale is not None else head_dim ** (-0.5)

    # Pre-transpose the weights (free at call time) so the kernel never runs
    # an in-kernel transpose; fold the softmax scale into Wq.
    wqT = (wq * scale).T            # (in, out), scale folded in
    wkT = wk.T
    wvT = wv.T
    wpT = wp.T
    bp2 = bp.reshape(1, C)

    if batch_block is None:
        # Fatter grid steps amortize the ~0.35us per-step overhead at small
        # shapes; fall back to fewer batch elements per step for big blocks.
        per_batch_bytes = (2 * N1 + N2) * C * inp.dtype.itemsize
        batch_block = B if B * per_batch_bytes <= (4 << 20) else 1
    while B % batch_block != 0:
        batch_block -= 1

    kernel = functools.partial(cross_attention_kernel, num_heads=num_heads)

    # TODO(synk): for large N1/N2/C add a parallel query-tile grid axis and
    # online-softmax KV tiling instead of whole-row (N1, N2) score blocks.
    return pl.pallas_call(
        kernel,
        out_shape=jax.ShapeDtypeStruct((B, N1, C), inp.dtype),
        grid_spec=pltpu.PrefetchScalarGridSpec(
            num_scalar_prefetch=0,
            grid=(B // batch_block,),
            in_specs=[
                pl.BlockSpec((batch_block, N1, C), lambda b: (b, 0, 0)),  # input
                pl.BlockSpec((batch_block, N2, C), lambda b: (b, 0, 0)),  # information
                pl.BlockSpec((C, C), lambda b: (0, 0)),                    # Wq^T (scaled)
                pl.BlockSpec((C, C), lambda b: (0, 0)),                    # Wk^T
                pl.BlockSpec((C, C), lambda b: (0, 0)),                    # Wv^T
                pl.BlockSpec((C, C), lambda b: (0, 0)),                    # Wproj^T
                pl.BlockSpec((1, C), lambda b: (0, 0)),                    # bproj
            ],
            out_specs=pl.BlockSpec((batch_block, N1, C), lambda b: (b, 0, 0)),
        ),
        compiler_params=pltpu.CompilerParams(
            dimension_semantics=("parallel",)),
    )(inp, information, wqT, wkT, wvT, wpT, bp2)


def cross_attention_ref(inp, information, wq, wk, wv, wp, bp, *, num_heads,
                        qk_scale=None):
    """Pure-JAX reference mirroring the PyTorch forward."""
    B, N1, C = inp.shape
    _, N2, _ = information.shape
    D = C // num_heads
    scale = qk_scale if qk_scale is not None else D ** (-0.5)

    q = (inp @ wq.T).reshape(B, N1, num_heads, D).transpose(0, 2, 1, 3)
    k = (information @ wk.T).reshape(B, N2, num_heads, D).transpose(0, 2, 1, 3)
    v = (information @ wv.T).reshape(B, N2, num_heads, D).transpose(0, 2, 1, 3)

    attn = jnp.einsum("bhqd,bhkd->bhqk", q, k) * scale
    attn = jax.nn.softmax(attn, axis=-1)
    out = jnp.einsum("bhqk,bhkd->bhqd", attn, v)
    out = out.transpose(0, 2, 1, 3).reshape(B, N1, C)
    out = out @ wp.T + bp
    return out


if __name__ == "__main__":
    # Small shapes consistent with the module's forward.
    B, N1, N2, C = 2, 16, 8, 32
    num_heads = 4  # head_dim = 8

    key = jax.random.PRNGKey(0)
    k1, k2, k3, k4, k5, k6, k7 = jax.random.split(key, 7)

    inp = jax.random.normal(k1, (B, N1, C), dtype=jnp.float32)
    information = jax.random.normal(k2, (B, N2, C), dtype=jnp.float32)

    # Deterministic parameter init (PyTorch Linear weight shape: (out, in)).
    wq = jax.random.normal(k3, (C, C), dtype=jnp.float32) * 0.05
    wk = jax.random.normal(k4, (C, C), dtype=jnp.float32) * 0.05
    wv = jax.random.normal(k5, (C, C), dtype=jnp.float32) * 0.05
    wp = jax.random.normal(k6, (C, C), dtype=jnp.float32) * 0.05
    bp = jax.random.normal(k7, (C,), dtype=jnp.float32) * 0.05

    out = cross_attention(inp, information, wq, wk, wv, wp, bp,
                          num_heads=num_heads)
    out = jax.block_until_ready(out)

    ref = cross_attention_ref(inp, information, wq, wk, wv, wp, bp,
                              num_heads=num_heads)
    assert out.shape == (B, N1, C)
    assert jnp.allclose(out, ref, atol=1e-4, rtol=1e-4)

    print("KERNEL_OK")
</pallas_src>

<mosaic_0001>
module attributes {stable_mosaic.version = 11 : i64} {
  func.func @cross_attention_kernel(%arg0: i32, %arg1: memref<2x16x32xf32, #tpu.memory_space<vmem>>, %arg2: memref<2x8x32xf32, #tpu.memory_space<vmem>>, %arg3: memref<32x32xf32, #tpu.memory_space<vmem>>, %arg4: memref<32x32xf32, #tpu.memory_space<vmem>>, %arg5: memref<32x32xf32, #tpu.memory_space<vmem>>, %arg6: memref<32x32xf32, #tpu.memory_space<vmem>>, %arg7: memref<1x32xf32, #tpu.memory_space<vmem>>, %arg8: memref<2x16x32xf32, #tpu.memory_space<vmem>>) attributes {dimension_semantics = [#tpu.dimension_semantics<parallel>], iteration_bounds = array<i64: 1>, scalar_prefetch = 0 : i64, scratch_operands = 0 : i64, tpu.core_type = #tpu.core_type<tc>, window_params = [{transform_indices = @transform_0, window_bounds = array<i64: 2, 16, 32>}, {transform_indices = @transform_1, window_bounds = array<i64: 2, 8, 32>}, {pipeline_mode = #tpu.pipeline_mode<synchronous>, transform_indices = @transform_2, window_bounds = array<i64: 32, 32>}, {pipeline_mode = #tpu.pipeline_mode<synchronous>, transform_indices = @transform_3, window_bounds = array<i64: 32, 32>}, {pipeline_mode = #tpu.pipeline_mode<synchronous>, transform_indices = @transform_4, window_bounds = array<i64: 32, 32>}, {pipeline_mode = #tpu.pipeline_mode<synchronous>, transform_indices = @transform_5, window_bounds = array<i64: 32, 32>}, {pipeline_mode = #tpu.pipeline_mode<synchronous>, transform_indices = @transform_6, window_bounds = array<i64: 1, 32>}, {transform_indices = @transform_7, window_bounds = array<i64: 2, 16, 32>}]} {
    %c0 = arith.constant 0 : index
    %c0_0 = arith.constant 0 : index
    %0 = vector.load %arg3[%c0, %c0_0] : memref<32x32xf32, #tpu.memory_space<vmem>>, vector<32x32xf32>
    %c0_1 = arith.constant 0 : index
    %c0_2 = arith.constant 0 : index
    %1 = vector.load %arg4[%c0_1, %c0_2] : memref<32x32xf32, #tpu.memory_space<vmem>>, vector<32x32xf32>
    %c0_3 = arith.constant 0 : index
    %c0_4 = arith.constant 0 : index
    %2 = vector.load %arg5[%c0_3, %c0_4] : memref<32x32xf32, #tpu.memory_space<vmem>>, vector<32x32xf32>
    %c0_5 = arith.constant 0 : index
    %c0_6 = arith.constant 0 : index
    %3 = vector.load %arg6[%c0_5, %c0_6] : memref<32x32xf32, #tpu.memory_space<vmem>>, vector<32x32xf32>
    %c0_7 = arith.constant 0 : index
    %c0_8 = arith.constant 0 : index
    %4 = vector.load %arg7[%c0_7, %c0_8] : memref<1x32xf32, #tpu.memory_space<vmem>>, vector<1x32xf32>
    %c0_9 = arith.constant 0 : index
    %c0_10 = arith.constant 0 : index
    %c0_11 = arith.constant 0 : index
    %5 = vector.load %arg1[%c0_9, %c0_10, %c0_11] : memref<2x16x32xf32, #tpu.memory_space<vmem>>, vector<1x16x32xf32>
    %6 = vector.shape_cast %5 : vector<1x16x32xf32> to vector<16x32xf32>
    %c0_12 = arith.constant 0 : index
    %c0_13 = arith.constant 0 : index
    %c0_14 = arith.constant 0 : index
    %7 = vector.load %arg2[%c0_12, %c0_13, %c0_14] : memref<2x8x32xf32, #tpu.memory_space<vmem>>, vector<1x8x32xf32>
    %8 = vector.shape_cast %7 : vector<1x8x32xf32> to vector<8x32xf32>
    %cst = arith.constant dense<0.000000e+00> : vector<16x32xf32>
    %9 = tpu.matmul %6, %0, %cst {dimension_numbers = #tpu.dot_dimension_numbers<[1], [0], [0], [1], [0, 0, 1, 1], [], []>} : vector<16x32xf32>, vector<32x32xf32>, vector<16x32xf32> -> vector<16x32xf32>
    %cst_15 = arith.constant dense<0.000000e+00> : vector<8x32xf32>
    %10 = tpu.matmul %8, %1, %cst_15 {dimension_numbers = #tpu.dot_dimension_numbers<[1], [0], [0], [1], [0, 0, 1, 1], [], []>} : vector<8x32xf32>, vector<32x32xf32>, vector<8x32xf32> -> vector<8x32xf32>
    %cst_16 = arith.constant dense<0.000000e+00> : vector<8x32xf32>
    %11 = tpu.matmul %8, %2, %cst_16 {dimension_numbers = #tpu.dot_dimension_numbers<[1], [0], [0], [1], [0, 0, 1, 1], [], []>} : vector<8x32xf32>, vector<32x32xf32>, vector<8x32xf32> -> vector<8x32xf32>
    %cst_17 = arith.constant 0.000000e+00 : f32
    %12 = vector.broadcast %cst_17 : f32 to vector<16x32xf32>
    %13 = vector.extract_strided_slice %9 {offsets = [0, 0], sizes = [16, 8], strides = [1, 1]} : vector<16x32xf32> to vector<16x8xf32>
    %14 = vector.extract_strided_slice %10 {offsets = [0, 0], sizes = [8, 8], strides = [1, 1]} : vector<8x32xf32> to vector<8x8xf32>
    %15 = vector.extract_strided_slice %11 {offsets = [0, 0], sizes = [8, 8], strides = [1, 1]} : vector<8x32xf32> to vector<8x8xf32>
    %cst_18 = arith.constant dense<0.000000e+00> : vector<16x8xf32>
    %16 = tpu.matmul %13, %14, %cst_18 {dimension_numbers = #tpu.dot_dimension_numbers<[1], [1], [0], [0], [0, 0, 1, 0], [], []>} : vector<16x8xf32>, vector<8x8xf32>, vector<16x8xf32> -> vector<16x8xf32>
    %cst_19 = arith.constant dense<0xFF800000> : vector<16xf32>
    %17 = vector.multi_reduction <maximumf>, %16, %cst_19 [1] : vector<16x8xf32> to vector<16xf32>
    %18 = vector.shape_cast %17 : vector<16xf32> to vector<16x1xf32>
    %19 = vector.broadcast %18 : vector<16x1xf32> to vector<16x8xf32>
    %20 = arith.subf %16, %19 : vector<16x8xf32>
    %21 = math.exp %20 : vector<16x8xf32>
    %cst_20 = arith.constant dense<0.000000e+00> : vector<16xf32>
    %22 = vector.multi_reduction <add>, %21, %cst_20 [1] : vector<16x8xf32> to vector<16xf32>
    %23 = vector.shape_cast %22 : vector<16xf32> to vector<16x1xf32>
    %24 = tpu.reciprocal %23 : vector<16x1xf32> -> vector<16x1xf32>
    %25 = vector.broadcast %24 : vector<16x1xf32> to vector<16x8xf32>
    %26 = arith.mulf %21, %25 : vector<16x8xf32>
    %cst_21 = arith.constant dense<0.000000e+00> : vector<16x8xf32>
    %27 = tpu.matmul %26, %15, %cst_21 {dimension_numbers = #tpu.dot_dimension_numbers<[1], [0], [0], [1], [0, 0, 1, 1], [], []>} : vector<16x8xf32>, vector<8x8xf32>, vector<16x8xf32> -> vector<16x8xf32>
    %28 = vector.extract_strided_slice %3 {offsets = [0, 0], sizes = [8, 32], strides = [1, 1]} : vector<32x32xf32> to vector<8x32xf32>
    %cst_22 = arith.constant dense<0.000000e+00> : vector<16x32xf32>
    %29 = tpu.matmul %27, %28, %cst_22 {dimension_numbers = #tpu.dot_dimension_numbers<[1], [0], [0], [1], [0, 0, 1, 1], [], []>} : vector<16x8xf32>, vector<8x32xf32>, vector<16x32xf32> -> vector<16x32xf32>
    %30 = arith.addf %12, %29 : vector<16x32xf32>
    %31 = vector.extract_strided_slice %9 {offsets = [0, 8], sizes = [16, 8], strides = [1, 1]} : vector<16x32xf32> to vector<16x8xf32>
    %32 = vector.extract_strided_slice %10 {offsets = [0, 8], sizes = [8, 8], strides = [1, 1]} : vector<8x32xf32> to vector<8x8xf32>
    %33 = vector.extract_strided_slice %11 {offsets = [0, 8], sizes = [8, 8], strides = [1, 1]} : vector<8x32xf32> to vector<8x8xf32>
    %cst_23 = arith.constant dense<0.000000e+00> : vector<16x8xf32>
    %34 = tpu.matmul %31, %32, %cst_23 {dimension_numbers = #tpu.dot_dimension_numbers<[1], [1], [0], [0], [0, 0, 1, 0], [], []>} : vector<16x8xf32>, vector<8x8xf32>, vector<16x8xf32> -> vector<16x8xf32>
    %cst_24 = arith.constant dense<0xFF800000> : vector<16xf32>
    %35 = vector.multi_reduction <maximumf>, %34, %cst_24 [1] : vector<16x8xf32> to vector<16xf32>
    %36 = vector.shape_cast %35 : vector<16xf32> to vector<16x1xf32>
    %37 = vector.broadcast %36 : vector<16x1xf32> to vector<16x8xf32>
    %38 = arith.subf %34, %37 : vector<16x8xf32>
    %39 = math.exp %38 : vector<16x8xf32>
    %cst_25 = arith.constant dense<0.000000e+00> : vector<16xf32>
    %40 = vector.multi_reduction <add>, %39, %cst_25 [1] : vector<16x8xf32> to vector<16xf32>
    %41 = vector.shape_cast %40 : vector<16xf32> to vector<16x1xf32>
    %42 = tpu.reciprocal %41 : vector<16x1xf32> -> vector<16x1xf32>
    %43 = vector.broadcast %42 : vector<16x1xf32> to vector<16x8xf32>
    %44 = arith.mulf %39, %43 : vector<16x8xf32>
    %cst_26 = arith.constant dense<0.000000e+00> : vector<16x8xf32>
    %45 = tpu.matmul %44, %33, %cst_26 {dimension_numbers = #tpu.dot_dimension_numbers<[1], [0], [0], [1], [0, 0, 1, 1], [], []>} : vector<16x8xf32>, vector<8x8xf32>, vector<16x8xf32> -> vector<16x8xf32>
    %46 = vector.extract_strided_slice %3 {offsets = [8, 0], sizes = [8, 32], strides = [1, 1]} : vector<32x32xf32> to vector<8x32xf32>
    %cst_27 = arith.constant dense<0.000000e+00> : vector<16x32xf32>
    %47 = tpu.matmul %45, %46, %cst_27 {dimension_numbers = #tpu.dot_dimension_numbers<[1], [0], [0], [1], [0, 0, 1, 1], [], []>} : vector<16x8xf32>, vector<8x32xf32>, vector<16x32xf32> -> vector<16x32xf32>
    %48 = arith.addf %30, %47 : vector<16x32xf32>
    %49 = vector.extract_strided_slice %9 {offsets = [0, 16], sizes = [16, 8], strides = [1, 1]} : vector<16x32xf32> to vector<16x8xf32>
    %50 = vector.extract_strided_slice %10 {offsets = [0, 16], sizes = [8, 8], strides = [1, 1]} : vector<8x32xf32> to vector<8x8xf32>
    %51 = vector.extract_strided_slice %11 {offsets = [0, 16], sizes = [8, 8], strides = [1, 1]} : vector<8x32xf32> to vector<8x8xf32>
    %cst_28 = arith.constant dense<0.000000e+00> : vector<16x8xf32>
    %52 = tpu.matmul %49, %50, %cst_28 {dimension_numbers = #tpu.dot_dimension_numbers<[1], [1], [0], [0], [0, 0, 1, 0], [], []>} : vector<16x8xf32>, vector<8x8xf32>, vector<16x8xf32> -> vector<16x8xf32>
    %cst_29 = arith.constant dense<0xFF800000> : vector<16xf32>
    %53 = vector.multi_reduction <maximumf>, %52, %cst_29 [1] : vector<16x8xf32> to vector<16xf32>
    %54 = vector.shape_cast %53 : vector<16xf32> to vector<16x1xf32>
    %55 = vector.broadcast %54 : vector<16x1xf32> to vector<16x8xf32>
    %56 = arith.subf %52, %55 : vector<16x8xf32>
    %57 = math.exp %56 : vector<16x8xf32>
    %cst_30 = arith.constant dense<0.000000e+00> : vector<16xf32>
    %58 = vector.multi_reduction <add>, %57, %cst_30 [1] : vector<16x8xf32> to vector<16xf32>
    %59 = vector.shape_cast %58 : vector<16xf32> to vector<16x1xf32>
    %60 = tpu.reciprocal %59 : vector<16x1xf32> -> vector<16x1xf32>
    %61 = vector.broadcast %60 : vector<16x1xf32> to vector<16x8xf32>
    %62 = arith.mulf %57, %61 : vector<16x8xf32>
    %cst_31 = arith.constant dense<0.000000e+00> : vector<16x8xf32>
    %63 = tpu.matmul %62, %51, %cst_31 {dimension_numbers = #tpu.dot_dimension_numbers<[1], [0], [0], [1], [0, 0, 1, 1], [], []>} : vector<16x8xf32>, vector<8x8xf32>, vector<16x8xf32> -> vector<16x8xf32>
    %64 = vector.extract_strided_slice %3 {offsets = [16, 0], sizes = [8, 32], strides = [1, 1]} : vector<32x32xf32> to vector<8x32xf32>
    %cst_32 = arith.constant dense<0.000000e+00> : vector<16x32xf32>
    %65 = tpu.matmul %63, %64, %cst_32 {dimension_numbers = #tpu.dot_dimension_numbers<[1], [0], [0], [1], [0, 0, 1, 1], [], []>} : vector<16x8xf32>, vector<8x32xf32>, vector<16x32xf32> -> vector<16x32xf32>
    %66 = arith.addf %48, %65 : vector<16x32xf32>
    %67 = vector.extract_strided_slice %9 {offsets = [0, 24], sizes = [16, 8], strides = [1, 1]} : vector<16x32xf32> to vector<16x8xf32>
    %68 = vector.extract_strided_slice %10 {offsets = [0, 24], sizes = [8, 8], strides = [1, 1]} : vector<8x32xf32> to vector<8x8xf32>
    %69 = vector.extract_strided_slice %11 {offsets = [0, 24], sizes = [8, 8], strides = [1, 1]} : vector<8x32xf32> to vector<8x8xf32>
    %cst_33 = arith.constant dense<0.000000e+00> : vector<16x8xf32>
    %70 = tpu.matmul %67, %68, %cst_33 {dimension_numbers = #tpu.dot_dimension_numbers<[1], [1], [0], [0], [0, 0, 1, 0], [], []>} : vector<16x8xf32>, vector<8x8xf32>, vector<16x8xf32> -> vector<16x8xf32>
    %cst_34 = arith.constant dense<0xFF800000> : vector<16xf32>
    %71 = vector.multi_reduction <maximumf>, %70, %cst_34 [1] : vector<16x8xf32> to vector<16xf32>
    %72 = vector.shape_cast %71 : vector<16xf32> to vector<16x1xf32>
    %73 = vector.broadcast %72 : vector<16x1xf32> to vector<16x8xf32>
    %74 = arith.subf %70, %73 : vector<16x8xf32>
    %75 = math.exp %74 : vector<16x8xf32>
    %cst_35 = arith.constant dense<0.000000e+00> : vector<16xf32>
    %76 = vector.multi_reduction <add>, %75, %cst_35 [1] : vector<16x8xf32> to vector<16xf32>
    %77 = vector.shape_cast %76 : vector<16xf32> to vector<16x1xf32>
    %78 = tpu.reciprocal %77 : vector<16x1xf32> -> vector<16x1xf32>
    %79 = vector.broadcast %78 : vector<16x1xf32> to vector<16x8xf32>
    %80 = arith.mulf %75, %79 : vector<16x8xf32>
    %cst_36 = arith.constant dense<0.000000e+00> : vector<16x8xf32>
    %81 = tpu.matmul %80, %69, %cst_36 {dimension_numbers = #tpu.dot_dimension_numbers<[1], [0], [0], [1], [0, 0, 1, 1], [], []>} : vector<16x8xf32>, vector<8x8xf32>, vector<16x8xf32> -> vector<16x8xf32>
    %82 = vector.extract_strided_slice %3 {offsets = [24, 0], sizes = [8, 32], strides = [1, 1]} : vector<32x32xf32> to vector<8x32xf32>
    %cst_37 = arith.constant dense<0.000000e+00> : vector<16x32xf32>
    %83 = tpu.matmul %81, %82, %cst_37 {dimension_numbers = #tpu.dot_dimension_numbers<[1], [0], [0], [1], [0, 0, 1, 1], [], []>} : vector<16x8xf32>, vector<8x32xf32>, vector<16x32xf32> -> vector<16x32xf32>
    %84 = arith.addf %66, %83 : vector<16x32xf32>
    %85 = vector.broadcast %4 : vector<1x32xf32> to vector<16x32xf32>
    %86 = arith.addf %84, %85 : vector<16x32xf32>
    %c0_38 = arith.constant 0 : index
    %c0_39 = arith.constant 0 : index
    %c0_40 = arith.constant 0 : index
    %87 = vector.load %arg8[%c0_38, %c0_39, %c0_40] : memref<2x16x32xf32, #tpu.memory_space<vmem>>, vector<1x16x32xf32>
    %88 = vector.shape_cast %87 : vector<1x16x32xf32> to vector<16x32xf32>
    %89 = vector.shape_cast %86 : vector<16x32xf32> to vector<1x16x32xf32>
    tpu.vector_store %arg8[%c0_38, %c0_39, %c0_40], %89 {strides = array<i32>} : memref<2x16x32xf32, #tpu.memory_space<vmem>>, vector<1x16x32xf32>,
    %c1 = arith.constant 1 : index
    %c0_41 = arith.constant 0 : index
    %c0_42 = arith.constant 0 : index
    %90 = vector.load %arg1[%c1, %c0_41, %c0_42] : memref<2x16x32xf32, #tpu.memory_space<vmem>>, vector<1x16x32xf32>
    %91 = vector.shape_cast %90 : vector<1x16x32xf32> to vector<16x32xf32>
    %c1_43 = arith.constant 1 : index
    %c0_44 = arith.constant 0 : index
    %c0_45 = arith.constant 0 : index
    %92 = vector.load %arg2[%c1_43, %c0_44, %c0_45] : memref<2x8x32xf32, #tpu.memory_space<vmem>>, vector<1x8x32xf32>
    %93 = vector.shape_cast %92 : vector<1x8x32xf32> to vector<8x32xf32>
    %cst_46 = arith.constant dense<0.000000e+00> : vector<16x32xf32>
    %94 = tpu.matmul %91, %0, %cst_46 {dimension_numbers = #tpu.dot_dimension_numbers<[1], [0], [0], [1], [0, 0, 1, 1], [], []>} : vector<16x32xf32>, vector<32x32xf32>, vector<16x32xf32> -> vector<16x32xf32>
    %cst_47 = arith.constant dense<0.000000e+00> : vector<8x32xf32>
    %95 = tpu.matmul %93, %1, %cst_47 {dimension_numbers = #tpu.dot_dimension_numbers<[1], [0], [0], [1], [0, 0, 1, 1], [], []>} : vector<8x32xf32>, vector<32x32xf32>, vector<8x32xf32> -> vector<8x32xf32>
    %cst_48 = arith.constant dense<0.000000e+00> : vector<8x32xf32>
    %96 = tpu.matmul %93, %2, %cst_48 {dimension_numbers = #tpu.dot_dimension_numbers<[1], [0], [0], [1], [0, 0, 1, 1], [], []>} : vector<8x32xf32>, vector<32x32xf32>, vector<8x32xf32> -> vector<8x32xf32>
    %cst_49 = arith.constant 0.000000e+00 : f32
    %97 = vector.broadcast %cst_49 : f32 to vector<16x32xf32>
    %98 = vector.extract_strided_slice %94 {offsets = [0, 0], sizes = [16, 8], strides = [1, 1]} : vector<16x32xf32> to vector<16x8xf32>
    %99 = vector.extract_strided_slice %95 {offsets = [0, 0], sizes = [8, 8], strides = [1, 1]} : vector<8x32xf32> to vector<8x8xf32>
    %100 = vector.extract_strided_slice %96 {offsets = [0, 0], sizes = [8, 8], strides = [1, 1]} : vector<8x32xf32> to vector<8x8xf32>
    %cst_50 = arith.constant dense<0.000000e+00> : vector<16x8xf32>
    %101 = tpu.matmul %98, %99, %cst_50 {dimension_numbers = #tpu.dot_dimension_numbers<[1], [1], [0], [0], [0, 0, 1, 0], [], []>} : vector<16x8xf32>, vector<8x8xf32>, vector<16x8xf32> -> vector<16x8xf32>
    %cst_51 = arith.constant dense<0xFF800000> : vector<16xf32>
    %102 = vector.multi_reduction <maximumf>, %101, %cst_51 [1] : vector<16x8xf32> to vector<16xf32>
    %103 = vector.shape_cast %102 : vector<16xf32> to vector<16x1xf32>
    %104 = vector.broadcast %103 : vector<16x1xf32> to vector<16x8xf32>
    %105 = arith.subf %101, %104 : vector<16x8xf32>
    %106 = math.exp %105 : vector<16x8xf32>
    %cst_52 = arith.constant dense<0.000000e+00> : vector<16xf32>
    %107 = vector.multi_reduction <add>, %106, %cst_52 [1] : vector<16x8xf32> to vector<16xf32>
    %108 = vector.shape_cast %107 : vector<16xf32> to vector<16x1xf32>
    %109 = tpu.reciprocal %108 : vector<16x1xf32> -> vector<16x1xf32>
    %110 = vector.broadcast %109 : vector<16x1xf32> to vector<16x8xf32>
    %111 = arith.mulf %106, %110 : vector<16x8xf32>
    %cst_53 = arith.constant dense<0.000000e+00> : vector<16x8xf32>
    %112 = tpu.matmul %111, %100, %cst_53 {dimension_numbers = #tpu.dot_dimension_numbers<[1], [0], [0], [1], [0, 0, 1, 1], [], []>} : vector<16x8xf32>, vector<8x8xf32>, vector<16x8xf32> -> vector<16x8xf32>
    %113 = vector.extract_strided_slice %3 {offsets = [0, 0], sizes = [8, 32], strides = [1, 1]} : vector<32x32xf32> to vector<8x32xf32>
    %cst_54 = arith.constant dense<0.000000e+00> : vector<16x32xf32>
    %114 = tpu.matmul %112, %113, %cst_54 {dimension_numbers = #tpu.dot_dimension_numbers<[1], [0], [0], [1], [0, 0, 1, 1], [], []>} : vector<16x8xf32>, vector<8x32xf32>, vector<16x32xf32> -> vector<16x32xf32>
    %115 = arith.addf %97, %114 : vector<16x32xf32>
    %116 = vector.extract_strided_slice %94 {offsets = [0, 8], sizes = [16, 8], strides = [1, 1]} : vector<16x32xf32> to vector<16x8xf32>
    %117 = vector.extract_strided_slice %95 {offsets = [0, 8], sizes = [8, 8], strides = [1, 1]} : vector<8x32xf32> to vector<8x8xf32>
    %118 = vector.extract_strided_slice %96 {offsets = [0, 8], sizes = [8, 8], strides = [1, 1]} : vector<8x32xf32> to vector<8x8xf32>
    %cst_55 = arith.constant dense<0.000000e+00> : vector<16x8xf32>
    %119 = tpu.matmul %116, %117, %cst_55 {dimension_numbers = #tpu.dot_dimension_numbers<[1], [1], [0], [0], [0, 0, 1, 0], [], []>} : vector<16x8xf32>, vector<8x8xf32>, vector<16x8xf32> -> vector<16x8xf32>
    %cst_56 = arith.constant dense<0xFF800000> : vector<16xf32>
    %120 = vector.multi_reduction <maximumf>, %119, %cst_56 [1] : vector<16x8xf32> to vector<16xf32>
    %121 = vector.shape_cast %120 : vector<16xf32> to vector<16x1xf32>
    %122 = vector.broadcast %121 : vector<16x1xf32> to vector<16x8xf32>
    %123 = arith.subf %119, %122 : vector<16x8xf32>
    %124 = math.exp %123 : vector<16x8xf32>
    %cst_57 = arith.constant dense<0.000000e+00> : vector<16xf32>
    %125 = vector.multi_reduction <add>, %124, %cst_57 [1] : vector<16x8xf32> to vector<16xf32>
    %126 = vector.shape_cast %125 : vector<16xf32> to vector<16x1xf32>
    %127 = tpu.reciprocal %126 : vector<16x1xf32> -> vector<16x1xf32>
    %128 = vector.broadcast %127 : vector<16x1xf32> to vector<16x8xf32>
    %129 = arith.mulf %124, %128 : vector<16x8xf32>
    %cst_58 = arith.constant dense<0.000000e+00> : vector<16x8xf32>
    %130 = tpu.matmul %129, %118, %cst_58 {dimension_numbers = #tpu.dot_dimension_numbers<[1], [0], [0], [1], [0, 0, 1, 1], [], []>} : vector<16x8xf32>, vector<8x8xf32>, vector<16x8xf32> -> vector<16x8xf32>
    %131 = vector.extract_strided_slice %3 {offsets = [8, 0], sizes = [8, 32], strides = [1, 1]} : vector<32x32xf32> to vector<8x32xf32>
    %cst_59 = arith.constant dense<0.000000e+00> : vector<16x32xf32>
    %132 = tpu.matmul %130, %131, %cst_59 {dimension_numbers = #tpu.dot_dimension_numbers<[1], [0], [0], [1], [0, 0, 1, 1], [], []>} : vector<16x8xf32>, vector<8x32xf32>, vector<16x32xf32> -> vector<16x32xf32>
    %133 = arith.addf %115, %132 : vector<16x32xf32>
    %134 = vector.extract_strided_slice %94 {offsets = [0, 16], sizes = [16, 8], strides = [1, 1]} : vector<16x32xf32> to vector<16x8xf32>
    %135 = vector.extract_strided_slice %95 {offsets = [0, 16], sizes = [8, 8], strides = [1, 1]} : vector<8x32xf32> to vector<8x8xf32>
    %136 = vector.extract_strided_slice %96 {offsets = [0, 16], sizes = [8, 8], strides = [1, 1]} : vector<8x32xf32> to vector<8x8xf32>
    %cst_60 = arith.constant dense<0.000000e+00> : vector<16x8xf32>
    %137 = tpu.matmul %134, %135, %cst_60 {dimension_numbers = #tpu.dot_dimension_numbers<[1], [1], [0], [0], [0, 0, 1, 0], [], []>} : vector<16x8xf32>, vector<8x8xf32>, vector<16x8xf32> -> vector<16x8xf32>
    %cst_61 = arith.constant dense<0xFF800000> : vector<16xf32>
    %138 = vector.multi_reduction <maximumf>, %137, %cst_61 [1] : vector<16x8xf32> to vector<16xf32>
    %139 = vector.shape_cast %138 : vector<16xf32> to vector<16x1xf32>
    %140 = vector.broadcast %139 : vector<16x1xf32> to vector<16x8xf32>
    %141 = arith.subf %137, %140 : vector<16x8xf32>
    %142 = math.exp %141 : vector<16x8xf32>
    %cst_62 = arith.constant dense<0.000000e+00> : vector<16xf32>
    %143 = vector.multi_reduction <add>, %142, %cst_62 [1] : vector<16x8xf32> to vector<16xf32>
    %144 = vector.shape_cast %143 : vector<16xf32> to vector<16x1xf32>
    %145 = tpu.reciprocal %144 : vector<16x1xf32> -> vector<16x1xf32>
    %146 = vector.broadcast %145 : vector<16x1xf32> to vector<16x8xf32>
    %147 = arith.mulf %142, %146 : vector<16x8xf32>
    %cst_63 = arith.constant dense<0.000000e+00> : vector<16x8xf32>
    %148 = tpu.matmul %147, %136, %cst_63 {dimension_numbers = #tpu.dot_dimension_numbers<[1], [0], [0], [1], [0, 0, 1, 1], [], []>} : vector<16x8xf32>, vector<8x8xf32>, vector<16x8xf32> -> vector<16x8xf32>
    %149 = vector.extract_strided_slice %3 {offsets = [16, 0], sizes = [8, 32], strides = [1, 1]} : vector<32x32xf32> to vector<8x32xf32>
    %cst_64 = arith.constant dense<0.000000e+00> : vector<16x32xf32>
    %150 = tpu.matmul %148, %149, %cst_64 {dimension_numbers = #tpu.dot_dimension_numbers<[1], [0], [0], [1], [0, 0, 1, 1], [], []>} : vector<16x8xf32>, vector<8x32xf32>, vector<16x32xf32> -> vector<16x32xf32>
    %151 = arith.addf %133, %150 : vector<16x32xf32>
    %152 = vector.extract_strided_slice %94 {offsets = [0, 24], sizes = [16, 8], strides = [1, 1]} : vector<16x32xf32> to vector<16x8xf32>
    %153 = vector.extract_strided_slice %95 {offsets = [0, 24], sizes = [8, 8], strides = [1, 1]} : vector<8x32xf32> to vector<8x8xf32>
    %154 = vector.extract_strided_slice %96 {offsets = [0, 24], sizes = [8, 8], strides = [1, 1]} : vector<8x32xf32> to vector<8x8xf32>
    %cst_65 = arith.constant dense<0.000000e+00> : vector<16x8xf32>
    %155 = tpu.matmul %152, %153, %cst_65 {dimension_numbers = #tpu.dot_dimension_numbers<[1], [1], [0], [0], [0, 0, 1, 0], [], []>} : vector<16x8xf32>, vector<8x8xf32>, vector<16x8xf32> -> vector<16x8xf32>
    %cst_66 = arith.constant dense<0xFF800000> : vector<16xf32>
    %156 = vector.multi_reduction <maximumf>, %155, %cst_66 [1] : vector<16x8xf32> to vector<16xf32>
    %157 = vector.shape_cast %156 : vector<16xf32> to vector<16x1xf32>
    %158 = vector.broadcast %157 : vector<16x1xf32> to vector<16x8xf32>
    %159 = arith.subf %155, %158 : vector<16x8xf32>
    %160 = math.exp %159 : vector<16x8xf32>
    %cst_67 = arith.constant dense<0.000000e+00> : vector<16xf32>
    %161 = vector.multi_reduction <add>, %160, %cst_67 [1] : vector<16x8xf32> to vector<16xf32>
    %162 = vector.shape_cast %161 : vector<16xf32> to vector<16x1xf32>
    %163 = tpu.reciprocal %162 : vector<16x1xf32> -> vector<16x1xf32>
    %164 = vector.broadcast %163 : vector<16x1xf32> to vector<16x8xf32>
    %165 = arith.mulf %160, %164 : vector<16x8xf32>
    %cst_68 = arith.constant dense<0.000000e+00> : vector<16x8xf32>
    %166 = tpu.matmul %165, %154, %cst_68 {dimension_numbers = #tpu.dot_dimension_numbers<[1], [0], [0], [1], [0, 0, 1, 1], [], []>} : vector<16x8xf32>, vector<8x8xf32>, vector<16x8xf32> -> vector<16x8xf32>
    %167 = vector.extract_strided_slice %3 {offsets = [24, 0], sizes = [8, 32], strides = [1, 1]} : vector<32x32xf32> to vector<8x32xf32>
    %cst_69 = arith.constant dense<0.000000e+00> : vector<16x32xf32>
    %168 = tpu.matmul %166, %167, %cst_69 {dimension_numbers = #tpu.dot_dimension_numbers<[1], [0], [0], [1], [0, 0, 1, 1], [], []>} : vector<16x8xf32>, vector<8x32xf32>, vector<16x32xf32> -> vector<16x32xf32>
    %169 = arith.addf %151, %168 : vector<16x32xf32>
    %170 = vector.broadcast %4 : vector<1x32xf32> to vector<16x32xf32>
    %171 = arith.addf %169, %170 : vector<16x32xf32>
    %c1_70 = arith.constant 1 : index
    %c0_71 = arith.constant 0 : index
    %c0_72 = arith.constant 0 : index
    %172 = vector.load %arg8[%c1_70, %c0_71, %c0_72] : memref<2x16x32xf32, #tpu.memory_space<vmem>>, vector<1x16x32xf32>
    %173 = vector.shape_cast %172 : vector<1x16x32xf32> to vector<16x32xf32>
    %174 = vector.shape_cast %171 : vector<16x32xf32> to vector<1x16x32xf32>
    tpu.vector_store %arg8[%c1_70, %c0_71, %c0_72], %174 {strides = array<i32>} : memref<2x16x32xf32, #tpu.memory_space<vmem>>, vector<1x16x32xf32>,
    return
  }
  func.func @transform_0(%arg0: i32) -> (i32, i32, i32) {
    %c0_i32 = arith.constant 0 : i32
    %c0_i32_0 = arith.constant 0 : i32
    %c0_i32_1 = arith.constant 0 : i32
    return %arg0, %c0_i32, %c0_i32_0 : i32, i32, i32
  }
  func.func @transform_1(%arg0: i32) -> (i32, i32, i32) {
    %c0_i32 = arith.constant 0 : i32
    %c0_i32_0 = arith.constant 0 : i32
    %c0_i32_1 = arith.constant 0 : i32
    return %arg0, %c0_i32, %c0_i32_0 : i32, i32, i32
  }
  func.func @transform_2(%arg0: i32) -> (i32, i32) {
    %c0_i32 = arith.constant 0 : i32
    %c0_i32_0 = arith.constant 0 : i32
    %c0_i32_1 = arith.constant 0 : i32
    return %c0_i32, %c0_i32_0 : i32, i32
  }
  func.func @transform_3(%arg0: i32) -> (i32, i32) {
    %c0_i32 = arith.constant 0 : i32
    %c0_i32_0 = arith.constant 0 : i32
    %c0_i32_1 = arith.constant 0 : i32
    return %c0_i32, %c0_i32_0 : i32, i32
  }
  func.func @transform_4(%arg0: i32) -> (i32, i32) {
    %c0_i32 = arith.constant 0 : i32
    %c0_i32_0 = arith.constant 0 : i32
    %c0_i32_1 = arith.constant 0 : i32
    return %c0_i32, %c0_i32_0 : i32, i32
  }
  func.func @transform_5(%arg0: i32) -> (i32, i32) {
    %c0_i32 = arith.constant 0 : i32
    %c0_i32_0 = arith.constant 0 : i32
    %c0_i32_1 = arith.constant 0 : i32
    return %c0_i32, %c0_i32_0 : i32, i32
  }
  func.func @transform_6(%arg0: i32) -> (i32, i32) {
    %c0_i32 = arith.constant 0 : i32
    %c0_i32_0 = arith.constant 0 : i32
    %c0_i32_1 = arith.constant 0 : i32
    return %c0_i32, %c0_i32_0 : i32, i32
  }
  func.func @transform_7(%arg0: i32) -> (i32, i32, i32) {
    %c0_i32 = arith.constant 0 : i32
    %c0_i32_0 = arith.constant 0 : i32
    %c0_i32_1 = arith.constant 0 : i32
    return %arg0, %c0_i32, %c0_i32_0 : i32, i32, i32
  }
}

</mosaic_0001>

<llo_original>
// kernel: tpu_custom_call.1
$region0: #{tpu_custom_call.1}
  #allocation0 [shape = 'u32[]', space=smem, size = 0x4, offset = 0x4, fixed_abs, tag = 'smem constant byte address 0x4 - core index']
  #allocation1 [shape = 'u32[144,128]{1,0:T(1,128)}', space=vmem, size = 0x12000, scoped, tag = 'internal scratch']
  %s0 = inlined_call_operand.hbm [shape: f32[2,16,32], index: 0, kind: input, shape index: {}]
  %s1 = inlined_call_operand.hbm [shape: f32[2,8,32], index: 1, kind: input, shape index: {}]
  %s2 = inlined_call_operand.hbm [shape: f32[32,32], index: 2, kind: input, shape index: {}]
  %s3 = inlined_call_operand.hbm [shape: f32[32,32], index: 3, kind: input, shape index: {}]
  %s4 = inlined_call_operand.hbm [shape: f32[32,32], index: 4, kind: input, shape index: {}]
  %s5 = inlined_call_operand.hbm [shape: f32[32,32], index: 5, kind: input, shape index: {}]
  %s6 = inlined_call_operand.vmem [shape: f32[1,32], index: 6, kind: input, shape index: {}]
  %s7 = inlined_call_operand.hbm [shape: f32[2,16,32], index: 7, kind: output, shape index: {}]
  %s8 = sld [smem:[#allocation0]]
  $region62: #{tpu_custom_call.1} parent=0
    _
  %s10 = ssub.s32 1, %s8
  %s11 = scalar_select 0, %s10, %s8
  $region1: #{tpu_custom_call.1} parent=0
    #allocation2 [shape = 'u8[16384]{0}', space=vmem, size = 0x4000, scoped, tag = 'input window, operand 0, single buffered']
    #allocation3 [shape = 's32[1]{0}', space=sflag, size = 0x4, scoped, tag = 'scoped memory for tpu_custom_call.1']
    #allocation4 [shape = 's32[1]{0}', space=sflag, size = 0x4, scoped, tag = 'scoped memory for tpu_custom_call.1']
    #allocation5 [shape = 'u8[8192]{0}', space=vmem, size = 0x2000, scoped, tag = 'input window, operand 1, single buffered']
    #allocation6 [shape = 's32[1]{0}', space=sflag, size = 0x4, scoped, tag = 'scoped memory for tpu_custom_call.1']
    #allocation7 [shape = 'u8[16384]{0}', space=vmem, size = 0x4000, scoped, tag = 'input window, operand 2, single buffered']
    #allocation8 [shape = 'u8[16384]{0}', space=vmem, size = 0x4000, scoped, tag = 'input window, operand 3, single buffered']
    #allocation9 [shape = 's32[1]{0}', space=sflag, size = 0x4, scoped, tag = 'scoped memory for tpu_custom_call.1']
    #allocation10 [shape = 'u8[16384]{0}', space=vmem, size = 0x4000, scoped, tag = 'input window, operand 4, single buffered']
    #allocation11 [shape = 'u8[16384]{0}', space=vmem, size = 0x4000, scoped, tag = 'input window, operand 5, single buffered']
    #allocation12 [shape = 's32[1]{0}', space=sflag, size = 0x4, scoped, tag = 'scoped memory for tpu_custom_call.1']
    #allocation13 [shape = 'u8[16384]{0}', space=vmem, size = 0x4000, scoped, tag = 'output window, operand 0, single buffered']
    %12 = vsyncpa [#allocation3], 0
    %13 = vsyncpa [#allocation6], 0
    %14 = vsyncpa [#allocation9], 0
    %15 = vsyncpa [#allocation12], 0
    %16 = vsyncpa [#allocation4], 0
    // Predicated region
    $region2: #{tpu_custom_call.1} parent=1 // pred_check
      _
    $region3: #{tpu_custom_call.1} parent=1 // pred_check_branch
      %18 = sbr.rel (0) target = $region5
    $region4: #{tpu_custom_call.1} parent=1 // pred_region
      %s20 = ssub.s32 512, 512
      %21 = vsyncadd [#allocation3], %s20
      %s22 = sshll.u32 [#allocation2], 4
      %s23 = int_to_ptr.vmem [resolvable:$true] %s22
      %28 = dma.hbm_to_vmem [thread:$0]  %s0, 512, %s23, [#allocation3], 128, 128, 8
    $region5: #{tpu_custom_call.1} parent=1 // pred_fallthru
      _
    // Predicated region
    $region6: #{tpu_custom_call.1} parent=1 // pred_check
      _
    $region7: #{tpu_custom_call.1} parent=1 // pred_check_branch
      %30 = sbr.rel (0) target = $region9
    $region8: #{tpu_custom_call.1} parent=1 // pred_region
      %s32 = ssub.s32 256, 256
      %33 = vsyncadd [#allocation6], %s32
      %s34 = sshll.u32 [#allocation5], 4
      %s35 = int_to_ptr.vmem [resolvable:$true] %s34
      %40 = dma.hbm_to_vmem [thread:$0]  %s1, 256, %s35, [#allocation6], 128, 128, 8
    $region9: #{tpu_custom_call.1} parent=1 // pred_fallthru
      _
    // Predicated region
    $region10: #{tpu_custom_call.1} parent=1 // pred_check
      _
    $region11: #{tpu_custom_call.1} parent=1 // pred_check_branch
      %42 = sbr.rel (0) target = $region13
    $region12: #{tpu_custom_call.1} parent=1 // pred_region
      %s44 = ssub.s32 512, 512
      %45 = vsyncadd [#allocation6], %s44
      %s46 = sshll.u32 [#allocation7], 4
      %s47 = int_to_ptr.vmem [resolvable:$true] %s46
      %52 = dma.hbm_to_vmem [thread:$0]  %s2, 512, %s47, [#allocation6], 128, 128, 8
    $region13: #{tpu_custom_call.1} parent=1 // pred_fallthru
      _
    // Predicated region
    $region14: #{tpu_custom_call.1} parent=1 // pred_check
      _
    $region15: #{tpu_custom_call.1} parent=1 // pred_check_branch
      %54 = sbr.rel (0) target = $region17
    $region16: #{tpu_custom_call.1} parent=1 // pred_region
      %s56 = ssub.s32 512, 512
      %57 = vsyncadd [#allocation9], %s56
      %s58 = sshll.u32 [#allocation8], 4
      %s59 = int_to_ptr.vmem [resolvable:$true] %s58
      %64 = dma.hbm_to_vmem [thread:$0]  %s3, 512, %s59, [#allocation9], 128, 128, 8
    $region17: #{tpu_custom_call.1} parent=1 // pred_fallthru
      _
    // Predicated region
    $region18: #{tpu_custom_call.1} parent=1 // pred_check
      _
    $region19: #{tpu_custom_call.1} parent=1 // pred_check_branch
      %66 = sbr.rel (0) target = $region21
    $region20: #{tpu_custom_call.1} parent=1 // pred_region
      %s68 = ssub.s32 512, 512
      %69 = vsyncadd [#allocation9], %s68
      %s70 = sshll.u32 [#allocation10], 4
      %s71 = int_to_ptr.vmem [resolvable:$true] %s70
      %76 = dma.hbm_to_vmem [thread:$0]  %s4, 512, %s71, [#allocation9], 128, 128, 8
    $region21: #{tpu_custom_call.1} parent=1 // pred_fallthru
      _
    // Predicated region
    $region22: #{tpu_custom_call.1} parent=1 // pred_check
      _
    $region23: #{tpu_custom_call.1} parent=1 // pred_check_branch
      %78 = sbr.rel (0) target = $region25
    $region24: #{tpu_custom_call.1} parent=1 // pred_region
      %s80 = ssub.s32 512, 512
      %81 = vsyncadd [#allocation12], %s80
      %s82 = sshll.u32 [#allocation11], 4
      %s83 = int_to_ptr.vmem [resolvable:$true] %s82
      %88 = dma.hbm_to_vmem [thread:$0]  %s5, 512, %s83, [#allocation12], 128, 128, 8
    $region25: #{tpu_custom_call.1} parent=1 // pred_fallthru
      _
    // Predicated region
    $region26: #{tpu_custom_call.1} parent=1 // pred_check
      _
    $region27: #{tpu_custom_call.1} parent=1 // pred_check_branch
      %90 = sbr.rel (0) target = $region29
    $region28: #{tpu_custom_call.1} parent=1 // pred_region
      _
    $region29: #{tpu_custom_call.1} parent=1 // pred_fallthru
      _
    // Predicated region
    $region30: #{tpu_custom_call.1} parent=1 // pred_check
      _
    $region31: #{tpu_custom_call.1} parent=1 // pred_check_branch
      %92 = sbr.rel (0) target = $region33
    $region32: #{tpu_custom_call.1} parent=1 // pred_region
      %93 = dma.done [#allocation3], 512
    $region33: #{tpu_custom_call.1} parent=1 // pred_fallthru
      _
    // Predicated region
    $region34: #{tpu_custom_call.1} parent=1 // pred_check
      _
    $region35: #{tpu_custom_call.1} parent=1 // pred_check_branch
      %95 = sbr.rel (0) target = $region37
    $region36: #{tpu_custom_call.1} parent=1 // pred_region
      %96 = dma.done [#allocation6], 256
    $region37: #{tpu_custom_call.1} parent=1 // pred_fallthru
      _
    // Predicated region
    $region38: #{tpu_custom_call.1} parent=1 // pred_check
      _
    $region39: #{tpu_custom_call.1} parent=1 // pred_check_branch
      %98 = sbr.rel (0) target = $region41
    $region40: #{tpu_custom_call.1} parent=1 // pred_region
      %99 = dma.done [#allocation6], 512
    $region41: #{tpu_custom_call.1} parent=1 // pred_fallthru
      _
    // Predicated region
    $region42: #{tpu_custom_call.1} parent=1 // pred_check
      _
    $region43: #{tpu_custom_call.1} parent=1 // pred_check_branch
      %101 = sbr.rel (0) target = $region45
    $region44: #{tpu_custom_call.1} parent=1 // pred_region
      %102 = dma.done [#allocation9], 512
    $region45: #{tpu_custom_call.1} parent=1 // pred_fallthru
      _
    // Predicated region
    $region46: #{tpu_custom_call.1} parent=1 // pred_check
      _
    $region47: #{tpu_custom_call.1} parent=1 // pred_check_branch
      %104 = sbr.rel (0) target = $region49
    $region48: #{tpu_custom_call.1} parent=1 // pred_region
      %105 = dma.done [#allocation9], 512
    $region49: #{tpu_custom_call.1} parent=1 // pred_fallthru
      _
    // Predicated region
    $region50: #{tpu_custom_call.1} parent=1 // pred_check
      _
    $region51: #{tpu_custom_call.1} parent=1 // pred_check_branch
      %107 = sbr.rel (0) target = $region53
    $region52: #{tpu_custom_call.1} parent=1 // pred_region
      %108 = dma.done [#allocation12], 512
    $region53: #{tpu_custom_call.1} parent=1 // pred_fallthru
      _
    %v109 = vld [vmem:[#allocation7] sm:$0xff]
    %v110 = vld [vmem:[#allocation7 + $0x8] sm:$0xff]
    %v111 = vld [vmem:[#allocation7 + $0x10] sm:$0xff]
    %v112 = vld [vmem:[#allocation7 + $0x18] sm:$0xff]
    %v113 = vld [vmem:[#allocation8] sm:$0xff]
    %v114 = vld [vmem:[#allocation8 + $0x8] sm:$0xff]
    %v115 = vld [vmem:[#allocation8 + $0x10] sm:$0xff]
    %v116 = vld [vmem:[#allocation8 + $0x18] sm:$0xff]
    %v117 = vld [vmem:[#allocation10] sm:$0xff]
    %v118 = vld [vmem:[#allocation10 + $0x8] sm:$0xff]
    %v119 = vld [vmem:[#allocation10 + $0x10] sm:$0xff]
    %v120 = vld [vmem:[#allocation10 + $0x18] sm:$0xff]
    %v121 = vld [vmem:[#allocation11] sm:$0xff]
    %v122 = vld [vmem:[#allocation11 + $0x8] sm:$0xff]
    %v123 = vld [vmem:[#allocation11 + $0x10] sm:$0xff]
    %v124 = vld [vmem:[#allocation11 + $0x18] sm:$0xff]
    %v125 = vld [vmem:[%s6] sm:$0x1]
    %v126 = vld [vmem:[#allocation2] sm:$0xff]
    %v127 = vld [vmem:[#allocation2 + $0x8] sm:$0xff]
    %v128 = vld [vmem:[#allocation5] sm:$0xff]
    %vm129 = vcmask 261120
    %v131 = vsel %vm129, %v126, 0
    %v134 = vsel %vm129, %v127, 0
    %136 = vmatprep.subr.mxu0 0.0
    %137 = vmatpush1.msra.mxu0 0.0
    %138 = vmatprep.subr.mxu0 0.0
    %139 = vmatpush1.msra.mxu0 0.0
    %140 = vmatprep.subr.mxu0 0.0
    %141 = vmatpush1.msra.mxu0 0.0
    %142 = vmatprep.subr.mxu0 0.0
    %143 = vmatpush1.msra.mxu0 0.0
    %144 = vmatprep.subr.mxu0 0.0
    %145 = vmatpush1.msra.mxu0 0.0
    %146 = vmatprep.subr.mxu0 0.0
    %147 = vmatpush1.msra.mxu0 0.0
    %148 = vmatprep.subr.mxu0 0.0
    %149 = vmatpush1.msra.mxu0 0.0
    %150 = vmatprep.subr.mxu0 0.0
    %151 = vmatpush1.msra.mxu0 0.0
    %152 = vmatprep.subr.mxu0 0.0
    %153 = vmatpush1.msra.mxu0 0.0
    %154 = vmatprep.subr.mxu0 0.0
    %155 = vmatpush1.msra.mxu0 0.0
    %156 = vmatprep.subr.mxu0 0.0
    %157 = vmatpush1.msra.mxu0 0.0
    %158 = vmatprep.subr.mxu0 0.0
    %159 = vmatpush1.msra.mxu0 0.0
    %160 = vmatprep.subr.mxu0 0.0
    %161 = vmatpush1.msra.mxu0 %v112
    %162 = vmatprep.subr.mxu0 0.0
    %163 = vmatpush1.msra.mxu0 %v111
    %164 = vmatprep.subr.mxu0 0.0
    %165 = vmatpush1.msra.mxu0 %v110
    %166 = vmatprep.subr.mxu0 0.0
    %167 = vmatpush1.msra.mxu0 %v109
    %168 = vmatprep.subr.mxu0 0.0
    %169 = vmatpush2.msra.mxu0 0.0
    %170 = vmatprep.subr.mxu0 0.0
    %171 = vmatpush2.msra.mxu0 0.0
    %172 = vmatprep.subr.mxu0 0.0
    %173 = vmatpush2.msra.mxu0 0.0
    %174 = vmatprep.subr.mxu0 0.0
    %175 = vmatpush2.msra.mxu0 0.0
    %176 = vmatprep.subr.mxu0 0.0
    %177 = vmatpush2.msra.mxu0 0.0
    %178 = vmatprep.subr.mxu0 0.0
    %179 = vmatpush2.msra.mxu0 0.0
    %180 = vmatprep.subr.mxu0 0.0
    %181 = vmatpush2.msra.mxu0 0.0
    %182 = vmatprep.subr.mxu0 0.0
    %183 = vmatpush2.msra.mxu0 0.0
    %184 = vmatprep.subr.mxu0 0.0
    %185 = vmatpush2.msra.mxu0 0.0
    %186 = vmatprep.subr.mxu0 0.0
    %187 = vmatpush2.msra.mxu0 0.0
    %188 = vmatprep.subr.mxu0 0.0
    %189 = vmatpush2.msra.mxu0 0.0
    %190 = vmatprep.subr.mxu0 0.0
    %191 = vmatpush2.msra.mxu0 0.0
    %192 = vmatprep.subr.mxu0 0.0
    %193 = vmatpush2.msra.mxu0 0.0
    %194 = vmatprep.subr.mxu0 0.0
    %195 = vmatpush2.msra.mxu0 0.0
    %196 = vmatprep.subr.mxu0 0.0
    %197 = vmatpush2.msra.mxu0 0.0
    %198 = vmatprep.subr.mxu0 0.0
    %199 = vmatpush2.msra.mxu0 0.0
    %200 = vmatprep.mubr.f32.mxu0 0.0
    %201 = vmatmul.mubr.f32.gmra.mxu0 %v131
    %v202 = vpop.f32.mrf.mxu0
    %v203 = vadd.f32 0.0, %v202
    %v204 = vpop.f32.mrf.mxu0
    %205 = vmatprep.mubr.f32.mxu0 0.0
    %206 = vmatmul.mubr.f32.gmra.mxu0 %v134
    %v207 = vpop.f32.mrf.mxu0
    %v208 = vadd.f32 0.0, %v207
    %v209 = vpop.f32.mrf.mxu0
    %210 = vdwg.mxu0
    %v212 = vsel %vm129, %v128, 0
    %214 = vmatprep.subr.mxu0 0.0
    %215 = vmatpush1.msra.mxu0 0.0
    %216 = vmatprep.subr.mxu0 0.0
    %217 = vmatpush1.msra.mxu0 0.0
    %218 = vmatprep.subr.mxu0 0.0
    %219 = vmatpush1.msra.mxu0 0.0
    %220 = vmatprep.subr.mxu0 0.0
    %221 = vmatpush1.msra.mxu0 0.0
    %222 = vmatprep.subr.mxu0 0.0
    %223 = vmatpush1.msra.mxu0 0.0
    %224 = vmatprep.subr.mxu0 0.0
    %225 = vmatpush1.msra.mxu0 0.0
    %226 = vmatprep.subr.mxu0 0.0
    %227 = vmatpush1.msra.mxu0 0.0
    %228 = vmatprep.subr.mxu0 0.0
    %229 = vmatpush1.msra.mxu0 0.0
    %230 = vmatprep.subr.mxu0 0.0
    %231 = vmatpush1.msra.mxu0 0.0
    %232 = vmatprep.subr.mxu0 0.0
    %233 = vmatpush1.msra.mxu0 0.0
    %234 = vmatprep.subr.mxu0 0.0
    %235 = vmatpush1.msra.mxu0 0.0
    %236 = vmatprep.subr.mxu0 0.0
    %237 = vmatpush1.msra.mxu0 0.0
    %238 = vmatprep.subr.mxu0 0.0
    %239 = vmatpush1.msra.mxu0 %v116
    %240 = vmatprep.subr.mxu0 0.0
    %241 = vmatpush1.msra.mxu0 %v115
    %242 = vmatprep.subr.mxu0 0.0
    %243 = vmatpush1.msra.mxu0 %v114
    %244 = vmatprep.subr.mxu0 0.0
    %245 = vmatpush1.msra.mxu0 %v113
    %246 = vmatprep.subr.mxu0 0.0
    %247 = vmatpush2.msra.mxu0 0.0
    %248 = vmatprep.subr.mxu0 0.0
    %249 = vmatpush2.msra.mxu0 0.0
    %250 = vmatprep.subr.mxu0 0.0
    %251 = vmatpush2.msra.mxu0 0.0
    %252 = vmatprep.subr.mxu0 0.0
    %253 = vmatpush2.msra.mxu0 0.0
    %254 = vmatprep.subr.mxu0 0.0
    %255 = vmatpush2.msra.mxu0 0.0
    %256 = vmatprep.subr.mxu0 0.0
    %257 = vmatpush2.msra.mxu0 0.0
    %258 = vmatprep.subr.mxu0 0.0
    %259 = vmatpush2.msra.mxu0 0.0
    %260 = vmatprep.subr.mxu0 0.0
    %261 = vmatpush2.msra.mxu0 0.0
    %262 = vmatprep.subr.mxu0 0.0
    %263 = vmatpush2.msra.mxu0 0.0
    %264 = vmatprep.subr.mxu0 0.0
    %265 = vmatpush2.msra.mxu0 0.0
    %266 = vmatprep.subr.mxu0 0.0
    %267 = vmatpush2.msra.mxu0 0.0
    %268 = vmatprep.subr.mxu0 0.0
    %269 = vmatpush2.msra.mxu0 0.0
    %270 = vmatprep.subr.mxu0 0.0
    %271 = vmatpush2.msra.mxu0 0.0
    %272 = vmatprep.subr.mxu0 0.0
    %273 = vmatpush2.msra.mxu0 0.0
    %274 = vmatprep.subr.mxu0 0.0
    %275 = vmatpush2.msra.mxu0 0.0
    %276 = vmatprep.subr.mxu0 0.0
    %277 = vmatpush2.msra.mxu0 0.0
    %278 = vmatprep.mubr.f32.mxu0 0.0
    %279 = vmatmul.mubr.f32.gmra.mxu0 %v212
    %v280 = vpop.f32.mrf.mxu0
    %v281 = vadd.f32 0.0, %v280
    %v282 = vpop.f32.mrf.mxu0
    %283 = vdwg.mxu0
    %284 = vmatprep.subr.mxu0 0.0
    %285 = vmatpush1.msra.mxu0 0.0
    %286 = vmatprep.subr.mxu0 0.0
    %287 = vmatpush1.msra.mxu0 0.0
    %288 = vmatprep.subr.mxu0 0.0
    %289 = vmatpush1.msra.mxu0 0.0
    %290 = vmatprep.subr.mxu0 0.0
    %291 = vmatpush1.msra.mxu0 0.0
    %292 = vmatprep.subr.mxu0 0.0
    %293 = vmatpush1.msra.mxu0 0.0
    %294 = vmatprep.subr.mxu0 0.0
    %295 = vmatpush1.msra.mxu0 0.0
    %296 = vmatprep.subr.mxu0 0.0
    %297 = vmatpush1.msra.mxu0 0.0
    %298 = vmatprep.subr.mxu0 0.0
    %299 = vmatpush1.msra.mxu0 0.0
    %300 = vmatprep.subr.mxu0 0.0
    %301 = vmatpush1.msra.mxu0 0.0
    %302 = vmatprep.subr.mxu0 0.0
    %303 = vmatpush1.msra.mxu0 0.0
    %304 = vmatprep.subr.mxu0 0.0
    %305 = vmatpush1.msra.mxu0 0.0
    %306 = vmatprep.subr.mxu0 0.0
    %307 = vmatpush1.msra.mxu0 0.0
    %308 = vmatprep.subr.mxu0 0.0
    %309 = vmatpush1.msra.mxu0 %v120
    %310 = vmatprep.subr.mxu0 0.0
    %311 = vmatpush1.msra.mxu0 %v119
    %312 = vmatprep.subr.mxu0 0.0
    %313 = vmatpush1.msra.mxu0 %v118
    %314 = vmatprep.subr.mxu0 0.0
    %315 = vmatpush1.msra.mxu0 %v117
    %316 = vmatprep.subr.mxu0 0.0
    %317 = vmatpush2.msra.mxu0 0.0
    %318 = vmatprep.subr.mxu0 0.0
    %319 = vmatpush2.msra.mxu0 0.0
    %320 = vmatprep.subr.mxu0 0.0
    %321 = vmatpush2.msra.mxu0 0.0
    %322 = vmatprep.subr.mxu0 0.0
    %323 = vmatpush2.msra.mxu0 0.0
    %324 = vmatprep.subr.mxu0 0.0
    %325 = vmatpush2.msra.mxu0 0.0
    %326 = vmatprep.subr.mxu0 0.0
    %327 = vmatpush2.msra.mxu0 0.0
    %328 = vmatprep.subr.mxu0 0.0
    %329 = vmatpush2.msra.mxu0 0.0
    %330 = vmatprep.subr.mxu0 0.0
    %331 = vmatpush2.msra.mxu0 0.0
    %332 = vmatprep.subr.mxu0 0.0
    %333 = vmatpush2.msra.mxu0 0.0
    %334 = vmatprep.subr.mxu0 0.0
    %335 = vmatpush2.msra.mxu0 0.0
    %336 = vmatprep.subr.mxu0 0.0
    %337 = vmatpush2.msra.mxu0 0.0
    %338 = vmatprep.subr.mxu0 0.0
    %339 = vmatpush2.msra.mxu0 0.0
    %340 = vmatprep.subr.mxu0 0.0
    %341 = vmatpush2.msra.mxu0 0.0
    %342 = vmatprep.subr.mxu0 0.0
    %343 = vmatpush2.msra.mxu0 0.0
    %344 = vmatprep.subr.mxu0 0.0
    %345 = vmatpush2.msra.mxu0 0.0
    %346 = vmatprep.subr.mxu0 0.0
    %347 = vmatpush2.msra.mxu0 0.0
    %348 = vmatprep.mubr.f32.mxu0 0.0
    %349 = vmatmul.mubr.f32.gmra.mxu0 %v212
    %v350 = vpop.f32.mrf.mxu0
    %v351 = vadd.f32 0.0, %v350
    %v352 = vpop.f32.mrf.mxu0
    %353 = vdwg.mxu0
    %vm354 = vcmask 64512
    %v356 = vsel %vm354, %v203, 0
    %v359 = vsel %vm354, %v208, 0
    %v362 = vsel %vm354, %v281, 0
    %364 = vmatprep.subr.mxu0 0.0
    %365 = vmatpush1.xpose.msra.mxu0 0.0
    %366 = vmatprep.subr.mxu0 0.0
    %367 = vmatpush1.xpose.msra.mxu0 0.0
    %368 = vmatprep.subr.mxu0 0.0
    %369 = vmatpush1.xpose.msra.mxu0 0.0
    %370 = vmatprep.subr.mxu0 0.0
    %371 = vmatpush1.xpose.msra.mxu0 0.0
    %372 = vmatprep.subr.mxu0 0.0
    %373 = vmatpush1.xpose.msra.mxu0 0.0
    %374 = vmatprep.subr.mxu0 0.0
    %375 = vmatpush1.xpose.msra.mxu0 0.0
    %376 = vmatprep.subr.mxu0 0.0
    %377 = vmatpush1.xpose.msra.mxu0 0.0
    %378 = vmatprep.subr.mxu0 0.0
    %379 = vmatpush1.xpose.msra.mxu0 0.0
    %380 = vmatprep.subr.mxu0 0.0
    %381 = vmatpush1.xpose.msra.mxu0 0.0
    %382 = vmatprep.subr.mxu0 0.0
    %383 = vmatpush1.xpose.msra.mxu0 0.0
    %384 = vmatprep.subr.mxu0 0.0
    %385 = vmatpush1.xpose.msra.mxu0 0.0
    %386 = vmatprep.subr.mxu0 0.0
    %387 = vmatpush1.xpose.msra.mxu0 0.0
    %388 = vmatprep.subr.mxu0 0.0
    %389 = vmatpush1.xpose.msra.mxu0 0.0
    %390 = vmatprep.subr.mxu0 0.0
    %391 = vmatpush1.xpose.msra.mxu0 0.0
    %392 = vmatprep.subr.mxu0 0.0
    %393 = vmatpush1.xpose.msra.mxu0 0.0
    %394 = vmatprep.subr.mxu0 0.0
    %395 = vmatpush1.xpose.msra.mxu0 %v362
    %396 = vmatprep.subr.mxu0 0.0
    %397 = vmatpush2.xpose.msra.mxu0 0.0
    %398 = vmatprep.subr.mxu0 0.0
    %399 = vmatpush2.xpose.msra.mxu0 0.0
    %400 = vmatprep.subr.mxu0 0.0
    %401 = vmatpush2.xpose.msra.mxu0 0.0
    %402 = vmatprep.subr.mxu0 0.0
    %403 = vmatpush2.xpose.msra.mxu0 0.0
    %404 = vmatprep.subr.mxu0 0.0
    %405 = vmatpush2.xpose.msra.mxu0 0.0
    %406 = vmatprep.subr.mxu0 0.0
    %407 = vmatpush2.xpose.msra.mxu0 0.0
    %408 = vmatprep.subr.mxu0 0.0
    %409 = vmatpush2.xpose.msra.mxu0 0.0
    %410 = vmatprep.subr.mxu0 0.0
    %411 = vmatpush2.xpose.msra.mxu0 0.0
    %412 = vmatprep.subr.mxu0 0.0
    %413 = vmatpush2.xpose.msra.mxu0 0.0
    %414 = vmatprep.subr.mxu0 0.0
    %415 = vmatpush2.xpose.msra.mxu0 0.0
    %416 = vmatprep.subr.mxu0 0.0
    %417 = vmatpush2.xpose.msra.mxu0 0.0
    %418 = vmatprep.subr.mxu0 0.0
    %419 = vmatpush2.xpose.msra.mxu0 0.0
    %420 = vmatprep.subr.mxu0 0.0
    %421 = vmatpush2.xpose.msra.mxu0 0.0
    %422 = vmatprep.subr.mxu0 0.0
    %423 = vmatpush2.xpose.msra.mxu0 0.0
    %424 = vmatprep.subr.mxu0 0.0
    %425 = vmatpush2.xpose.msra.mxu0 0.0
    %426 = vmatprep.subr.mxu0 0.0
    %427 = vmatpush2.xpose.msra.mxu0 0.0
    %428 = vmatprep.mubr.f32.mxu0 0.0
    %429 = vmatmul.mubr.f32.gmra.mxu0 %v356
    %v430 = vpop.f32.mrf.mxu0
    %v431 = vadd.f32 0.0, %v430
    %v432 = vpop.f32.mrf.mxu0
    %433 = vmatprep.mubr.f32.mxu0 0.0
    %434 = vmatmul.mubr.f32.gmra.mxu0 %v359
    %v435 = vpop.f32.mrf.mxu0
    %v436 = vadd.f32 0.0, %v435
    %v437 = vpop.f32.mrf.mxu0
    %438 = vdwg.mxu0
    %v439 = vsel %vm354, %v431, -inf
    %440 = vmax.xlane.f32.xlu0 %v439
    %v441 = vpop.xlane.xlu0 %440
    %v442 = vsel %vm354, %v436, -inf
    %443 = vmax.xlane.f32.xlu0 %v442
    %v444 = vpop.xlane.xlu0 %443
    %v445 = vsub.f32 %v431, %v441
    %v446 = vsub.f32 %v436, %v444
    %v447 = vmul.f32 %v445, 1.442695
    %v448 = vpow.pop %v447
    %v449 = vmul.f32 %v446, 1.442695
    %v450 = vpow.pop %v449
    %v451 = vsel %vm354, %v448, 0.0
    %452 = vadd.xlane.f32.xlu0 %v451
    %v453 = vpop.xlane.xlu0 %452
    %v454 = vsel %vm354, %v450, 0.0
    %455 = vadd.xlane.f32.xlu0 %v454
    %v456 = vpop.xlane.xlu0 %455
    %v457 = vrcp.pop %v453
    %v458 = vrcp.pop %v456
    %v459 = vmul.f32 %v448, %v457
    %v460 = vmul.f32 %v450, %v458
    %v462 = vsel %vm354, %v459, 0
    %v465 = vsel %vm354, %v460, 0
    %467 = vmatprep.subr.mxu0 0.0
    %468 = vmatpush1.msra.mxu0 0.0
    %469 = vmatprep.subr.mxu0 0.0
    %470 = vmatpush1.msra.mxu0 0.0
    %471 = vmatprep.subr.mxu0 0.0
    %472 = vmatpush1.msra.mxu0 0.0
    %473 = vmatprep.subr.mxu0 0.0
    %474 = vmatpush1.msra.mxu0 0.0
    %475 = vmatprep.subr.mxu0 0.0
    %476 = vmatpush1.msra.mxu0 0.0
    %477 = vmatprep.subr.mxu0 0.0
    %478 = vmatpush1.msra.mxu0 0.0
    %479 = vmatprep.subr.mxu0 0.0
    %480 = vmatpush1.msra.mxu0 0.0
    %481 = vmatprep.subr.mxu0 0.0
    %482 = vmatpush1.msra.mxu0 0.0
    %483 = vmatprep.subr.mxu0 0.0
    %484 = vmatpush1.msra.mxu0 0.0
    %485 = vmatprep.subr.mxu0 0.0
    %486 = vmatpush1.msra.mxu0 0.0
    %487 = vmatprep.subr.mxu0 0.0
    %488 = vmatpush1.msra.mxu0 0.0
    %489 = vmatprep.subr.mxu0 0.0
    %490 = vmatpush1.msra.mxu0 0.0
    %491 = vmatprep.subr.mxu0 0.0
    %492 = vmatpush1.msra.mxu0 0.0
    %493 = vmatprep.subr.mxu0 0.0
    %494 = vmatpush1.msra.mxu0 0.0
    %495 = vmatprep.subr.mxu0 0.0
    %496 = vmatpush1.msra.mxu0 0.0
    %497 = vmatprep.subr.mxu0 0.0
    %498 = vmatpush1.msra.mxu0 %v351
    %499 = vmatprep.subr.mxu0 0.0
    %500 = vmatpush2.msra.mxu0 0.0
    %501 = vmatprep.subr.mxu0 0.0
    %502 = vmatpush2.msra.mxu0 0.0
    %503 = vmatprep.subr.mxu0 0.0
    %504 = vmatpush2.msra.mxu0 0.0
    %505 = vmatprep.subr.mxu0 0.0
    %506 = vmatpush2.msra.mxu0 0.0
    %507 = vmatprep.subr.mxu0 0.0
    %508 = vmatpush2.msra.mxu0 0.0
    %509 = vmatprep.subr.mxu0 0.0
    %510 = vmatpush2.msra.mxu0 0.0
    %511 = vmatprep.subr.mxu0 0.0
    %512 = vmatpush2.msra.mxu0 0.0
    %513 = vmatprep.subr.mxu0 0.0
    %514 = vmatpush2.msra.mxu0 0.0
    %515 = vmatprep.subr.mxu0 0.0
    %516 = vmatpush2.msra.mxu0 0.0
    %517 = vmatprep.subr.mxu0 0.0
    %518 = vmatpush2.msra.mxu0 0.0
    %519 = vmatprep.subr.mxu0 0.0
    %520 = vmatpush2.msra.mxu0 0.0
    %521 = vmatprep.subr.mxu0 0.0
    %522 = vmatpush2.msra.mxu0 0.0
    %523 = vmatprep.subr.mxu0 0.0
    %524 = vmatpush2.msra.mxu0 0.0
    %525 = vmatprep.subr.mxu0 0.0
    %526 = vmatpush2.msra.mxu0 0.0
    %527 = vmatprep.subr.mxu0 0.0
    %528 = vmatpush2.msra.mxu0 0.0
    %529 = vmatprep.subr.mxu0 0.0
    %530 = vmatpush2.msra.mxu0 0.0
    %531 = vmatprep.mubr.f32.mxu0 0.0
    %532 = vmatmul.mubr.f32.gmra.mxu0 %v462
    %v533 = vpop.f32.mrf.mxu0
    %v534 = vadd.f32 0.0, %v533
    %v535 = vpop.f32.mrf.mxu0
    %536 = vmatprep.mubr.f32.mxu0 0.0
    %537 = vmatmul.mubr.f32.gmra.mxu0 %v465
    %v538 = vpop.f32.mrf.mxu0
    %v539 = vadd.f32 0.0, %v538
    %v540 = vpop.f32.mrf.mxu0
    %541 = vdwg.mxu0
    %542 = vrot.lane.b32.xlu0 %v203, 120
    %v543 = vpop.permute.xlu0 %542
    %544 = vrot.lane.b32.xlu0 %v208, 120
    %v545 = vpop.permute.xlu0 %544
    %546 = vrot.lane.b32.xlu0 %v281, 120
    %v547 = vpop.permute.xlu0 %546
    %v548 = vsel %vm354, %v543, 0
    %v550 = vsel %vm354, %v545, 0
    %v552 = vsel %vm354, %v547, 0
    %554 = vmatprep.subr.mxu0 0.0
    %555 = vmatpush1.xpose.msra.mxu0 0.0
    %556 = vmatprep.subr.mxu0 0.0
    %557 = vmatpush1.xpose.msra.mxu0 0.0
    %558 = vmatprep.subr.mxu0 0.0
    %559 = vmatpush1.xpose.msra.mxu0 0.0
    %560 = vmatprep.subr.mxu0 0.0
    %561 = vmatpush1.xpose.msra.mxu0 0.0
    %562 = vmatprep.subr.mxu0 0.0
    %563 = vmatpush1.xpose.msra.mxu0 0.0
    %564 = vmatprep.subr.mxu0 0.0
    %565 = vmatpush1.xpose.msra.mxu0 0.0
    %566 = vmatprep.subr.mxu0 0.0
    %567 = vmatpush1.xpose.msra.mxu0 0.0
    %568 = vmatprep.subr.mxu0 0.0
    %569 = vmatpush1.xpose.msra.mxu0 0.0
    %570 = vmatprep.subr.mxu0 0.0
    %571 = vmatpush1.xpose.msra.mxu0 0.0
    %572 = vmatprep.subr.mxu0 0.0
    %573 = vmatpush1.xpose.msra.mxu0 0.0
    %574 = vmatprep.subr.mxu0 0.0
    %575 = vmatpush1.xpose.msra.mxu0 0.0
    %576 = vmatprep.subr.mxu0 0.0
    %577 = vmatpush1.xpose.msra.mxu0 0.0
    %578 = vmatprep.subr.mxu0 0.0
    %579 = vmatpush1.xpose.msra.mxu0 0.0
    %580 = vmatprep.subr.mxu0 0.0
    %581 = vmatpush1.xpose.msra.mxu0 0.0
    %582 = vmatprep.subr.mxu0 0.0
    %583 = vmatpush1.xpose.msra.mxu0 0.0
    %584 = vmatprep.subr.mxu0 0.0
    %585 = vmatpush1.xpose.msra.mxu0 %v552
    %586 = vmatprep.subr.mxu0 0.0
    %587 = vmatpush2.xpose.msra.mxu0 0.0
    %588 = vmatprep.subr.mxu0 0.0
    %589 = vmatpush2.xpose.msra.mxu0 0.0
    %590 = vmatprep.subr.mxu0 0.0
    %591 = vmatpush2.xpose.msra.mxu0 0.0
    %592 = vmatprep.subr.mxu0 0.0
    %593 = vmatpush2.xpose.msra.mxu0 0.0
    %594 = vmatprep.subr.mxu0 0.0
    %595 = vmatpush2.xpose.msra.mxu0 0.0
    %596 = vmatprep.subr.mxu0 0.0
    %597 = vmatpush2.xpose.msra.mxu0 0.0
    %598 = vmatprep.subr.mxu0 0.0
    %599 = vmatpush2.xpose.msra.mxu0 0.0
    %600 = vmatprep.subr.mxu0 0.0
    %601 = vmatpush2.xpose.msra.mxu0 0.0
    %602 = vmatprep.subr.mxu0 0.0
    %603 = vmatpush2.xpose.msra.mxu0 0.0
    %604 = vmatprep.subr.mxu0 0.0
    %605 = vmatpush2.xpose.msra.mxu0 0.0
    %606 = vmatprep.subr.mxu0 0.0
    %607 = vmatpush2.xpose.msra.mxu0 0.0
    %608 = vmatprep.subr.mxu0 0.0
    %609 = vmatpush2.xpose.msra.mxu0 0.0
    %610 = vmatprep.subr.mxu0 0.0
    %611 = vmatpush2.xpose.msra.mxu0 0.0
    %612 = vmatprep.subr.mxu0 0.0
    %613 = vmatpush2.xpose.msra.mxu0 0.0
    %614 = vmatprep.subr.mxu0 0.0
    %615 = vmatpush2.xpose.msra.mxu0 0.0
    %616 = vmatprep.subr.mxu0 0.0
    %617 = vmatpush2.xpose.msra.mxu0 0.0
    %618 = vmatprep.mubr.f32.mxu0 0.0
    %619 = vmatmul.mubr.f32.gmra.mxu0 %v548
    %v620 = vpop.f32.mrf.mxu0
    %v621 = vadd.f32 0.0, %v620
    %v622 = vpop.f32.mrf.mxu0
    %623 = vmatprep.mubr.f32.mxu0 0.0
    %624 = vmatmul.mubr.f32.gmra.mxu0 %v550
    %v625 = vpop.f32.mrf.mxu0
    %v626 = vadd.f32 0.0, %v625
    %v627 = vpop.f32.mrf.mxu0
    %628 = vdwg.mxu0
    %v629 = vsel %vm354, %v621, -inf
    %630 = vmax.xlane.f32.xlu0 %v629
    %v631 = vpop.xlane.xlu0 %630
    %v632 = vsel %vm354, %v626, -inf
    %633 = vmax.xlane.f32.xlu0 %v632
    %v634 = vpop.xlane.xlu0 %633
    %v635 = vsub.f32 %v621, %v631
    %v636 = vsub.f32 %v626, %v634
    %v637 = vmul.f32 %v635, 1.442695
    %v638 = vpow.pop %v637
    %v639 = vmul.f32 %v636, 1.442695
    %v640 = vpow.pop %v639
    %v641 = vsel %vm354, %v638, 0.0
    %642 = vadd.xlane.f32.xlu0 %v641
    %v643 = vpop.xlane.xlu0 %642
    %v644 = vsel %vm354, %v640, 0.0
    %645 = vadd.xlane.f32.xlu0 %v644
    %v646 = vpop.xlane.xlu0 %645
    %v647 = vrcp.pop %v643
    %v648 = vrcp.pop %v646
    %v649 = vmul.f32 %v638, %v647
    %v650 = vmul.f32 %v640, %v648
    %652 = vrot.lane.b32.xlu0 %v351, 120
    %v653 = vpop.permute.xlu0 %652
    %v656 = vsel %vm354, %v649, 0
    %v659 = vsel %vm354, %v650, 0
    %661 = vmatprep.subr.mxu0 0.0
    %662 = vmatpush1.msra.mxu0 0.0
    %663 = vmatprep.subr.mxu0 0.0
    %664 = vmatpush1.msra.mxu0 0.0
    %665 = vmatprep.subr.mxu0 0.0
    %666 = vmatpush1.msra.mxu0 0.0
    %667 = vmatprep.subr.mxu0 0.0
    %668 = vmatpush1.msra.mxu0 0.0
    %669 = vmatprep.subr.mxu0 0.0
    %670 = vmatpush1.msra.mxu0 0.0
    %671 = vmatprep.subr.mxu0 0.0
    %672 = vmatpush1.msra.mxu0 0.0
    %673 = vmatprep.subr.mxu0 0.0
    %674 = vmatpush1.msra.mxu0 0.0
    %675 = vmatprep.subr.mxu0 0.0
    %676 = vmatpush1.msra.mxu0 0.0
    %677 = vmatprep.subr.mxu0 0.0
    %678 = vmatpush1.msra.mxu0 0.0
    %679 = vmatprep.subr.mxu0 0.0
    %680 = vmatpush1.msra.mxu0 0.0
    %681 = vmatprep.subr.mxu0 0.0
    %682 = vmatpush1.msra.mxu0 0.0
    %683 = vmatprep.subr.mxu0 0.0
    %684 = vmatpush1.msra.mxu0 0.0
    %685 = vmatprep.subr.mxu0 0.0
    %686 = vmatpush1.msra.mxu0 0.0
    %687 = vmatprep.subr.mxu0 0.0
    %688 = vmatpush1.msra.mxu0 0.0
    %689 = vmatprep.subr.mxu0 0.0
    %690 = vmatpush1.msra.mxu0 0.0
    %691 = vmatprep.subr.mxu0 0.0
    %692 = vmatpush1.msra.mxu0 %v653
    %693 = vmatprep.subr.mxu0 0.0
    %694 = vmatpush2.msra.mxu0 0.0
    %695 = vmatprep.subr.mxu0 0.0
    %696 = vmatpush2.msra.mxu0 0.0
    %697 = vmatprep.subr.mxu0 0.0
    %698 = vmatpush2.msra.mxu0 0.0
    %699 = vmatprep.subr.mxu0 0.0
    %700 = vmatpush2.msra.mxu0 0.0
    %701 = vmatprep.subr.mxu0 0.0
    %702 = vmatpush2.msra.mxu0 0.0
    %703 = vmatprep.subr.mxu0 0.0
    %704 = vmatpush2.msra.mxu0 0.0
    %705 = vmatprep.subr.mxu0 0.0
    %706 = vmatpush2.msra.mxu0 0.0
    %707 = vmatprep.subr.mxu0 0.0
    %708 = vmatpush2.msra.mxu0 0.0
    %709 = vmatprep.subr.mxu0 0.0
    %710 = vmatpush2.msra.mxu0 0.0
    %711 = vmatprep.subr.mxu0 0.0
    %712 = vmatpush2.msra.mxu0 0.0
    %713 = vmatprep.subr.mxu0 0.0
    %714 = vmatpush2.msra.mxu0 0.0
    %715 = vmatprep.subr.mxu0 0.0
    %716 = vmatpush2.msra.mxu0 0.0
    %717 = vmatprep.subr.mxu0 0.0
    %718 = vmatpush2.msra.mxu0 0.0
    %719 = vmatprep.subr.mxu0 0.0
    %720 = vmatpush2.msra.mxu0 0.0
    %721 = vmatprep.subr.mxu0 0.0
    %722 = vmatpush2.msra.mxu0 0.0
    %723 = vmatprep.subr.mxu0 0.0
    %724 = vmatpush2.msra.mxu0 0.0
    %725 = vmatprep.mubr.f32.mxu0 0.0
    %726 = vmatmul.mubr.f32.gmra.mxu0 %v656
    %v727 = vpop.f32.mrf.mxu0
    %v728 = vadd.f32 0.0, %v727
    %v729 = vpop.f32.mrf.mxu0
    %730 = vmatprep.mubr.f32.mxu0 0.0
    %731 = vmatmul.mubr.f32.gmra.mxu0 %v659
    %v732 = vpop.f32.mrf.mxu0
    %v733 = vadd.f32 0.0, %v732
    %v734 = vpop.f32.mrf.mxu0
    %735 = vdwg.mxu0
    %v737 = vsel %vm354, %v728, 0
    %v740 = vsel %vm354, %v733, 0
    %742 = vmatprep.subr.mxu0 0.0
    %743 = vmatpush1.msra.mxu0 0.0
    %744 = vmatprep.subr.mxu0 0.0
    %745 = vmatpush1.msra.mxu0 0.0
    %746 = vmatprep.subr.mxu0 0.0
    %747 = vmatpush1.msra.mxu0 0.0
    %748 = vmatprep.subr.mxu0 0.0
    %749 = vmatpush1.msra.mxu0 0.0
    %750 = vmatprep.subr.mxu0 0.0
    %751 = vmatpush1.msra.mxu0 0.0
    %752 = vmatprep.subr.mxu0 0.0
    %753 = vmatpush1.msra.mxu0 0.0
    %754 = vmatprep.subr.mxu0 0.0
    %755 = vmatpush1.msra.mxu0 0.0
    %756 = vmatprep.subr.mxu0 0.0
    %757 = vmatpush1.msra.mxu0 0.0
    %758 = vmatprep.subr.mxu0 0.0
    %759 = vmatpush1.msra.mxu0 0.0
    %760 = vmatprep.subr.mxu0 0.0
    %761 = vmatpush1.msra.mxu0 0.0
    %762 = vmatprep.subr.mxu0 0.0
    %763 = vmatpush1.msra.mxu0 0.0
    %764 = vmatprep.subr.mxu0 0.0
    %765 = vmatpush1.msra.mxu0 0.0
    %766 = vmatprep.subr.mxu0 0.0
    %767 = vmatpush1.msra.mxu0 0.0
    %768 = vmatprep.subr.mxu0 0.0
    %769 = vmatpush1.msra.mxu0 0.0
    %770 = vmatprep.subr.mxu0 0.0
    %771 = vmatpush1.msra.mxu0 0.0
    %772 = vmatprep.subr.mxu0 0.0
    %773 = vmatpush1.msra.mxu0 %v122
    %774 = vmatprep.subr.mxu0 0.0
    %775 = vmatpush2.msra.mxu0 0.0
    %776 = vmatprep.subr.mxu0 0.0
    %777 = vmatpush2.msra.mxu0 0.0
    %778 = vmatprep.subr.mxu0 0.0
    %779 = vmatpush2.msra.mxu0 0.0
    %780 = vmatprep.subr.mxu0 0.0
    %781 = vmatpush2.msra.mxu0 0.0
    %782 = vmatprep.subr.mxu0 0.0
    %783 = vmatpush2.msra.mxu0 0.0
    %784 = vmatprep.subr.mxu0 0.0
    %785 = vmatpush2.msra.mxu0 0.0
    %786 = vmatprep.subr.mxu0 0.0
    %787 = vmatpush2.msra.mxu0 0.0
    %788 = vmatprep.subr.mxu0 0.0
    %789 = vmatpush2.msra.mxu0 0.0
    %790 = vmatprep.subr.mxu0 0.0
    %791 = vmatpush2.msra.mxu0 0.0
    %792 = vmatprep.subr.mxu0 0.0
    %793 = vmatpush2.msra.mxu0 0.0
    %794 = vmatprep.subr.mxu0 0.0
    %795 = vmatpush2.msra.mxu0 0.0
    %796 = vmatprep.subr.mxu0 0.0
    %797 = vmatpush2.msra.mxu0 0.0
    %798 = vmatprep.subr.mxu0 0.0
    %799 = vmatpush2.msra.mxu0 0.0
    %800 = vmatprep.subr.mxu0 0.0
    %801 = vmatpush2.msra.mxu0 0.0
    %802 = vmatprep.subr.mxu0 0.0
    %803 = vmatpush2.msra.mxu0 0.0
    %804 = vmatprep.subr.mxu0 0.0
    %805 = vmatpush2.msra.mxu0 0.0
    %806 = vmatprep.mubr.f32.mxu0 0.0
    %807 = vmatmul.mubr.f32.gmra.mxu0 %v737
    %v808 = vpop.f32.mrf.mxu0
    %v809 = vadd.f32 0.0, %v808
    %v810 = vpop.f32.mrf.mxu0
    %811 = vmatprep.mubr.f32.mxu0 0.0
    %812 = vmatmul.mubr.f32.gmra.mxu0 %v740
    %v813 = vpop.f32.mrf.mxu0
    %v814 = vadd.f32 0.0, %v813
    %v815 = vpop.f32.mrf.mxu0
    %816 = vdwg.mxu0
    %v818 = vsel %vm354, %v534, 0
    %v821 = vsel %vm354, %v539, 0
    %823 = vmatprep.subr.mxu0 0.0
    %824 = vmatpush1.msra.mxu0 0.0
    %825 = vmatprep.subr.mxu0 0.0
    %826 = vmatpush1.msra.mxu0 0.0
    %827 = vmatprep.subr.mxu0 0.0
    %828 = vmatpush1.msra.mxu0 0.0
    %829 = vmatprep.subr.mxu0 0.0
    %830 = vmatpush1.msra.mxu0 0.0
    %831 = vmatprep.subr.mxu0 0.0
    %832 = vmatpush1.msra.mxu0 0.0
    %833 = vmatprep.subr.mxu0 0.0
    %834 = vmatpush1.msra.mxu0 0.0
    %835 = vmatprep.subr.mxu0 0.0
    %836 = vmatpush1.msra.mxu0 0.0
    %837 = vmatprep.subr.mxu0 0.0
    %838 = vmatpush1.msra.mxu0 0.0
    %839 = vmatprep.subr.mxu0 0.0
    %840 = vmatpush1.msra.mxu0 0.0
    %841 = vmatprep.subr.mxu0 0.0
    %842 = vmatpush1.msra.mxu0 0.0
    %843 = vmatprep.subr.mxu0 0.0
    %844 = vmatpush1.msra.mxu0 0.0
    %845 = vmatprep.subr.mxu0 0.0
    %846 = vmatpush1.msra.mxu0 0.0
    %847 = vmatprep.subr.mxu0 0.0
    %848 = vmatpush1.msra.mxu0 0.0
    %849 = vmatprep.subr.mxu0 0.0
    %850 = vmatpush1.msra.mxu0 0.0
    %851 = vmatprep.subr.mxu0 0.0
    %852 = vmatpush1.msra.mxu0 0.0
    %853 = vmatprep.subr.mxu0 0.0
    %854 = vmatpush1.msra.mxu0 %v121
    %855 = vmatprep.subr.mxu0 0.0
    %856 = vmatpush2.msra.mxu0 0.0
    %857 = vmatprep.subr.mxu0 0.0
    %858 = vmatpush2.msra.mxu0 0.0
    %859 = vmatprep.subr.mxu0 0.0
    %860 = vmatpush2.msra.mxu0 0.0
    %861 = vmatprep.subr.mxu0 0.0
    %862 = vmatpush2.msra.mxu0 0.0
    %863 = vmatprep.subr.mxu0 0.0
    %864 = vmatpush2.msra.mxu0 0.0
    %865 = vmatprep.subr.mxu0 0.0
    %866 = vmatpush2.msra.mxu0 0.0
    %867 = vmatprep.subr.mxu0 0.0
    %868 = vmatpush2.msra.mxu0 0.0
    %869 = vmatprep.subr.mxu0 0.0
    %870 = vmatpush2.msra.mxu0 0.0
    %871 = vmatprep.subr.mxu0 0.0
    %872 = vmatpush2.msra.mxu0 0.0
    %873 = vmatprep.subr.mxu0 0.0
    %874 = vmatpush2.msra.mxu0 0.0
    %875 = vmatprep.subr.mxu0 0.0
    %876 = vmatpush2.msra.mxu0 0.0
    %877 = vmatprep.subr.mxu0 0.0
    %878 = vmatpush2.msra.mxu0 0.0
    %879 = vmatprep.subr.mxu0 0.0
    %880 = vmatpush2.msra.mxu0 0.0
    %881 = vmatprep.subr.mxu0 0.0
    %882 = vmatpush2.msra.mxu0 0.0
    %883 = vmatprep.subr.mxu0 0.0
    %884 = vmatpush2.msra.mxu0 0.0
    %885 = vmatprep.subr.mxu0 0.0
    %886 = vmatpush2.msra.mxu0 0.0
    %887 = vmatprep.mubr.f32.mxu0 0.0
    %888 = vmatmul.mubr.f32.gmra.mxu0 %v818
    %v889 = vpop.f32.mrf.mxu0
    %v890 = vadd.f32 %v809, %v889
    %v891 = vpop.f32.mrf.mxu0
    %892 = vmatprep.mubr.f32.mxu0 0.0
    %893 = vmatmul.mubr.f32.gmra.mxu0 %v821
    %v894 = vpop.f32.mrf.mxu0
    %v895 = vadd.f32 %v814, %v894
    %v896 = vpop.f32.mrf.mxu0
    %897 = vdwg.mxu0
    %898 = vrot.lane.b32.xlu0 %v203, 112
    %v899 = vpop.permute.xlu0 %898
    %900 = vrot.lane.b32.xlu0 %v208, 112
    %v901 = vpop.permute.xlu0 %900
    %902 = vrot.lane.b32.xlu0 %v281, 112
    %v903 = vpop.permute.xlu0 %902
    %v904 = vsel %vm354, %v899, 0
    %v906 = vsel %vm354, %v901, 0
    %v908 = vsel %vm354, %v903, 0
    %910 = vmatprep.subr.mxu0 0.0
    %911 = vmatpush1.xpose.msra.mxu0 0.0
    %912 = vmatprep.subr.mxu0 0.0
    %913 = vmatpush1.xpose.msra.mxu0 0.0
    %914 = vmatprep.subr.mxu0 0.0
    %915 = vmatpush1.xpose.msra.mxu0 0.0
    %916 = vmatprep.subr.mxu0 0.0
    %917 = vmatpush1.xpose.msra.mxu0 0.0
    %918 = vmatprep.subr.mxu0 0.0
    %919 = vmatpush1.xpose.msra.mxu0 0.0
    %920 = vmatprep.subr.mxu0 0.0
    %921 = vmatpush1.xpose.msra.mxu0 0.0
    %922 = vmatprep.subr.mxu0 0.0
    %923 = vmatpush1.xpose.msra.mxu0 0.0
    %924 = vmatprep.subr.mxu0 0.0
    %925 = vmatpush1.xpose.msra.mxu0 0.0
    %926 = vmatprep.subr.mxu0 0.0
    %927 = vmatpush1.xpose.msra.mxu0 0.0
    %928 = vmatprep.subr.mxu0 0.0
    %929 = vmatpush1.xpose.msra.mxu0 0.0
    %930 = vmatprep.subr.mxu0 0.0
    %931 = vmatpush1.xpose.msra.mxu0 0.0
    %932 = vmatprep.subr.mxu0 0.0
    %933 = vmatpush1.xpose.msra.mxu0 0.0
    %934 = vmatprep.subr.mxu0 0.0
    %935 = vmatpush1.xpose.msra.mxu0 0.0
    %936 = vmatprep.subr.mxu0 0.0
    %937 = vmatpush1.xpose.msra.mxu0 0.0
    %938 = vmatprep.subr.mxu0 0.0
    %939 = vmatpush1.xpose.msra.mxu0 0.0
    %940 = vmatprep.subr.mxu0 0.0
    %941 = vmatpush1.xpose.msra.mxu0 %v908
    %942 = vmatprep.subr.mxu0 0.0
    %943 = vmatpush2.xpose.msra.mxu0 0.0
    %944 = vmatprep.subr.mxu0 0.0
    %945 = vmatpush2.xpose.msra.mxu0 0.0
    %946 = vmatprep.subr.mxu0 0.0
    %947 = vmatpush2.xpose.msra.mxu0 0.0
    %948 = vmatprep.subr.mxu0 0.0
    %949 = vmatpush2.xpose.msra.mxu0 0.0
    %950 = vmatprep.subr.mxu0 0.0
    %951 = vmatpush2.xpose.msra.mxu0 0.0
    %952 = vmatprep.subr.mxu0 0.0
    %953 = vmatpush2.xpose.msra.mxu0 0.0
    %954 = vmatprep.subr.mxu0 0.0
    %955 = vmatpush2.xpose.msra.mxu0 0.0
    %956 = vmatprep.subr.mxu0 0.0
    %957 = vmatpush2.xpose.msra.mxu0 0.0
    %958 = vmatprep.subr.mxu0 0.0
    %959 = vmatpush2.xpose.msra.mxu0 0.0
    %960 = vmatprep.subr.mxu0 0.0
    %961 = vmatpush2.xpose.msra.mxu0 0.0
    %962 = vmatprep.subr.mxu0 0.0
    %963 = vmatpush2.xpose.msra.mxu0 0.0
    %964 = vmatprep.subr.mxu0 0.0
    %965 = vmatpush2.xpose.msra.mxu0 0.0
    %966 = vmatprep.subr.mxu0 0.0
    %967 = vmatpush2.xpose.msra.mxu0 0.0
    %968 = vmatprep.subr.mxu0 0.0
    %969 = vmatpush2.xpose.msra.mxu0 0.0
    %970 = vmatprep.subr.mxu0 0.0
    %971 = vmatpush2.xpose.msra.mxu0 0.0
    %972 = vmatprep.subr.mxu0 0.0
    %973 = vmatpush2.xpose.msra.mxu0 0.0
    %974 = vmatprep.mubr.f32.mxu0 0.0
    %975 = vmatmul.mubr.f32.gmra.mxu0 %v904
    %v976 = vpop.f32.mrf.mxu0
    %v977 = vadd.f32 0.0, %v976
    %v978 = vpop.f32.mrf.mxu0
    %979 = vmatprep.mubr.f32.mxu0 0.0
    %980 = vmatmul.mubr.f32.gmra.mxu0 %v906
    %v981 = vpop.f32.mrf.mxu0
    %v982 = vadd.f32 0.0, %v981
    %v983 = vpop.f32.mrf.mxu0
    %984 = vdwg.mxu0
    %v985 = vsel %vm354, %v977, -inf
    %986 = vmax.xlane.f32.xlu0 %v985
    %v987 = vpop.xlane.xlu0 %986
    %v988 = vsel %vm354, %v982, -inf
    %989 = vmax.xlane.f32.xlu0 %v988
    %v990 = vpop.xlane.xlu0 %989
    %v991 = vsub.f32 %v977, %v987
    %v992 = vsub.f32 %v982, %v990
    %v993 = vmul.f32 %v991, 1.442695
    %v994 = vpow.pop %v993
    %v995 = vmul.f32 %v992, 1.442695
    %v996 = vpow.pop %v995
    %v997 = vsel %vm354, %v994, 0.0
    %998 = vadd.xlane.f32.xlu0 %v997
    %v999 = vpop.xlane.xlu0 %998
    %v1000 = vsel %vm354, %v996, 0.0
    %1001 = vadd.xlane.f32.xlu0 %v1000
    %v1002 = vpop.xlane.xlu0 %1001
    %v1003 = vrcp.pop %v999
    %v1004 = vrcp.pop %v1002
    %v1005 = vmul.f32 %v994, %v1003
    %v1006 = vmul.f32 %v996, %v1004
    %1007 = vrot.lane.b32.xlu0 %v351, 112
    %v1008 = vpop.permute.xlu0 %1007
    %v1011 = vsel %vm354, %v1005, 0
    %v1014 = vsel %vm354, %v1006, 0
    %1016 = vmatprep.subr.mxu0 0.0
    %1017 = vmatpush1.msra.mxu0 0.0
    %1018 = vmatprep.subr.mxu0 0.0
    %1019 = vmatpush1.msra.mxu0 0.0
    %1020 = vmatprep.subr.mxu0 0.0
    %1021 = vmatpush1.msra.mxu0 0.0
    %1022 = vmatprep.subr.mxu0 0.0
    %1023 = vmatpush1.msra.mxu0 0.0
    %1024 = vmatprep.subr.mxu0 0.0
    %1025 = vmatpush1.msra.mxu0 0.0
    %1026 = vmatprep.subr.mxu0 0.0
    %1027 = vmatpush1.msra.mxu0 0.0
    %1028 = vmatprep.subr.mxu0 0.0
    %1029 = vmatpush1.msra.mxu0 0.0
    %1030 = vmatprep.subr.mxu0 0.0
    %1031 = vmatpush1.msra.mxu0 0.0
    %1032 = vmatprep.subr.mxu0 0.0
    %1033 = vmatpush1.msra.mxu0 0.0
    %1034 = vmatprep.subr.mxu0 0.0
    %1035 = vmatpush1.msra.mxu0 0.0
    %1036 = vmatprep.subr.mxu0 0.0
    %1037 = vmatpush1.msra.mxu0 0.0
    %1038 = vmatprep.subr.mxu0 0.0
    %1039 = vmatpush1.msra.mxu0 0.0
    %1040 = vmatprep.subr.mxu0 0.0
    %1041 = vmatpush1.msra.mxu0 0.0
    %1042 = vmatprep.subr.mxu0 0.0
    %1043 = vmatpush1.msra.mxu0 0.0
    %1044 = vmatprep.subr.mxu0 0.0
    %1045 = vmatpush1.msra.mxu0 0.0
    %1046 = vmatprep.subr.mxu0 0.0
    %1047 = vmatpush1.msra.mxu0 %v1008
    %1048 = vmatprep.subr.mxu0 0.0
    %1049 = vmatpush2.msra.mxu0 0.0
    %1050 = vmatprep.subr.mxu0 0.0
    %1051 = vmatpush2.msra.mxu0 0.0
    %1052 = vmatprep.subr.mxu0 0.0
    %1053 = vmatpush2.msra.mxu0 0.0
    %1054 = vmatprep.subr.mxu0 0.0
    %1055 = vmatpush2.msra.mxu0 0.0
    %1056 = vmatprep.subr.mxu0 0.0
    %1057 = vmatpush2.msra.mxu0 0.0
    %1058 = vmatprep.subr.mxu0 0.0
    %1059 = vmatpush2.msra.mxu0 0.0
    %1060 = vmatprep.subr.mxu0 0.0
    %1061 = vmatpush2.msra.mxu0 0.0
    %1062 = vmatprep.subr.mxu0 0.0
    %1063 = vmatpush2.msra.mxu0 0.0
    %1064 = vmatprep.subr.mxu0 0.0
    %1065 = vmatpush2.msra.mxu0 0.0
    %1066 = vmatprep.subr.mxu0 0.0
    %1067 = vmatpush2.msra.mxu0 0.0
    %1068 = vmatprep.subr.mxu0 0.0
    %1069 = vmatpush2.msra.mxu0 0.0
    %1070 = vmatprep.subr.mxu0 0.0
    %1071 = vmatpush2.msra.mxu0 0.0
    %1072 = vmatprep.subr.mxu0 0.0
    %1073 = vmatpush2.msra.mxu0 0.0
    %1074 = vmatprep.subr.mxu0 0.0
    %1075 = vmatpush2.msra.mxu0 0.0
    %1076 = vmatprep.subr.mxu0 0.0
    %1077 = vmatpush2.msra.mxu0 0.0
    %1078 = vmatprep.subr.mxu0 0.0
    %1079 = vmatpush2.msra.mxu0 0.0
    %1080 = vmatprep.mubr.f32.mxu0 0.0
    %1081 = vmatmul.mubr.f32.gmra.mxu0 %v1011
    %v1082 = vpop.f32.mrf.mxu0
    %v1083 = vadd.f32 0.0, %v1082
    %v1084 = vpop.f32.mrf.mxu0
    %1085 = vmatprep.mubr.f32.mxu0 0.0
    %1086 = vmatmul.mubr.f32.gmra.mxu0 %v1014
    %v1087 = vpop.f32.mrf.mxu0
    %v1088 = vadd.f32 0.0, %v1087
    %v1089 = vpop.f32.mrf.mxu0
    %1090 = vdwg.mxu0
    %v1092 = vsel %vm354, %v1083, 0
    %v1095 = vsel %vm354, %v1088, 0
    %1097 = vmatprep.subr.mxu0 0.0
    %1098 = vmatpush1.msra.mxu0 0.0
    %1099 = vmatprep.subr.mxu0 0.0
    %1100 = vmatpush1.msra.mxu0 0.0
    %1101 = vmatprep.subr.mxu0 0.0
    %1102 = vmatpush1.msra.mxu0 0.0
    %1103 = vmatprep.subr.mxu0 0.0
    %1104 = vmatpush1.msra.mxu0 0.0
    %1105 = vmatprep.subr.mxu0 0.0
    %1106 = vmatpush1.msra.mxu0 0.0
    %1107 = vmatprep.subr.mxu0 0.0
    %1108 = vmatpush1.msra.mxu0 0.0
    %1109 = vmatprep.subr.mxu0 0.0
    %1110 = vmatpush1.msra.mxu0 0.0
    %1111 = vmatprep.subr.mxu0 0.0
    %1112 = vmatpush1.msra.mxu0 0.0
    %1113 = vmatprep.subr.mxu0 0.0
    %1114 = vmatpush1.msra.mxu0 0.0
    %1115 = vmatprep.subr.mxu0 0.0
    %1116 = vmatpush1.msra.mxu0 0.0
    %1117 = vmatprep.subr.mxu0 0.0
    %1118 = vmatpush1.msra.mxu0 0.0
    %1119 = vmatprep.subr.mxu0 0.0
    %1120 = vmatpush1.msra.mxu0 0.0
    %1121 = vmatprep.subr.mxu0 0.0
    %1122 = vmatpush1.msra.mxu0 0.0
    %1123 = vmatprep.subr.mxu0 0.0
    %1124 = vmatpush1.msra.mxu0 0.0
    %1125 = vmatprep.subr.mxu0 0.0
    %1126 = vmatpush1.msra.mxu0 0.0
    %1127 = vmatprep.subr.mxu0 0.0
    %1128 = vmatpush1.msra.mxu0 %v123
    %1129 = vmatprep.subr.mxu0 0.0
    %1130 = vmatpush2.msra.mxu0 0.0
    %1131 = vmatprep.subr.mxu0 0.0
    %1132 = vmatpush2.msra.mxu0 0.0
    %1133 = vmatprep.subr.mxu0 0.0
    %1134 = vmatpush2.msra.mxu0 0.0
    %1135 = vmatprep.subr.mxu0 0.0
    %1136 = vmatpush2.msra.mxu0 0.0
    %1137 = vmatprep.subr.mxu0 0.0
    %1138 = vmatpush2.msra.mxu0 0.0
    %1139 = vmatprep.subr.mxu0 0.0
    %1140 = vmatpush2.msra.mxu0 0.0
    %1141 = vmatprep.subr.mxu0 0.0
    %1142 = vmatpush2.msra.mxu0 0.0
    %1143 = vmatprep.subr.mxu0 0.0
    %1144 = vmatpush2.msra.mxu0 0.0
    %1145 = vmatprep.subr.mxu0 0.0
    %1146 = vmatpush2.msra.mxu0 0.0
    %1147 = vmatprep.subr.mxu0 0.0
    %1148 = vmatpush2.msra.mxu0 0.0
    %1149 = vmatprep.subr.mxu0 0.0
    %1150 = vmatpush2.msra.mxu0 0.0
    %1151 = vmatprep.subr.mxu0 0.0
    %1152 = vmatpush2.msra.mxu0 0.0
    %1153 = vmatprep.subr.mxu0 0.0
    %1154 = vmatpush2.msra.mxu0 0.0
    %1155 = vmatprep.subr.mxu0 0.0
    %1156 = vmatpush2.msra.mxu0 0.0
    %1157 = vmatprep.subr.mxu0 0.0
    %1158 = vmatpush2.msra.mxu0 0.0
    %1159 = vmatprep.subr.mxu0 0.0
    %1160 = vmatpush2.msra.mxu0 0.0
    %1161 = vmatprep.mubr.f32.mxu0 0.0
    %1162 = vmatmul.mubr.f32.gmra.mxu0 %v1092
    %v1163 = vpop.f32.mrf.mxu0
    %v1164 = vadd.f32 0.0, %v1163
    %v1165 = vpop.f32.mrf.mxu0
    %1166 = vmatprep.mubr.f32.mxu0 0.0
    %1167 = vmatmul.mubr.f32.gmra.mxu0 %v1095
    %v1168 = vpop.f32.mrf.mxu0
    %v1169 = vadd.f32 0.0, %v1168
    %v1170 = vpop.f32.mrf.mxu0
    %1171 = vdwg.mxu0
    %v1172 = vadd.f32 %v890, %v1164
    %v1173 = vadd.f32 %v895, %v1169
    %1174 = vrot.lane.b32.xlu0 %v203, 104
    %v1175 = vpop.permute.xlu0 %1174
    %1176 = vrot.lane.b32.xlu0 %v208, 104
    %v1177 = vpop.permute.xlu0 %1176
    %1178 = vrot.lane.b32.xlu0 %v281, 104
    %v1179 = vpop.permute.xlu0 %1178
    %v1180 = vsel %vm354, %v1175, 0
    %v1182 = vsel %vm354, %v1177, 0
    %v1184 = vsel %vm354, %v1179, 0
    %1186 = vmatprep.subr.mxu0 0.0
    %1187 = vmatpush1.xpose.msra.mxu0 0.0
    %1188 = vmatprep.subr.mxu0 0.0
    %1189 = vmatpush1.xpose.msra.mxu0 0.0
    %1190 = vmatprep.subr.mxu0 0.0
    %1191 = vmatpush1.xpose.msra.mxu0 0.0
    %1192 = vmatprep.subr.mxu0 0.0
    %1193 = vmatpush1.xpose.msra.mxu0 0.0
    %1194 = vmatprep.subr.mxu0 0.0
    %1195 = vmatpush1.xpose.msra.mxu0 0.0
    %1196 = vmatprep.subr.mxu0 0.0
    %1197 = vmatpush1.xpose.msra.mxu0 0.0
    %1198 = vmatprep.subr.mxu0 0.0
    %1199 = vmatpush1.xpose.msra.mxu0 0.0
    %1200 = vmatprep.subr.mxu0 0.0
    %1201 = vmatpush1.xpose.msra.mxu0 0.0
    %1202 = vmatprep.subr.mxu0 0.0
    %1203 = vmatpush1.xpose.msra.mxu0 0.0
    %1204 = vmatprep.subr.mxu0 0.0
    %1205 = vmatpush1.xpose.msra.mxu0 0.0
    %1206 = vmatprep.subr.mxu0 0.0
    %1207 = vmatpush1.xpose.msra.mxu0 0.0
    %1208 = vmatprep.subr.mxu0 0.0
    %1209 = vmatpush1.xpose.msra.mxu0 0.0
    %1210 = vmatprep.subr.mxu0 0.0
    %1211 = vmatpush1.xpose.msra.mxu0 0.0
    %1212 = vmatprep.subr.mxu0 0.0
    %1213 = vmatpush1.xpose.msra.mxu0 0.0
    %1214 = vmatprep.subr.mxu0 0.0
    %1215 = vmatpush1.xpose.msra.mxu0 0.0
    %1216 = vmatprep.subr.mxu0 0.0
    %1217 = vmatpush1.xpose.msra.mxu0 %v1184
    %1218 = vmatprep.subr.mxu0 0.0
    %1219 = vmatpush2.xpose.msra.mxu0 0.0
    %1220 = vmatprep.subr.mxu0 0.0
    %1221 = vmatpush2.xpose.msra.mxu0 0.0
    %1222 = vmatprep.subr.mxu0 0.0
    %1223 = vmatpush2.xpose.msra.mxu0 0.0
    %1224 = vmatprep.subr.mxu0 0.0
    %1225 = vmatpush2.xpose.msra.mxu0 0.0
    %1226 = vmatprep.subr.mxu0 0.0
    %1227 = vmatpush2.xpose.msra.mxu0 0.0
    %1228 = vmatprep.subr.mxu0 0.0
    %1229 = vmatpush2.xpose.msra.mxu0 0.0
    %1230 = vmatprep.subr.mxu0 0.0
    %1231 = vmatpush2.xpose.msra.mxu0 0.0
    %1232 = vmatprep.subr.mxu0 0.0
    %1233 = vmatpush2.xpose.msra.mxu0 0.0
    %1234 = vmatprep.subr.mxu0 0.0
    %1235 = vmatpush2.xpose.msra.mxu0 0.0
    %1236 = vmatprep.subr.mxu0 0.0
    %1237 = vmatpush2.xpose.msra.mxu0 0.0
    %1238 = vmatprep.subr.mxu0 0.0
    %1239 = vmatpush2.xpose.msra.mxu0 0.0
    %1240 = vmatprep.subr.mxu0 0.0
    %1241 = vmatpush2.xpose.msra.mxu0 0.0
    %1242 = vmatprep.subr.mxu0 0.0
    %1243 = vmatpush2.xpose.msra.mxu0 0.0
    %1244 = vmatprep.subr.mxu0 0.0
    %1245 = vmatpush2.xpose.msra.mxu0 0.0
    %1246 = vmatprep.subr.mxu0 0.0
    %1247 = vmatpush2.xpose.msra.mxu0 0.0
    %1248 = vmatprep.subr.mxu0 0.0
    %1249 = vmatpush2.xpose.msra.mxu0 0.0
    %1250 = vmatprep.mubr.f32.mxu0 0.0
    %1251 = vmatmul.mubr.f32.gmra.mxu0 %v1180
    %v1252 = vpop.f32.mrf.mxu0
    %v1253 = vadd.f32 0.0, %v1252
    %v1254 = vpop.f32.mrf.mxu0
    %1255 = vmatprep.mubr.f32.mxu0 0.0
    %1256 = vmatmul.mubr.f32.gmra.mxu0 %v1182
    %v1257 = vpop.f32.mrf.mxu0
    %v1258 = vadd.f32 0.0, %v1257
    %v1259 = vpop.f32.mrf.mxu0
    %1260 = vdwg.mxu0
    %v1261 = vsel %vm354, %v1253, -inf
    %1262 = vmax.xlane.f32.xlu0 %v1261
    %v1263 = vpop.xlane.xlu0 %1262
    %v1264 = vsel %vm354, %v1258, -inf
    %1265 = vmax.xlane.f32.xlu0 %v1264
    %v1266 = vpop.xlane.xlu0 %1265
    %v1267 = vsub.f32 %v1253, %v1263
    %v1268 = vsub.f32 %v1258, %v1266
    %v1269 = vmul.f32 %v1267, 1.442695
    %v1270 = vpow.pop %v1269
    %v1271 = vmul.f32 %v1268, 1.442695
    %v1272 = vpow.pop %v1271
    %v1273 = vsel %vm354, %v1270, 0.0
    %1274 = vadd.xlane.f32.xlu0 %v1273
    %v1275 = vpop.xlane.xlu0 %1274
    %v1276 = vsel %vm354, %v1272, 0.0
    %1277 = vadd.xlane.f32.xlu0 %v1276
    %v1278 = vpop.xlane.xlu0 %1277
    %v1279 = vrcp.pop %v1275
    %v1280 = vrcp.pop %v1278
    %v1281 = vmul.f32 %v1270, %v1279
    %v1282 = vmul.f32 %v1272, %v1280
    %1283 = vrot.lane.b32.xlu0 %v351, 104
    %v1284 = vpop.permute.xlu0 %1283
    %v1287 = vsel %vm354, %v1281, 0
    %v1290 = vsel %vm354, %v1282, 0
    %1292 = vmatprep.subr.mxu0 0.0
    %1293 = vmatpush1.msra.mxu0 0.0
    %1294 = vmatprep.subr.mxu0 0.0
    %1295 = vmatpush1.msra.mxu0 0.0
    %1296 = vmatprep.subr.mxu0 0.0
    %1297 = vmatpush1.msra.mxu0 0.0
    %1298 = vmatprep.subr.mxu0 0.0
    %1299 = vmatpush1.msra.mxu0 0.0
    %1300 = vmatprep.subr.mxu0 0.0
    %1301 = vmatpush1.msra.mxu0 0.0
    %1302 = vmatprep.subr.mxu0 0.0
    %1303 = vmatpush1.msra.mxu0 0.0
    %1304 = vmatprep.subr.mxu0 0.0
    %1305 = vmatpush1.msra.mxu0 0.0
    %1306 = vmatprep.subr.mxu0 0.0
    %1307 = vmatpush1.msra.mxu0 0.0
    %1308 = vmatprep.subr.mxu0 0.0
    %1309 = vmatpush1.msra.mxu0 0.0
    %1310 = vmatprep.subr.mxu0 0.0
    %1311 = vmatpush1.msra.mxu0 0.0
    %1312 = vmatprep.subr.mxu0 0.0
    %1313 = vmatpush1.msra.mxu0 0.0
    %1314 = vmatprep.subr.mxu0 0.0
    %1315 = vmatpush1.msra.mxu0 0.0
    %1316 = vmatprep.subr.mxu0 0.0
    %1317 = vmatpush1.msra.mxu0 0.0
    %1318 = vmatprep.subr.mxu0 0.0
    %1319 = vmatpush1.msra.mxu0 0.0
    %1320 = vmatprep.subr.mxu0 0.0
    %1321 = vmatpush1.msra.mxu0 0.0
    %1322 = vmatprep.subr.mxu0 0.0
    %1323 = vmatpush1.msra.mxu0 %v1284
    %1324 = vmatprep.subr.mxu0 0.0
    %1325 = vmatpush2.msra.mxu0 0.0
    %1326 = vmatprep.subr.mxu0 0.0
    %1327 = vmatpush2.msra.mxu0 0.0
    %1328 = vmatprep.subr.mxu0 0.0
    %1329 = vmatpush2.msra.mxu0 0.0
    %1330 = vmatprep.subr.mxu0 0.0
    %1331 = vmatpush2.msra.mxu0 0.0
    %1332 = vmatprep.subr.mxu0 0.0
    %1333 = vmatpush2.msra.mxu0 0.0
    %1334 = vmatprep.subr.mxu0 0.0
    %1335 = vmatpush2.msra.mxu0 0.0
    %1336 = vmatprep.subr.mxu0 0.0
    %1337 = vmatpush2.msra.mxu0 0.0
    %1338 = vmatprep.subr.mxu0 0.0
    %1339 = vmatpush2.msra.mxu0 0.0
    %1340 = vmatprep.subr.mxu0 0.0
    %1341 = vmatpush2.msra.mxu0 0.0
    %1342 = vmatprep.subr.mxu0 0.0
    %1343 = vmatpush2.msra.mxu0 0.0
    %1344 = vmatprep.subr.mxu0 0.0
    %1345 = vmatpush2.msra.mxu0 0.0
    %1346 = vmatprep.subr.mxu0 0.0
    %1347 = vmatpush2.msra.mxu0 0.0
    %1348 = vmatprep.subr.mxu0 0.0
    %1349 = vmatpush2.msra.mxu0 0.0
    %1350 = vmatprep.subr.mxu0 0.0
    %1351 = vmatpush2.msra.mxu0 0.0
    %1352 = vmatprep.subr.mxu0 0.0
    %1353 = vmatpush2.msra.mxu0 0.0
    %1354 = vmatprep.subr.mxu0 0.0
    %1355 = vmatpush2.msra.mxu0 0.0
    %1356 = vmatprep.mubr.f32.mxu0 0.0
    %1357 = vmatmul.mubr.f32.gmra.mxu0 %v1287
    %v1358 = vpop.f32.mrf.mxu0
    %v1359 = vadd.f32 0.0, %v1358
    %v1360 = vpop.f32.mrf.mxu0
    %1361 = vmatprep.mubr.f32.mxu0 0.0
    %1362 = vmatmul.mubr.f32.gmra.mxu0 %v1290
    %v1363 = vpop.f32.mrf.mxu0
    %v1364 = vadd.f32 0.0, %v1363
    %v1365 = vpop.f32.mrf.mxu0
    %1366 = vdwg.mxu0
    %v1368 = vsel %vm354, %v1359, 0
    %v1371 = vsel %vm354, %v1364, 0
    %1373 = vmatprep.subr.mxu0 0.0
    %1374 = vmatpush1.msra.mxu0 0.0
    %1375 = vmatprep.subr.mxu0 0.0
    %1376 = vmatpush1.msra.mxu0 0.0
    %1377 = vmatprep.subr.mxu0 0.0
    %1378 = vmatpush1.msra.mxu0 0.0
    %1379 = vmatprep.subr.mxu0 0.0
    %1380 = vmatpush1.msra.mxu0 0.0
    %1381 = vmatprep.subr.mxu0 0.0
    %1382 = vmatpush1.msra.mxu0 0.0
    %1383 = vmatprep.subr.mxu0 0.0
    %1384 = vmatpush1.msra.mxu0 0.0
    %1385 = vmatprep.subr.mxu0 0.0
    %1386 = vmatpush1.msra.mxu0 0.0
    %1387 = vmatprep.subr.mxu0 0.0
    %1388 = vmatpush1.msra.mxu0 0.0
    %1389 = vmatprep.subr.mxu0 0.0
    %1390 = vmatpush1.msra.mxu0 0.0
    %1391 = vmatprep.subr.mxu0 0.0
    %1392 = vmatpush1.msra.mxu0 0.0
    %1393 = vmatprep.subr.mxu0 0.0
    %1394 = vmatpush1.msra.mxu0 0.0
    %1395 = vmatprep.subr.mxu0 0.0
    %1396 = vmatpush1.msra.mxu0 0.0
    %1397 = vmatprep.subr.mxu0 0.0
    %1398 = vmatpush1.msra.mxu0 0.0
    %1399 = vmatprep.subr.mxu0 0.0
    %1400 = vmatpush1.msra.mxu0 0.0
    %1401 = vmatprep.subr.mxu0 0.0
    %1402 = vmatpush1.msra.mxu0 0.0
    %1403 = vmatprep.subr.mxu0 0.0
    %1404 = vmatpush1.msra.mxu0 %v124
    %1405 = vmatprep.subr.mxu0 0.0
    %1406 = vmatpush2.msra.mxu0 0.0
    %1407 = vmatprep.subr.mxu0 0.0
    %1408 = vmatpush2.msra.mxu0 0.0
    %1409 = vmatprep.subr.mxu0 0.0
    %1410 = vmatpush2.msra.mxu0 0.0
    %1411 = vmatprep.subr.mxu0 0.0
    %1412 = vmatpush2.msra.mxu0 0.0
    %1413 = vmatprep.subr.mxu0 0.0
    %1414 = vmatpush2.msra.mxu0 0.0
    %1415 = vmatprep.subr.mxu0 0.0
    %1416 = vmatpush2.msra.mxu0 0.0
    %1417 = vmatprep.subr.mxu0 0.0
    %1418 = vmatpush2.msra.mxu0 0.0
    %1419 = vmatprep.subr.mxu0 0.0
    %1420 = vmatpush2.msra.mxu0 0.0
    %1421 = vmatprep.subr.mxu0 0.0
    %1422 = vmatpush2.msra.mxu0 0.0
    %1423 = vmatprep.subr.mxu0 0.0
    %1424 = vmatpush2.msra.mxu0 0.0
    %1425 = vmatprep.subr.mxu0 0.0
    %1426 = vmatpush2.msra.mxu0 0.0
    %1427 = vmatprep.subr.mxu0 0.0
    %1428 = vmatpush2.msra.mxu0 0.0
    %1429 = vmatprep.subr.mxu0 0.0
    %1430 = vmatpush2.msra.mxu0 0.0
    %1431 = vmatprep.subr.mxu0 0.0
    %1432 = vmatpush2.msra.mxu0 0.0
    %1433 = vmatprep.subr.mxu0 0.0
    %1434 = vmatpush2.msra.mxu0 0.0
    %1435 = vmatprep.subr.mxu0 0.0
    %1436 = vmatpush2.msra.mxu0 0.0
    %1437 = vmatprep.mubr.f32.mxu0 0.0
    %1438 = vmatmul.mubr.f32.gmra.mxu0 %v1368
    %v1439 = vpop.f32.mrf.mxu0
    %v1440 = vadd.f32 0.0, %v1439
    %v1441 = vpop.f32.mrf.mxu0
    %1442 = vmatprep.mubr.f32.mxu0 0.0
    %1443 = vmatmul.mubr.f32.gmra.mxu0 %v1371
    %v1444 = vpop.f32.mrf.mxu0
    %v1445 = vadd.f32 0.0, %v1444
    %v1446 = vpop.f32.mrf.mxu0
    %1447 = vdwg.mxu0
    %v1448 = vadd.f32 %v1172, %v1440
    %v1449 = vadd.f32 %v1173, %v1445
    %v1451 = vlaneseq
    %v1452 = vshrl.u32 %v1451, 7
    %v1453 = vsub.s32 0, %v1452
    %v1454 = vrot.slane %v125, %v1453
    %v1456 = vadd.f32 %v1448, %v1454
    %v1457 = vadd.f32 %v1449, %v1454
    %1458 = vst.msk [vmem:[#allocation13] sm:$0xff] %vm129, %v1456
    %1459 = vst.msk [vmem:[#allocation13 + $0x8] sm:$0xff] %vm129, %v1457
    %s1460 = scalar_lea.vmem [#allocation2], 16
    %v1461 = vld [vmem:[%s1460] sm:$0xff]
    %v1462 = vld [vmem:[%s1460 + $0x8] sm:$0xff]
    %s1463 = scalar_lea.vmem [#allocation5], 8
    %v1464 = vld [vmem:[%s1463] sm:$0xff]
    %v1466 = vsel %vm129, %v1461, 0
    %v1469 = vsel %vm129, %v1462, 0
    %1471 = vmatprep.subr.mxu0 0.0
    %1472 = vmatpush1.msra.mxu0 0.0
    %1473 = vmatprep.subr.mxu0 0.0
    %1474 = vmatpush1.msra.mxu0 0.0
    %1475 = vmatprep.subr.mxu0 0.0
    %1476 = vmatpush1.msra.mxu0 0.0
    %1477 = vmatprep.subr.mxu0 0.0
    %1478 = vmatpush1.msra.mxu0 0.0
    %1479 = vmatprep.subr.mxu0 0.0
    %1480 = vmatpush1.msra.mxu0 0.0
    %1481 = vmatprep.subr.mxu0 0.0
    %1482 = vmatpush1.msra.mxu0 0.0
    %1483 = vmatprep.subr.mxu0 0.0
    %1484 = vmatpush1.msra.mxu0 0.0
    %1485 = vmatprep.subr.mxu0 0.0
    %1486 = vmatpush1.msra.mxu0 0.0
    %1487 = vmatprep.subr.mxu0 0.0
    %1488 = vmatpush1.msra.mxu0 0.0
    %1489 = vmatprep.subr.mxu0 0.0
    %1490 = vmatpush1.msra.mxu0 0.0
    %1491 = vmatprep.subr.mxu0 0.0
    %1492 = vmatpush1.msra.mxu0 0.0
    %1493 = vmatprep.subr.mxu0 0.0
    %1494 = vmatpush1.msra.mxu0 0.0
    %1495 = vmatprep.subr.mxu0 0.0
    %1496 = vmatpush1.msra.mxu0 %v112
    %1497 = vmatprep.subr.mxu0 0.0
    %1498 = vmatpush1.msra.mxu0 %v111
    %1499 = vmatprep.subr.mxu0 0.0
    %1500 = vmatpush1.msra.mxu0 %v110
    %1501 = vmatprep.subr.mxu0 0.0
    %1502 = vmatpush1.msra.mxu0 %v109
    %1503 = vmatprep.subr.mxu0 0.0
    %1504 = vmatpush2.msra.mxu0 0.0
    %1505 = vmatprep.subr.mxu0 0.0
    %1506 = vmatpush2.msra.mxu0 0.0
    %1507 = vmatprep.subr.mxu0 0.0
    %1508 = vmatpush2.msra.mxu0 0.0
    %1509 = vmatprep.subr.mxu0 0.0
    %1510 = vmatpush2.msra.mxu0 0.0
    %1511 = vmatprep.subr.mxu0 0.0
    %1512 = vmatpush2.msra.mxu0 0.0
    %1513 = vmatprep.subr.mxu0 0.0
    %1514 = vmatpush2.msra.mxu0 0.0
    %1515 = vmatprep.subr.mxu0 0.0
    %1516 = vmatpush2.msra.mxu0 0.0
    %1517 = vmatprep.subr.mxu0 0.0
    %1518 = vmatpush2.msra.mxu0 0.0
    %1519 = vmatprep.subr.mxu0 0.0
    %1520 = vmatpush2.msra.mxu0 0.0
    %1521 = vmatprep.subr.mxu0 0.0
    %1522 = vmatpush2.msra.mxu0 0.0
    %1523 = vmatprep.subr.mxu0 0.0
    %1524 = vmatpush2.msra.mxu0 0.0
    %1525 = vmatprep.subr.mxu0 0.0
    %1526 = vmatpush2.msra.mxu0 0.0
    %1527 = vmatprep.subr.mxu0 0.0
    %1528 = vmatpush2.msra.mxu0 0.0
    %1529 = vmatprep.subr.mxu0 0.0
    %1530 = vmatpush2.msra.mxu0 0.0
    %1531 = vmatprep.subr.mxu0 0.0
    %1532 = vmatpush2.msra.mxu0 0.0
    %1533 = vmatprep.subr.mxu0 0.0
    %1534 = vmatpush2.msra.mxu0 0.0
    %1535 = vmatprep.mubr.f32.mxu0 0.0
    %1536 = vmatmul.mubr.f32.gmra.mxu0 %v1466
    %v1537 = vpop.f32.mrf.mxu0
    %v1538 = vadd.f32 0.0, %v1537
    %v1539 = vpop.f32.mrf.mxu0
    %1540 = vmatprep.mubr.f32.mxu0 0.0
    %1541 = vmatmul.mubr.f32.gmra.mxu0 %v1469
    %v1542 = vpop.f32.mrf.mxu0
    %v1543 = vadd.f32 0.0, %v1542
    %v1544 = vpop.f32.mrf.mxu0
    %1545 = vdwg.mxu0
    %v1547 = vsel %vm129, %v1464, 0
    %1549 = vmatprep.subr.mxu0 0.0
    %1550 = vmatpush1.msra.mxu0 0.0
    %1551 = vmatprep.subr.mxu0 0.0
    %1552 = vmatpush1.msra.mxu0 0.0
    %1553 = vmatprep.subr.mxu0 0.0
    %1554 = vmatpush1.msra.mxu0 0.0
    %1555 = vmatprep.subr.mxu0 0.0
    %1556 = vmatpush1.msra.mxu0 0.0
    %1557 = vmatprep.subr.mxu0 0.0
    %1558 = vmatpush1.msra.mxu0 0.0
    %1559 = vmatprep.subr.mxu0 0.0
    %1560 = vmatpush1.msra.mxu0 0.0
    %1561 = vmatprep.subr.mxu0 0.0
    %1562 = vmatpush1.msra.mxu0 0.0
    %1563 = vmatprep.subr.mxu0 0.0
    %1564 = vmatpush1.msra.mxu0 0.0
    %1565 = vmatprep.subr.mxu0 0.0
    %1566 = vmatpush1.msra.mxu0 0.0
    %1567 = vmatprep.subr.mxu0 0.0
    %1568 = vmatpush1.msra.mxu0 0.0
    %1569 = vmatprep.subr.mxu0 0.0
    %1570 = vmatpush1.msra.mxu0 0.0
    %1571 = vmatprep.subr.mxu0 0.0
    %1572 = vmatpush1.msra.mxu0 0.0
    %1573 = vmatprep.subr.mxu0 0.0
    %1574 = vmatpush1.msra.mxu0 %v116
    %1575 = vmatprep.subr.mxu0 0.0
    %1576 = vmatpush1.msra.mxu0 %v115
    %1577 = vmatprep.subr.mxu0 0.0
    %1578 = vmatpush1.msra.mxu0 %v114
    %1579 = vmatprep.subr.mxu0 0.0
    %1580 = vmatpush1.msra.mxu0 %v113
    %1581 = vmatprep.subr.mxu0 0.0
    %1582 = vmatpush2.msra.mxu0 0.0
    %1583 = vmatprep.subr.mxu0 0.0
    %1584 = vmatpush2.msra.mxu0 0.0
    %1585 = vmatprep.subr.mxu0 0.0
    %1586 = vmatpush2.msra.mxu0 0.0
    %1587 = vmatprep.subr.mxu0 0.0
    %1588 = vmatpush2.msra.mxu0 0.0
    %1589 = vmatprep.subr.mxu0 0.0
    %1590 = vmatpush2.msra.mxu0 0.0
    %1591 = vmatprep.subr.mxu0 0.0
    %1592 = vmatpush2.msra.mxu0 0.0
    %1593 = vmatprep.subr.mxu0 0.0
    %1594 = vmatpush2.msra.mxu0 0.0
    %1595 = vmatprep.subr.mxu0 0.0
    %1596 = vmatpush2.msra.mxu0 0.0
    %1597 = vmatprep.subr.mxu0 0.0
    %1598 = vmatpush2.msra.mxu0 0.0
    %1599 = vmatprep.subr.mxu0 0.0
    %1600 = vmatpush2.msra.mxu0 0.0
    %1601 = vmatprep.subr.mxu0 0.0
    %1602 = vmatpush2.msra.mxu0 0.0
    %1603 = vmatprep.subr.mxu0 0.0
    %1604 = vmatpush2.msra.mxu0 0.0
    %1605 = vmatprep.subr.mxu0 0.0
    %1606 = vmatpush2.msra.mxu0 0.0
    %1607 = vmatprep.subr.mxu0 0.0
    %1608 = vmatpush2.msra.mxu0 0.0
    %1609 = vmatprep.subr.mxu0 0.0
    %1610 = vmatpush2.msra.mxu0 0.0
    %1611 = vmatprep.subr.mxu0 0.0
    %1612 = vmatpush2.msra.mxu0 0.0
    %1613 = vmatprep.mubr.f32.mxu0 0.0
    %1614 = vmatmul.mubr.f32.gmra.mxu0 %v1547
    %v1615 = vpop.f32.mrf.mxu0
    %v1616 = vadd.f32 0.0, %v1615
    %v1617 = vpop.f32.mrf.mxu0
    %1618 = vdwg.mxu0
    %1619 = vmatprep.subr.mxu0 0.0
    %1620 = vmatpush1.msra.mxu0 0.0
    %1621 = vmatprep.subr.mxu0 0.0
    %1622 = vmatpush1.msra.mxu0 0.0
    %1623 = vmatprep.subr.mxu0 0.0
    %1624 = vmatpush1.msra.mxu0 0.0
    %1625 = vmatprep.subr.mxu0 0.0
    %1626 = vmatpush1.msra.mxu0 0.0
    %1627 = vmatprep.subr.mxu0 0.0
    %1628 = vmatpush1.msra.mxu0 0.0
    %1629 = vmatprep.subr.mxu0 0.0
    %1630 = vmatpush1.msra.mxu0 0.0
    %1631 = vmatprep.subr.mxu0 0.0
    %1632 = vmatpush1.msra.mxu0 0.0
    %1633 = vmatprep.subr.mxu0 0.0
    %1634 = vmatpush1.msra.mxu0 0.0
    %1635 = vmatprep.subr.mxu0 0.0
    %1636 = vmatpush1.msra.mxu0 0.0
    %1637 = vmatprep.subr.mxu0 0.0
    %1638 = vmatpush1.msra.mxu0 0.0
    %1639 = vmatprep.subr.mxu0 0.0
    %1640 = vmatpush1.msra.mxu0 0.0
    %1641 = vmatprep.subr.mxu0 0.0
    %1642 = vmatpush1.msra.mxu0 0.0
    %1643 = vmatprep.subr.mxu0 0.0
    %1644 = vmatpush1.msra.mxu0 %v120
    %1645 = vmatprep.subr.mxu0 0.0
    %1646 = vmatpush1.msra.mxu0 %v119
    %1647 = vmatprep.subr.mxu0 0.0
    %1648 = vmatpush1.msra.mxu0 %v118
    %1649 = vmatprep.subr.mxu0 0.0
    %1650 = vmatpush1.msra.mxu0 %v117
    %1651 = vmatprep.subr.mxu0 0.0
    %1652 = vmatpush2.msra.mxu0 0.0
    %1653 = vmatprep.subr.mxu0 0.0
    %1654 = vmatpush2.msra.mxu0 0.0
    %1655 = vmatprep.subr.mxu0 0.0
    %1656 = vmatpush2.msra.mxu0 0.0
    %1657 = vmatprep.subr.mxu0 0.0
    %1658 = vmatpush2.msra.mxu0 0.0
    %1659 = vmatprep.subr.mxu0 0.0
    %1660 = vmatpush2.msra.mxu0 0.0
    %1661 = vmatprep.subr.mxu0 0.0
    %1662 = vmatpush2.msra.mxu0 0.0
    %1663 = vmatprep.subr.mxu0 0.0
    %1664 = vmatpush2.msra.mxu0 0.0
    %1665 = vmatprep.subr.mxu0 0.0
    %1666 = vmatpush2.msra.mxu0 0.0
    %1667 = vmatprep.subr.mxu0 0.0
    %1668 = vmatpush2.msra.mxu0 0.0
    %1669 = vmatprep.subr.mxu0 0.0
    %1670 = vmatpush2.msra.mxu0 0.0
    %1671 = vmatprep.subr.mxu0 0.0
    %1672 = vmatpush2.msra.mxu0 0.0
    %1673 = vmatprep.subr.mxu0 0.0
    %1674 = vmatpush2.msra.mxu0 0.0
    %1675 = vmatprep.subr.mxu0 0.0
    %1676 = vmatpush2.msra.mxu0 0.0
    %1677 = vmatprep.subr.mxu0 0.0
    %1678 = vmatpush2.msra.mxu0 0.0
    %1679 = vmatprep.subr.mxu0 0.0
    %1680 = vmatpush2.msra.mxu0 0.0
    %1681 = vmatprep.subr.mxu0 0.0
    %1682 = vmatpush2.msra.mxu0 0.0
    %1683 = vmatprep.mubr.f32.mxu0 0.0
    %1684 = vmatmul.mubr.f32.gmra.mxu0 %v1547
    %v1685 = vpop.f32.mrf.mxu0
    %v1686 = vadd.f32 0.0, %v1685
    %v1687 = vpop.f32.mrf.mxu0
    %1688 = vdwg.mxu0
    %v1690 = vsel %vm354, %v1538, 0
    %v1693 = vsel %vm354, %v1543, 0
    %v1696 = vsel %vm354, %v1616, 0
    %1698 = vmatprep.subr.mxu0 0.0
    %1699 = vmatpush1.xpose.msra.mxu0 0.0
    %1700 = vmatprep.subr.mxu0 0.0
    %1701 = vmatpush1.xpose.msra.mxu0 0.0
    %1702 = vmatprep.subr.mxu0 0.0
    %1703 = vmatpush1.xpose.msra.mxu0 0.0
    %1704 = vmatprep.subr.mxu0 0.0
    %1705 = vmatpush1.xpose.msra.mxu0 0.0
    %1706 = vmatprep.subr.mxu0 0.0
    %1707 = vmatpush1.xpose.msra.mxu0 0.0
    %1708 = vmatprep.subr.mxu0 0.0
    %1709 = vmatpush1.xpose.msra.mxu0 0.0
    %1710 = vmatprep.subr.mxu0 0.0
    %1711 = vmatpush1.xpose.msra.mxu0 0.0
    %1712 = vmatprep.subr.mxu0 0.0
    %1713 = vmatpush1.xpose.msra.mxu0 0.0
    %1714 = vmatprep.subr.mxu0 0.0
    %1715 = vmatpush1.xpose.msra.mxu0 0.0
    %1716 = vmatprep.subr.mxu0 0.0
    %1717 = vmatpush1.xpose.msra.mxu0 0.0
    %1718 = vmatprep.subr.mxu0 0.0
    %1719 = vmatpush1.xpose.msra.mxu0 0.0
    %1720 = vmatprep.subr.mxu0 0.0
    %1721 = vmatpush1.xpose.msra.mxu0 0.0
    %1722 = vmatprep.subr.mxu0 0.0
    %1723 = vmatpush1.xpose.msra.mxu0 0.0
    %1724 = vmatprep.subr.mxu0 0.0
    %1725 = vmatpush1.xpose.msra.mxu0 0.0
    %1726 = vmatprep.subr.mxu0 0.0
    %1727 = vmatpush1.xpose.msra.mxu0 0.0
    %1728 = vmatprep.subr.mxu0 0.0
    %1729 = vmatpush1.xpose.msra.mxu0 %v1696
    %1730 = vmatprep.subr.mxu0 0.0
    %1731 = vmatpush2.xpose.msra.mxu0 0.0
    %1732 = vmatprep.subr.mxu0 0.0
    %1733 = vmatpush2.xpose.msra.mxu0 0.0
    %1734 = vmatprep.subr.mxu0 0.0
    %1735 = vmatpush2.xpose.msra.mxu0 0.0
    %1736 = vmatprep.subr.mxu0 0.0
    %1737 = vmatpush2.xpose.msra.mxu0 0.0
    %1738 = vmatprep.subr.mxu0 0.0
    %1739 = vmatpush2.xpose.msra.mxu0 0.0
    %1740 = vmatprep.subr.mxu0 0.0
    %1741 = vmatpush2.xpose.msra.mxu0 0.0
    %1742 = vmatprep.subr.mxu0 0.0
    %1743 = vmatpush2.xpose.msra.mxu0 0.0
    %1744 = vmatprep.subr.mxu0 0.0
    %1745 = vmatpush2.xpose.msra.mxu0 0.0
    %1746 = vmatprep.subr.mxu0 0.0
    %1747 = vmatpush2.xpose.msra.mxu0 0.0
    %1748 = vmatprep.subr.mxu0 0.0
    %1749 = vmatpush2.xpose.msra.mxu0 0.0
    %1750 = vmatprep.subr.mxu0 0.0
    %1751 = vmatpush2.xpose.msra.mxu0 0.0
    %1752 = vmatprep.subr.mxu0 0.0
    %1753 = vmatpush2.xpose.msra.mxu0 0.0
    %1754 = vmatprep.subr.mxu0 0.0
    %1755 = vmatpush2.xpose.msra.mxu0 0.0
    %1756 = vmatprep.subr.mxu0 0.0
    %1757 = vmatpush2.xpose.msra.mxu0 0.0
    %1758 = vmatprep.subr.mxu0 0.0
    %1759 = vmatpush2.xpose.msra.mxu0 0.0
    %1760 = vmatprep.subr.mxu0 0.0
    %1761 = vmatpush2.xpose.msra.mxu0 0.0
    %1762 = vmatprep.mubr.f32.mxu0 0.0
    %1763 = vmatmul.mubr.f32.gmra.mxu0 %v1690
    %v1764 = vpop.f32.mrf.mxu0
    %v1765 = vadd.f32 0.0, %v1764
    %v1766 = vpop.f32.mrf.mxu0
    %1767 = vmatprep.mubr.f32.mxu0 0.0
    %1768 = vmatmul.mubr.f32.gmra.mxu0 %v1693
    %v1769 = vpop.f32.mrf.mxu0
    %v1770 = vadd.f32 0.0, %v1769
    %v1771 = vpop.f32.mrf.mxu0
    %1772 = vdwg.mxu0
    %v1773 = vsel %vm354, %v1765, -inf
    %1774 = vmax.xlane.f32.xlu0 %v1773
    %v1775 = vpop.xlane.xlu0 %1774
    %v1776 = vsel %vm354, %v1770, -inf
    %1777 = vmax.xlane.f32.xlu0 %v1776
    %v1778 = vpop.xlane.xlu0 %1777
    %v1779 = vsub.f32 %v1765, %v1775
    %v1780 = vsub.f32 %v1770, %v1778
    %v1781 = vmul.f32 %v1779, 1.442695
    %v1782 = vpow.pop %v1781
    %v1783 = vmul.f32 %v1780, 1.442695
    %v1784 = vpow.pop %v1783
    %v1785 = vsel %vm354, %v1782, 0.0
    %1786 = vadd.xlane.f32.xlu0 %v1785
    %v1787 = vpop.xlane.xlu0 %1786
    %v1788 = vsel %vm354, %v1784, 0.0
    %1789 = vadd.xlane.f32.xlu0 %v1788
    %v1790 = vpop.xlane.xlu0 %1789
    %v1791 = vrcp.pop %v1787
    %v1792 = vrcp.pop %v1790
    %v1793 = vmul.f32 %v1782, %v1791
    %v1794 = vmul.f32 %v1784, %v1792
    %v1796 = vsel %vm354, %v1793, 0
    %v1799 = vsel %vm354, %v1794, 0
    %1801 = vmatprep.subr.mxu0 0.0
    %1802 = vmatpush1.msra.mxu0 0.0
    %1803 = vmatprep.subr.mxu0 0.0
    %1804 = vmatpush1.msra.mxu0 0.0
    %1805 = vmatprep.subr.mxu0 0.0
    %1806 = vmatpush1.msra.mxu0 0.0
    %1807 = vmatprep.subr.mxu0 0.0
    %1808 = vmatpush1.msra.mxu0 0.0
    %1809 = vmatprep.subr.mxu0 0.0
    %1810 = vmatpush1.msra.mxu0 0.0
    %1811 = vmatprep.subr.mxu0 0.0
    %1812 = vmatpush1.msra.mxu0 0.0
    %1813 = vmatprep.subr.mxu0 0.0
    %1814 = vmatpush1.msra.mxu0 0.0
    %1815 = vmatprep.subr.mxu0 0.0
    %1816 = vmatpush1.msra.mxu0 0.0
    %1817 = vmatprep.subr.mxu0 0.0
    %1818 = vmatpush1.msra.mxu0 0.0
    %1819 = vmatprep.subr.mxu0 0.0
    %1820 = vmatpush1.msra.mxu0 0.0
    %1821 = vmatprep.subr.mxu0 0.0
    %1822 = vmatpush1.msra.mxu0 0.0
    %1823 = vmatprep.subr.mxu0 0.0
    %1824 = vmatpush1.msra.mxu0 0.0
    %1825 = vmatprep.subr.mxu0 0.0
    %1826 = vmatpush1.msra.mxu0 0.0
    %1827 = vmatprep.subr.mxu0 0.0
    %1828 = vmatpush1.msra.mxu0 0.0
    %1829 = vmatprep.subr.mxu0 0.0
    %1830 = vmatpush1.msra.mxu0 0.0
    %1831 = vmatprep.subr.mxu0 0.0
    %1832 = vmatpush1.msra.mxu0 %v1686
    %1833 = vmatprep.subr.mxu0 0.0
    %1834 = vmatpush2.msra.mxu0 0.0
    %1835 = vmatprep.subr.mxu0 0.0
    %1836 = vmatpush2.msra.mxu0 0.0
    %1837 = vmatprep.subr.mxu0 0.0
    %1838 = vmatpush2.msra.mxu0 0.0
    %1839 = vmatprep.subr.mxu0 0.0
    %1840 = vmatpush2.msra.mxu0 0.0
    %1841 = vmatprep.subr.mxu0 0.0
    %1842 = vmatpush2.msra.mxu0 0.0
    %1843 = vmatprep.subr.mxu0 0.0
    %1844 = vmatpush2.msra.mxu0 0.0
    %1845 = vmatprep.subr.mxu0 0.0
    %1846 = vmatpush2.msra.mxu0 0.0
    %1847 = vmatprep.subr.mxu0 0.0
    %1848 = vmatpush2.msra.mxu0 0.0
    %1849 = vmatprep.subr.mxu0 0.0
    %1850 = vmatpush2.msra.mxu0 0.0
    %1851 = vmatprep.subr.mxu0 0.0
    %1852 = vmatpush2.msra.mxu0 0.0
    %1853 = vmatprep.subr.mxu0 0.0
    %1854 = vmatpush2.msra.mxu0 0.0
    %1855 = vmatprep.subr.mxu0 0.0
    %1856 = vmatpush2.msra.mxu0 0.0
    %1857 = vmatprep.subr.mxu0 0.0
    %1858 = vmatpush2.msra.mxu0 0.0
    %1859 = vmatprep.subr.mxu0 0.0
    %1860 = vmatpush2.msra.mxu0 0.0
    %1861 = vmatprep.subr.mxu0 0.0
    %1862 = vmatpush2.msra.mxu0 0.0
    %1863 = vmatprep.subr.mxu0 0.0
    %1864 = vmatpush2.msra.mxu0 0.0
    %1865 = vmatprep.mubr.f32.mxu0 0.0
    %1866 = vmatmul.mubr.f32.gmra.mxu0 %v1796
    %v1867 = vpop.f32.mrf.mxu0
    %v1868 = vadd.f32 0.0, %v1867
    %v1869 = vpop.f32.mrf.mxu0
    %1870 = vmatprep.mubr.f32.mxu0 0.0
    %1871 = vmatmul.mubr.f32.gmra.mxu0 %v1799
    %v1872 = vpop.f32.mrf.mxu0
    %v1873 = vadd.f32 0.0, %v1872
    %v1874 = vpop.f32.mrf.mxu0
    %1875 = vdwg.mxu0
    %1876 = vrot.lane.b32.xlu0 %v1538, 120
    %v1877 = vpop.permute.xlu0 %1876
    %1878 = vrot.lane.b32.xlu0 %v1543, 120
    %v1879 = vpop.permute.xlu0 %1878
    %1880 = vrot.lane.b32.xlu0 %v1616, 120
    %v1881 = vpop.permute.xlu0 %1880
    %v1882 = vsel %vm354, %v1877, 0
    %v1884 = vsel %vm354, %v1879, 0
    %v1886 = vsel %vm354, %v1881, 0
    %1888 = vmatprep.subr.mxu0 0.0
    %1889 = vmatpush1.xpose.msra.mxu0 0.0
    %1890 = vmatprep.subr.mxu0 0.0
    %1891 = vmatpush1.xpose.msra.mxu0 0.0
    %1892 = vmatprep.subr.mxu0 0.0
    %1893 = vmatpush1.xpose.msra.mxu0 0.0
    %1894 = vmatprep.subr.mxu0 0.0
    %1895 = vmatpush1.xpose.msra.mxu0 0.0
    %1896 = vmatprep.subr.mxu0 0.0
    %1897 = vmatpush1.xpose.msra.mxu0 0.0
    %1898 = vmatprep.subr.mxu0 0.0
    %1899 = vmatpush1.xpose.msra.mxu0 0.0
    %1900 = vmatprep.subr.mxu0 0.0
    %1901 = vmatpush1.xpose.msra.mxu0 0.0
    %1902 = vmatprep.subr.mxu0 0.0
    %1903 = vmatpush1.xpose.msra.mxu0 0.0
    %1904 = vmatprep.subr.mxu0 0.0
    %1905 = vmatpush1.xpose.msra.mxu0 0.0
    %1906 = vmatprep.subr.mxu0 0.0
    %1907 = vmatpush1.xpose.msra.mxu0 0.0
    %1908 = vmatprep.subr.mxu0 0.0
    %1909 = vmatpush1.xpose.msra.mxu0 0.0
    %1910 = vmatprep.subr.mxu0 0.0
    %1911 = vmatpush1.xpose.msra.mxu0 0.0
    %1912 = vmatprep.subr.mxu0 0.0
    %1913 = vmatpush1.xpose.msra.mxu0 0.0
    %1914 = vmatprep.subr.mxu0 0.0
    %1915 = vmatpush1.xpose.msra.mxu0 0.0
    %1916 = vmatprep.subr.mxu0 0.0
    %1917 = vmatpush1.xpose.msra.mxu0 0.0
    %1918 = vmatprep.subr.mxu0 0.0
    %1919 = vmatpush1.xpose.msra.mxu0 %v1886
    %1920 = vmatprep.subr.mxu0 0.0
    %1921 = vmatpush2.xpose.msra.mxu0 0.0
    %1922 = vmatprep.subr.mxu0 0.0
    %1923 = vmatpush2.xpose.msra.mxu0 0.0
    %1924 = vmatprep.subr.mxu0 0.0
    %1925 = vmatpush2.xpose.msra.mxu0 0.0
    %1926 = vmatprep.subr.mxu0 0.0
    %1927 = vmatpush2.xpose.msra.mxu0 0.0
    %1928 = vmatprep.subr.mxu0 0.0
    %1929 = vmatpush2.xpose.msra.mxu0 0.0
    %1930 = vmatprep.subr.mxu0 0.0
    %1931 = vmatpush2.xpose.msra.mxu0 0.0
    %1932 = vmatprep.subr.mxu0 0.0
    %1933 = vmatpush2.xpose.msra.mxu0 0.0
    %1934 = vmatprep.subr.mxu0 0.0
    %1935 = vmatpush2.xpose.msra.mxu0 0.0
    %1936 = vmatprep.subr.mxu0 0.0
    %1937 = vmatpush2.xpose.msra.mxu0 0.0
    %1938 = vmatprep.subr.mxu0 0.0
    %1939 = vmatpush2.xpose.msra.mxu0 0.0
    %1940 = vmatprep.subr.mxu0 0.0
    %1941 = vmatpush2.xpose.msra.mxu0 0.0
    %1942 = vmatprep.subr.mxu0 0.0
    %1943 = vmatpush2.xpose.msra.mxu0 0.0
    %1944 = vmatprep.subr.mxu0 0.0
    %1945 = vmatpush2.xpose.msra.mxu0 0.0
    %1946 = vmatprep.subr.mxu0 0.0
    %1947 = vmatpush2.xpose.msra.mxu0 0.0
    %1948 = vmatprep.subr.mxu0 0.0
    %1949 = vmatpush2.xpose.msra.mxu0 0.0
    %1950 = vmatprep.subr.mxu0 0.0
    %1951 = vmatpush2.xpose.msra.mxu0 0.0
    %1952 = vmatprep.mubr.f32.mxu0 0.0
    %1953 = vmatmul.mubr.f32.gmra.mxu0 %v1882
    %v1954 = vpop.f32.mrf.mxu0
    %v1955 = vadd.f32 0.0, %v1954
    %v1956 = vpop.f32.mrf.mxu0
    %1957 = vmatprep.mubr.f32.mxu0 0.0
    %1958 = vmatmul.mubr.f32.gmra.mxu0 %v1884
    %v1959 = vpop.f32.mrf.mxu0
    %v1960 = vadd.f32 0.0, %v1959
    %v1961 = vpop.f32.mrf.mxu0
    %1962 = vdwg.mxu0
    %v1963 = vsel %vm354, %v1955, -inf
    %1964 = vmax.xlane.f32.xlu0 %v1963
    %v1965 = vpop.xlane.xlu0 %1964
    %v1966 = vsel %vm354, %v1960, -inf
    %1967 = vmax.xlane.f32.xlu0 %v1966
    %v1968 = vpop.xlane.xlu0 %1967
    %v1969 = vsub.f32 %v1955, %v1965
    %v1970 = vsub.f32 %v1960, %v1968
    %v1971 = vmul.f32 %v1969, 1.442695
    %v1972 = vpow.pop %v1971
    %v1973 = vmul.f32 %v1970, 1.442695
    %v1974 = vpow.pop %v1973
    %v1975 = vsel %vm354, %v1972, 0.0
    %1976 = vadd.xlane.f32.xlu0 %v1975
    %v1977 = vpop.xlane.xlu0 %1976
    %v1978 = vsel %vm354, %v1974, 0.0
    %1979 = vadd.xlane.f32.xlu0 %v1978
    %v1980 = vpop.xlane.xlu0 %1979
    %v1981 = vrcp.pop %v1977
    %v1982 = vrcp.pop %v1980
    %v1983 = vmul.f32 %v1972, %v1981
    %v1984 = vmul.f32 %v1974, %v1982
    %1986 = vrot.lane.b32.xlu0 %v1686, 120
    %v1987 = vpop.permute.xlu0 %1986
    %v1990 = vsel %vm354, %v1983, 0
    %v1993 = vsel %vm354, %v1984, 0
    %1995 = vmatprep.subr.mxu0 0.0
    %1996 = vmatpush1.msra.mxu0 0.0
    %1997 = vmatprep.subr.mxu0 0.0
    %1998 = vmatpush1.msra.mxu0 0.0
    %1999 = vmatprep.subr.mxu0 0.0
    %2000 = vmatpush1.msra.mxu0 0.0
    %2001 = vmatprep.subr.mxu0 0.0
    %2002 = vmatpush1.msra.mxu0 0.0
    %2003 = vmatprep.subr.mxu0 0.0
    %2004 = vmatpush1.msra.mxu0 0.0
    %2005 = vmatprep.subr.mxu0 0.0
    %2006 = vmatpush1.msra.mxu0 0.0
    %2007 = vmatprep.subr.mxu0 0.0
    %2008 = vmatpush1.msra.mxu0 0.0
    %2009 = vmatprep.subr.mxu0 0.0
    %2010 = vmatpush1.msra.mxu0 0.0
    %2011 = vmatprep.subr.mxu0 0.0
    %2012 = vmatpush1.msra.mxu0 0.0
    %2013 = vmatprep.subr.mxu0 0.0
    %2014 = vmatpush1.msra.mxu0 0.0
    %2015 = vmatprep.subr.mxu0 0.0
    %2016 = vmatpush1.msra.mxu0 0.0
    %2017 = vmatprep.subr.mxu0 0.0
    %2018 = vmatpush1.msra.mxu0 0.0
    %2019 = vmatprep.subr.mxu0 0.0
    %2020 = vmatpush1.msra.mxu0 0.0
    %2021 = vmatprep.subr.mxu0 0.0
    %2022 = vmatpush1.msra.mxu0 0.0
    %2023 = vmatprep.subr.mxu0 0.0
    %2024 = vmatpush1.msra.mxu0 0.0
    %2025 = vmatprep.subr.mxu0 0.0
    %2026 = vmatpush1.msra.mxu0 %v1987
    %2027 = vmatprep.subr.mxu0 0.0
    %2028 = vmatpush2.msra.mxu0 0.0
    %2029 = vmatprep.subr.mxu0 0.0
    %2030 = vmatpush2.msra.mxu0 0.0
    %2031 = vmatprep.subr.mxu0 0.0
    %2032 = vmatpush2.msra.mxu0 0.0
    %2033 = vmatprep.subr.mxu0 0.0
    %2034 = vmatpush2.msra.mxu0 0.0
    %2035 = vmatprep.subr.mxu0 0.0
    %2036 = vmatpush2.msra.mxu0 0.0
    %2037 = vmatprep.subr.mxu0 0.0
    %2038 = vmatpush2.msra.mxu0 0.0
    %2039 = vmatprep.subr.mxu0 0.0
    %2040 = vmatpush2.msra.mxu0 0.0
    %2041 = vmatprep.subr.mxu0 0.0
    %2042 = vmatpush2.msra.mxu0 0.0
    %2043 = vmatprep.subr.mxu0 0.0
    %2044 = vmatpush2.msra.mxu0 0.0
    %2045 = vmatprep.subr.mxu0 0.0
    %2046 = vmatpush2.msra.mxu0 0.0
    %2047 = vmatprep.subr.mxu0 0.0
    %2048 = vmatpush2.msra.mxu0 0.0
    %2049 = vmatprep.subr.mxu0 0.0
    %2050 = vmatpush2.msra.mxu0 0.0
    %2051 = vmatprep.subr.mxu0 0.0
    %2052 = vmatpush2.msra.mxu0 0.0
    %2053 = vmatprep.subr.mxu0 0.0
    %2054 = vmatpush2.msra.mxu0 0.0
    %2055 = vmatprep.subr.mxu0 0.0
    %2056 = vmatpush2.msra.mxu0 0.0
    %2057 = vmatprep.subr.mxu0 0.0
    %2058 = vmatpush2.msra.mxu0 0.0
    %2059 = vmatprep.mubr.f32.mxu0 0.0
    %2060 = vmatmul.mubr.f32.gmra.mxu0 %v1990
    %v2061 = vpop.f32.mrf.mxu0
    %v2062 = vadd.f32 0.0, %v2061
    %v2063 = vpop.f32.mrf.mxu0
    %2064 = vmatprep.mubr.f32.mxu0 0.0
    %2065 = vmatmul.mubr.f32.gmra.mxu0 %v1993
    %v2066 = vpop.f32.mrf.mxu0
    %v2067 = vadd.f32 0.0, %v2066
    %v2068 = vpop.f32.mrf.mxu0
    %2069 = vdwg.mxu0
    %v2071 = vsel %vm354, %v2062, 0
    %v2074 = vsel %vm354, %v2067, 0
    %2076 = vmatprep.subr.mxu0 0.0
    %2077 = vmatpush1.msra.mxu0 0.0
    %2078 = vmatprep.subr.mxu0 0.0
    %2079 = vmatpush1.msra.mxu0 0.0
    %2080 = vmatprep.subr.mxu0 0.0
    %2081 = vmatpush1.msra.mxu0 0.0
    %2082 = vmatprep.subr.mxu0 0.0
    %2083 = vmatpush1.msra.mxu0 0.0
    %2084 = vmatprep.subr.mxu0 0.0
    %2085 = vmatpush1.msra.mxu0 0.0
    %2086 = vmatprep.subr.mxu0 0.0
    %2087 = vmatpush1.msra.mxu0 0.0
    %2088 = vmatprep.subr.mxu0 0.0
    %2089 = vmatpush1.msra.mxu0 0.0
    %2090 = vmatprep.subr.mxu0 0.0
    %2091 = vmatpush1.msra.mxu0 0.0
    %2092 = vmatprep.subr.mxu0 0.0
    %2093 = vmatpush1.msra.mxu0 0.0
    %2094 = vmatprep.subr.mxu0 0.0
    %2095 = vmatpush1.msra.mxu0 0.0
    %2096 = vmatprep.subr.mxu0 0.0
    %2097 = vmatpush1.msra.mxu0 0.0
    %2098 = vmatprep.subr.mxu0 0.0
    %2099 = vmatpush1.msra.mxu0 0.0
    %2100 = vmatprep.subr.mxu0 0.0
    %2101 = vmatpush1.msra.mxu0 0.0
    %2102 = vmatprep.subr.mxu0 0.0
    %2103 = vmatpush1.msra.mxu0 0.0
    %2104 = vmatprep.subr.mxu0 0.0
    %2105 = vmatpush1.msra.mxu0 0.0
    %2106 = vmatprep.subr.mxu0 0.0
    %2107 = vmatpush1.msra.mxu0 %v122
    %2108 = vmatprep.subr.mxu0 0.0
    %2109 = vmatpush2.msra.mxu0 0.0
    %2110 = vmatprep.subr.mxu0 0.0
    %2111 = vmatpush2.msra.mxu0 0.0
    %2112 = vmatprep.subr.mxu0 0.0
    %2113 = vmatpush2.msra.mxu0 0.0
    %2114 = vmatprep.subr.mxu0 0.0
    %2115 = vmatpush2.msra.mxu0 0.0
    %2116 = vmatprep.subr.mxu0 0.0
    %2117 = vmatpush2.msra.mxu0 0.0
    %2118 = vmatprep.subr.mxu0 0.0
    %2119 = vmatpush2.msra.mxu0 0.0
    %2120 = vmatprep.subr.mxu0 0.0
    %2121 = vmatpush2.msra.mxu0 0.0
    %2122 = vmatprep.subr.mxu0 0.0
    %2123 = vmatpush2.msra.mxu0 0.0
    %2124 = vmatprep.subr.mxu0 0.0
    %2125 = vmatpush2.msra.mxu0 0.0
    %2126 = vmatprep.subr.mxu0 0.0
    %2127 = vmatpush2.msra.mxu0 0.0
    %2128 = vmatprep.subr.mxu0 0.0
    %2129 = vmatpush2.msra.mxu0 0.0
    %2130 = vmatprep.subr.mxu0 0.0
    %2131 = vmatpush2.msra.mxu0 0.0
    %2132 = vmatprep.subr.mxu0 0.0
    %2133 = vmatpush2.msra.mxu0 0.0
    %2134 = vmatprep.subr.mxu0 0.0
    %2135 = vmatpush2.msra.mxu0 0.0
    %2136 = vmatprep.subr.mxu0 0.0
    %2137 = vmatpush2.msra.mxu0 0.0
    %2138 = vmatprep.subr.mxu0 0.0
    %2139 = vmatpush2.msra.mxu0 0.0
    %2140 = vmatprep.mubr.f32.mxu0 0.0
    %2141 = vmatmul.mubr.f32.gmra.mxu0 %v2071
    %v2142 = vpop.f32.mrf.mxu0
    %v2143 = vadd.f32 0.0, %v2142
    %v2144 = vpop.f32.mrf.mxu0
    %2145 = vmatprep.mubr.f32.mxu0 0.0
    %2146 = vmatmul.mubr.f32.gmra.mxu0 %v2074
    %v2147 = vpop.f32.mrf.mxu0
    %v2148 = vadd.f32 0.0, %v2147
    %v2149 = vpop.f32.mrf.mxu0
    %2150 = vdwg.mxu0
    %v2152 = vsel %vm354, %v1868, 0
    %v2155 = vsel %vm354, %v1873, 0
    %2157 = vmatprep.subr.mxu0 0.0
    %2158 = vmatpush1.msra.mxu0 0.0
    %2159 = vmatprep.subr.mxu0 0.0
    %2160 = vmatpush1.msra.mxu0 0.0
    %2161 = vmatprep.subr.mxu0 0.0
    %2162 = vmatpush1.msra.mxu0 0.0
    %2163 = vmatprep.subr.mxu0 0.0
    %2164 = vmatpush1.msra.mxu0 0.0
    %2165 = vmatprep.subr.mxu0 0.0
    %2166 = vmatpush1.msra.mxu0 0.0
    %2167 = vmatprep.subr.mxu0 0.0
    %2168 = vmatpush1.msra.mxu0 0.0
    %2169 = vmatprep.subr.mxu0 0.0
    %2170 = vmatpush1.msra.mxu0 0.0
    %2171 = vmatprep.subr.mxu0 0.0
    %2172 = vmatpush1.msra.mxu0 0.0
    %2173 = vmatprep.subr.mxu0 0.0
    %2174 = vmatpush1.msra.mxu0 0.0
    %2175 = vmatprep.subr.mxu0 0.0
    %2176 = vmatpush1.msra.mxu0 0.0
    %2177 = vmatprep.subr.mxu0 0.0
    %2178 = vmatpush1.msra.mxu0 0.0
    %2179 = vmatprep.subr.mxu0 0.0
    %2180 = vmatpush1.msra.mxu0 0.0
    %2181 = vmatprep.subr.mxu0 0.0
    %2182 = vmatpush1.msra.mxu0 0.0
    %2183 = vmatprep.subr.mxu0 0.0
    %2184 = vmatpush1.msra.mxu0 0.0
    %2185 = vmatprep.subr.mxu0 0.0
    %2186 = vmatpush1.msra.mxu0 0.0
    %2187 = vmatprep.subr.mxu0 0.0
    %2188 = vmatpush1.msra.mxu0 %v121
    %2189 = vmatprep.subr.mxu0 0.0
    %2190 = vmatpush2.msra.mxu0 0.0
    %2191 = vmatprep.subr.mxu0 0.0
    %2192 = vmatpush2.msra.mxu0 0.0
    %2193 = vmatprep.subr.mxu0 0.0
    %2194 = vmatpush2.msra.mxu0 0.0
    %2195 = vmatprep.subr.mxu0 0.0
    %2196 = vmatpush2.msra.mxu0 0.0
    %2197 = vmatprep.subr.mxu0 0.0
    %2198 = vmatpush2.msra.mxu0 0.0
    %2199 = vmatprep.subr.mxu0 0.0
    %2200 = vmatpush2.msra.mxu0 0.0
    %2201 = vmatprep.subr.mxu0 0.0
    %2202 = vmatpush2.msra.mxu0 0.0
    %2203 = vmatprep.subr.mxu0 0.0
    %2204 = vmatpush2.msra.mxu0 0.0
    %2205 = vmatprep.subr.mxu0 0.0
    %2206 = vmatpush2.msra.mxu0 0.0
    %2207 = vmatprep.subr.mxu0 0.0
    %2208 = vmatpush2.msra.mxu0 0.0
    %2209 = vmatprep.subr.mxu0 0.0
    %2210 = vmatpush2.msra.mxu0 0.0
    %2211 = vmatprep.subr.mxu0 0.0
    %2212 = vmatpush2.msra.mxu0 0.0
    %2213 = vmatprep.subr.mxu0 0.0
    %2214 = vmatpush2.msra.mxu0 0.0
    %2215 = vmatprep.subr.mxu0 0.0
    %2216 = vmatpush2.msra.mxu0 0.0
    %2217 = vmatprep.subr.mxu0 0.0
    %2218 = vmatpush2.msra.mxu0 0.0
    %2219 = vmatprep.subr.mxu0 0.0
    %2220 = vmatpush2.msra.mxu0 0.0
    %2221 = vmatprep.mubr.f32.mxu0 0.0
    %2222 = vmatmul.mubr.f32.gmra.mxu0 %v2152
    %v2223 = vpop.f32.mrf.mxu0
    %v2224 = vadd.f32 %v2143, %v2223
    %v2225 = vpop.f32.mrf.mxu0
    %2226 = vmatprep.mubr.f32.mxu0 0.0
    %2227 = vmatmul.mubr.f32.gmra.mxu0 %v2155
    %v2228 = vpop.f32.mrf.mxu0
    %v2229 = vadd.f32 %v2148, %v2228
    %v2230 = vpop.f32.mrf.mxu0
    %2231 = vdwg.mxu0
    %2232 = vrot.lane.b32.xlu0 %v1538, 112
    %v2233 = vpop.permute.xlu0 %2232
    %2234 = vrot.lane.b32.xlu0 %v1543, 112
    %v2235 = vpop.permute.xlu0 %2234
    %2236 = vrot.lane.b32.xlu0 %v1616, 112
    %v2237 = vpop.permute.xlu0 %2236
    %v2238 = vsel %vm354, %v2233, 0
    %v2240 = vsel %vm354, %v2235, 0
    %v2242 = vsel %vm354, %v2237, 0
    %2244 = vmatprep.subr.mxu0 0.0
    %2245 = vmatpush1.xpose.msra.mxu0 0.0
    %2246 = vmatprep.subr.mxu0 0.0
    %2247 = vmatpush1.xpose.msra.mxu0 0.0
    %2248 = vmatprep.subr.mxu0 0.0
    %2249 = vmatpush1.xpose.msra.mxu0 0.0
    %2250 = vmatprep.subr.mxu0 0.0
    %2251 = vmatpush1.xpose.msra.mxu0 0.0
    %2252 = vmatprep.subr.mxu0 0.0
    %2253 = vmatpush1.xpose.msra.mxu0 0.0
    %2254 = vmatprep.subr.mxu0 0.0
    %2255 = vmatpush1.xpose.msra.mxu0 0.0
    %2256 = vmatprep.subr.mxu0 0.0
    %2257 = vmatpush1.xpose.msra.mxu0 0.0
    %2258 = vmatprep.subr.mxu0 0.0
    %2259 = vmatpush1.xpose.msra.mxu0 0.0
    %2260 = vmatprep.subr.mxu0 0.0
    %2261 = vmatpush1.xpose.msra.mxu0 0.0
    %2262 = vmatprep.subr.mxu0 0.0
    %2263 = vmatpush1.xpose.msra.mxu0 0.0
    %2264 = vmatprep.subr.mxu0 0.0
    %2265 = vmatpush1.xpose.msra.mxu0 0.0
    %2266 = vmatprep.subr.mxu0 0.0
    %2267 = vmatpush1.xpose.msra.mxu0 0.0
    %2268 = vmatprep.subr.mxu0 0.0
    %2269 = vmatpush1.xpose.msra.mxu0 0.0
    %2270 = vmatprep.subr.mxu0 0.0
    %2271 = vmatpush1.xpose.msra.mxu0 0.0
    %2272 = vmatprep.subr.mxu0 0.0
    %2273 = vmatpush1.xpose.msra.mxu0 0.0
    %2274 = vmatprep.subr.mxu0 0.0
    %2275 = vmatpush1.xpose.msra.mxu0 %v2242
    %2276 = vmatprep.subr.mxu0 0.0
    %2277 = vmatpush2.xpose.msra.mxu0 0.0
    %2278 = vmatprep.subr.mxu0 0.0
    %2279 = vmatpush2.xpose.msra.mxu0 0.0
    %2280 = vmatprep.subr.mxu0 0.0
    %2281 = vmatpush2.xpose.msra.mxu0 0.0
    %2282 = vmatprep.subr.mxu0 0.0
    %2283 = vmatpush2.xpose.msra.mxu0 0.0
    %2284 = vmatprep.subr.mxu0 0.0
    %2285 = vmatpush2.xpose.msra.mxu0 0.0
    %2286 = vmatprep.subr.mxu0 0.0
    %2287 = vmatpush2.xpose.msra.mxu0 0.0
    %2288 = vmatprep.subr.mxu0 0.0
    %2289 = vmatpush2.xpose.msra.mxu0 0.0
    %2290 = vmatprep.subr.mxu0 0.0
    %2291 = vmatpush2.xpose.msra.mxu0 0.0
    %2292 = vmatprep.subr.mxu0 0.0
    %2293 = vmatpush2.xpose.msra.mxu0 0.0
    %2294 = vmatprep.subr.mxu0 0.0
    %2295 = vmatpush2.xpose.msra.mxu0 0.0
    %2296 = vmatprep.subr.mxu0 0.0
    %2297 = vmatpush2.xpose.msra.mxu0 0.0
    %2298 = vmatprep.subr.mxu0 0.0
    %2299 = vmatpush2.xpose.msra.mxu0 0.0
    %2300 = vmatprep.subr.mxu0 0.0
    %2301 = vmatpush2.xpose.msra.mxu0 0.0
    %2302 = vmatprep.subr.mxu0 0.0
    %2303 = vmatpush2.xpose.msra.mxu0 0.0
    %2304 = vmatprep.subr.mxu0 0.0
    %2305 = vmatpush2.xpose.msra.mxu0 0.0
    %2306 = vmatprep.subr.mxu0 0.0
    %2307 = vmatpush2.xpose.msra.mxu0 0.0
    %2308 = vmatprep.mubr.f32.mxu0 0.0
    %2309 = vmatmul.mubr.f32.gmra.mxu0 %v2238
    %v2310 = vpop.f32.mrf.mxu0
    %v2311 = vadd.f32 0.0, %v2310
    %v2312 = vpop.f32.mrf.mxu0
    %2313 = vmatprep.mubr.f32.mxu0 0.0
    %2314 = vmatmul.mubr.f32.gmra.mxu0 %v2240
    %v2315 = vpop.f32.mrf.mxu0
    %v2316 = vadd.f32 0.0, %v2315
    %v2317 = vpop.f32.mrf.mxu0
    %2318 = vdwg.mxu0
    %v2319 = vsel %vm354, %v2311, -inf
    %2320 = vmax.xlane.f32.xlu0 %v2319
    %v2321 = vpop.xlane.xlu0 %2320
    %v2322 = vsel %vm354, %v2316, -inf
    %2323 = vmax.xlane.f32.xlu0 %v2322
    %v2324 = vpop.xlane.xlu0 %2323
    %v2325 = vsub.f32 %v2311, %v2321
    %v2326 = vsub.f32 %v2316, %v2324
    %v2327 = vmul.f32 %v2325, 1.442695
    %v2328 = vpow.pop %v2327
    %v2329 = vmul.f32 %v2326, 1.442695
    %v2330 = vpow.pop %v2329
    %v2331 = vsel %vm354, %v2328, 0.0
    %2332 = vadd.xlane.f32.xlu0 %v2331
    %v2333 = vpop.xlane.xlu0 %2332
    %v2334 = vsel %vm354, %v2330, 0.0
    %2335 = vadd.xlane.f32.xlu0 %v2334
    %v2336 = vpop.xlane.xlu0 %2335
    %v2337 = vrcp.pop %v2333
    %v2338 = vrcp.pop %v2336
    %v2339 = vmul.f32 %v2328, %v2337
    %v2340 = vmul.f32 %v2330, %v2338
    %2341 = vrot.lane.b32.xlu0 %v1686, 112
    %v2342 = vpop.permute.xlu0 %2341
    %v2345 = vsel %vm354, %v2339, 0
    %v2348 = vsel %vm354, %v2340, 0
    %2350 = vmatprep.subr.mxu0 0.0
    %2351 = vmatpush1.msra.mxu0 0.0
    %2352 = vmatprep.subr.mxu0 0.0
    %2353 = vmatpush1.msra.mxu0 0.0
    %2354 = vmatprep.subr.mxu0 0.0
    %2355 = vmatpush1.msra.mxu0 0.0
    %2356 = vmatprep.subr.mxu0 0.0
    %2357 = vmatpush1.msra.mxu0 0.0
    %2358 = vmatprep.subr.mxu0 0.0
    %2359 = vmatpush1.msra.mxu0 0.0
    %2360 = vmatprep.subr.mxu0 0.0
    %2361 = vmatpush1.msra.mxu0 0.0
    %2362 = vmatprep.subr.mxu0 0.0
    %2363 = vmatpush1.msra.mxu0 0.0
    %2364 = vmatprep.subr.mxu0 0.0
    %2365 = vmatpush1.msra.mxu0 0.0
    %2366 = vmatprep.subr.mxu0 0.0
    %2367 = vmatpush1.msra.mxu0 0.0
    %2368 = vmatprep.subr.mxu0 0.0
    %2369 = vmatpush1.msra.mxu0 0.0
    %2370 = vmatprep.subr.mxu0 0.0
    %2371 = vmatpush1.msra.mxu0 0.0
    %2372 = vmatprep.subr.mxu0 0.0
    %2373 = vmatpush1.msra.mxu0 0.0
    %2374 = vmatprep.subr.mxu0 0.0
    %2375 = vmatpush1.msra.mxu0 0.0
    %2376 = vmatprep.subr.mxu0 0.0
    %2377 = vmatpush1.msra.mxu0 0.0
    %2378 = vmatprep.subr.mxu0 0.0
    %2379 = vmatpush1.msra.mxu0 0.0
    %2380 = vmatprep.subr.mxu0 0.0
    %2381 = vmatpush1.msra.mxu0 %v2342
    %2382 = vmatprep.subr.mxu0 0.0
    %2383 = vmatpush2.msra.mxu0 0.0
    %2384 = vmatprep.subr.mxu0 0.0
    %2385 = vmatpush2.msra.mxu0 0.0
    %2386 = vmatprep.subr.mxu0 0.0
    %2387 = vmatpush2.msra.mxu0 0.0
    %2388 = vmatprep.subr.mxu0 0.0
    %2389 = vmatpush2.msra.mxu0 0.0
    %2390 = vmatprep.subr.mxu0 0.0
    %2391 = vmatpush2.msra.mxu0 0.0
    %2392 = vmatprep.subr.mxu0 0.0
    %2393 = vmatpush2.msra.mxu0 0.0
    %2394 = vmatprep.subr.mxu0 0.0
    %2395 = vmatpush2.msra.mxu0 0.0
    %2396 = vmatprep.subr.mxu0 0.0
    %2397 = vmatpush2.msra.mxu0 0.0
    %2398 = vmatprep.subr.mxu0 0.0
    %2399 = vmatpush2.msra.mxu0 0.0
    %2400 = vmatprep.subr.mxu0 0.0
    %2401 = vmatpush2.msra.mxu0 0.0
    %2402 = vmatprep.subr.mxu0 0.0
    %2403 = vmatpush2.msra.mxu0 0.0
    %2404 = vmatprep.subr.mxu0 0.0
    %2405 = vmatpush2.msra.mxu0 0.0
    %2406 = vmatprep.subr.mxu0 0.0
    %2407 = vmatpush2.msra.mxu0 0.0
    %2408 = vmatprep.subr.mxu0 0.0
    %2409 = vmatpush2.msra.mxu0 0.0
    %2410 = vmatprep.subr.mxu0 0.0
    %2411 = vmatpush2.msra.mxu0 0.0
    %2412 = vmatprep.subr.mxu0 0.0
    %2413 = vmatpush2.msra.mxu0 0.0
    %2414 = vmatprep.mubr.f32.mxu0 0.0
    %2415 = vmatmul.mubr.f32.gmra.mxu0 %v2345
    %v2416 = vpop.f32.mrf.mxu0
    %v2417 = vadd.f32 0.0, %v2416
    %v2418 = vpop.f32.mrf.mxu0
    %2419 = vmatprep.mubr.f32.mxu0 0.0
    %2420 = vmatmul.mubr.f32.gmra.mxu0 %v2348
    %v2421 = vpop.f32.mrf.mxu0
    %v2422 = vadd.f32 0.0, %v2421
    %v2423 = vpop.f32.mrf.mxu0
    %2424 = vdwg.mxu0
    %v2426 = vsel %vm354, %v2417, 0
    %v2429 = vsel %vm354, %v2422, 0
    %2431 = vmatprep.subr.mxu0 0.0
    %2432 = vmatpush1.msra.mxu0 0.0
    %2433 = vmatprep.subr.mxu0 0.0
    %2434 = vmatpush1.msra.mxu0 0.0
    %2435 = vmatprep.subr.mxu0 0.0
    %2436 = vmatpush1.msra.mxu0 0.0
    %2437 = vmatprep.subr.mxu0 0.0
    %2438 = vmatpush1.msra.mxu0 0.0
    %2439 = vmatprep.subr.mxu0 0.0
    %2440 = vmatpush1.msra.mxu0 0.0
    %2441 = vmatprep.subr.mxu0 0.0
    %2442 = vmatpush1.msra.mxu0 0.0
    %2443 = vmatprep.subr.mxu0 0.0
    %2444 = vmatpush1.msra.mxu0 0.0
    %2445 = vmatprep.subr.mxu0 0.0
    %2446 = vmatpush1.msra.mxu0 0.0
    %2447 = vmatprep.subr.mxu0 0.0
    %2448 = vmatpush1.msra.mxu0 0.0
    %2449 = vmatprep.subr.mxu0 0.0
    %2450 = vmatpush1.msra.mxu0 0.0
    %2451 = vmatprep.subr.mxu0 0.0
    %2452 = vmatpush1.msra.mxu0 0.0
    %2453 = vmatprep.subr.mxu0 0.0
    %2454 = vmatpush1.msra.mxu0 0.0
    %2455 = vmatprep.subr.mxu0 0.0
    %2456 = vmatpush1.msra.mxu0 0.0
    %2457 = vmatprep.subr.mxu0 0.0
    %2458 = vmatpush1.msra.mxu0 0.0
    %2459 = vmatprep.subr.mxu0 0.0
    %2460 = vmatpush1.msra.mxu0 0.0
    %2461 = vmatprep.subr.mxu0 0.0
    %2462 = vmatpush1.msra.mxu0 %v123
    %2463 = vmatprep.subr.mxu0 0.0
    %2464 = vmatpush2.msra.mxu0 0.0
    %2465 = vmatprep.subr.mxu0 0.0
    %2466 = vmatpush2.msra.mxu0 0.0
    %2467 = vmatprep.subr.mxu0 0.0
    %2468 = vmatpush2.msra.mxu0 0.0
    %2469 = vmatprep.subr.mxu0 0.0
    %2470 = vmatpush2.msra.mxu0 0.0
    %2471 = vmatprep.subr.mxu0 0.0
    %2472 = vmatpush2.msra.mxu0 0.0
    %2473 = vmatprep.subr.mxu0 0.0
    %2474 = vmatpush2.msra.mxu0 0.0
    %2475 = vmatprep.subr.mxu0 0.0
    %2476 = vmatpush2.msra.mxu0 0.0
    %2477 = vmatprep.subr.mxu0 0.0
    %2478 = vmatpush2.msra.mxu0 0.0
    %2479 = vmatprep.subr.mxu0 0.0
    %2480 = vmatpush2.msra.mxu0 0.0
    %2481 = vmatprep.subr.mxu0 0.0
    %2482 = vmatpush2.msra.mxu0 0.0
    %2483 = vmatprep.subr.mxu0 0.0
    %2484 = vmatpush2.msra.mxu0 0.0
    %2485 = vmatprep.subr.mxu0 0.0
    %2486 = vmatpush2.msra.mxu0 0.0
    %2487 = vmatprep.subr.mxu0 0.0
    %2488 = vmatpush2.msra.mxu0 0.0
    %2489 = vmatprep.subr.mxu0 0.0
    %2490 = vmatpush2.msra.mxu0 0.0
    %2491 = vmatprep.subr.mxu0 0.0
    %2492 = vmatpush2.msra.mxu0 0.0
    %2493 = vmatprep.subr.mxu0 0.0
    %2494 = vmatpush2.msra.mxu0 0.0
    %2495 = vmatprep.mubr.f32.mxu0 0.0
    %2496 = vmatmul.mubr.f32.gmra.mxu0 %v2426
    %v2497 = vpop.f32.mrf.mxu0
    %v2498 = vadd.f32 0.0, %v2497
    %v2499 = vpop.f32.mrf.mxu0
    %2500 = vmatprep.mubr.f32.mxu0 0.0
    %2501 = vmatmul.mubr.f32.gmra.mxu0 %v2429
    %v2502 = vpop.f32.mrf.mxu0
    %v2503 = vadd.f32 0.0, %v2502
    %v2504 = vpop.f32.mrf.mxu0
    %2505 = vdwg.mxu0
    %v2506 = vadd.f32 %v2224, %v2498
    %v2507 = vadd.f32 %v2229, %v2503
    %2508 = vrot.lane.b32.xlu0 %v1538, 104
    %v2509 = vpop.permute.xlu0 %2508
    %2510 = vrot.lane.b32.xlu0 %v1543, 104
    %v2511 = vpop.permute.xlu0 %2510
    %2512 = vrot.lane.b32.xlu0 %v1616, 104
    %v2513 = vpop.permute.xlu0 %2512
    %v2514 = vsel %vm354, %v2509, 0
    %v2516 = vsel %vm354, %v2511, 0
    %v2518 = vsel %vm354, %v2513, 0
    %2520 = vmatprep.subr.mxu0 0.0
    %2521 = vmatpush1.xpose.msra.mxu0 0.0
    %2522 = vmatprep.subr.mxu0 0.0
    %2523 = vmatpush1.xpose.msra.mxu0 0.0
    %2524 = vmatprep.subr.mxu0 0.0
    %2525 = vmatpush1.xpose.msra.mxu0 0.0
    %2526 = vmatprep.subr.mxu0 0.0
    %2527 = vmatpush1.xpose.msra.mxu0 0.0
    %2528 = vmatprep.subr.mxu0 0.0
    %2529 = vmatpush1.xpose.msra.mxu0 0.0
    %2530 = vmatprep.subr.mxu0 0.0
    %2531 = vmatpush1.xpose.msra.mxu0 0.0
    %2532 = vmatprep.subr.mxu0 0.0
    %2533 = vmatpush1.xpose.msra.mxu0 0.0
    %2534 = vmatprep.subr.mxu0 0.0
    %2535 = vmatpush1.xpose.msra.mxu0 0.0
    %2536 = vmatprep.subr.mxu0 0.0
    %2537 = vmatpush1.xpose.msra.mxu0 0.0
    %2538 = vmatprep.subr.mxu0 0.0
    %2539 = vmatpush1.xpose.msra.mxu0 0.0
    %2540 = vmatprep.subr.mxu0 0.0
    %2541 = vmatpush1.xpose.msra.mxu0 0.0
    %2542 = vmatprep.subr.mxu0 0.0
    %2543 = vmatpush1.xpose.msra.mxu0 0.0
    %2544 = vmatprep.subr.mxu0 0.0
    %2545 = vmatpush1.xpose.msra.mxu0 0.0
    %2546 = vmatprep.subr.mxu0 0.0
    %2547 = vmatpush1.xpose.msra.mxu0 0.0
    %2548 = vmatprep.subr.mxu0 0.0
    %2549 = vmatpush1.xpose.msra.mxu0 0.0
    %2550 = vmatprep.subr.mxu0 0.0
    %2551 = vmatpush1.xpose.msra.mxu0 %v2518
    %2552 = vmatprep.subr.mxu0 0.0
    %2553 = vmatpush2.xpose.msra.mxu0 0.0
    %2554 = vmatprep.subr.mxu0 0.0
    %2555 = vmatpush2.xpose.msra.mxu0 0.0
    %2556 = vmatprep.subr.mxu0 0.0
    %2557 = vmatpush2.xpose.msra.mxu0 0.0
    %2558 = vmatprep.subr.mxu0 0.0
    %2559 = vmatpush2.xpose.msra.mxu0 0.0
    %2560 = vmatprep.subr.mxu0 0.0
    %2561 = vmatpush2.xpose.msra.mxu0 0.0
    %2562 = vmatprep.subr.mxu0 0.0
    %2563 = vmatpush2.xpose.msra.mxu0 0.0
    %2564 = vmatprep.subr.mxu0 0.0
    %2565 = vmatpush2.xpose.msra.mxu0 0.0
    %2566 = vmatprep.subr.mxu0 0.0
    %2567 = vmatpush2.xpose.msra.mxu0 0.0
    %2568 = vmatprep.subr.mxu0 0.0
    %2569 = vmatpush2.xpose.msra.mxu0 0.0
    %2570 = vmatprep.subr.mxu0 0.0
    %2571 = vmatpush2.xpose.msra.mxu0 0.0
    %2572 = vmatprep.subr.mxu0 0.0
    %2573 = vmatpush2.xpose.msra.mxu0 0.0
    %2574 = vmatprep.subr.mxu0 0.0
    %2575 = vmatpush2.xpose.msra.mxu0 0.0
    %2576 = vmatprep.subr.mxu0 0.0
    %2577 = vmatpush2.xpose.msra.mxu0 0.0
    %2578 = vmatprep.subr.mxu0 0.0
    %2579 = vmatpush2.xpose.msra.mxu0 0.0
    %2580 = vmatprep.subr.mxu0 0.0
    %2581 = vmatpush2.xpose.msra.mxu0 0.0
    %2582 = vmatprep.subr.mxu0 0.0
    %2583 = vmatpush2.xpose.msra.mxu0 0.0
    %2584 = vmatprep.mubr.f32.mxu0 0.0
    %2585 = vmatmul.mubr.f32.gmra.mxu0 %v2514
    %v2586 = vpop.f32.mrf.mxu0
    %v2587 = vadd.f32 0.0, %v2586
    %v2588 = vpop.f32.mrf.mxu0
    %2589 = vmatprep.mubr.f32.mxu0 0.0
    %2590 = vmatmul.mubr.f32.gmra.mxu0 %v2516
    %v2591 = vpop.f32.mrf.mxu0
    %v2592 = vadd.f32 0.0, %v2591
    %v2593 = vpop.f32.mrf.mxu0
    %2594 = vdwg.mxu0
    %v2595 = vsel %vm354, %v2587, -inf
    %2596 = vmax.xlane.f32.xlu0 %v2595
    %v2597 = vpop.xlane.xlu0 %2596
    %v2598 = vsel %vm354, %v2592, -inf
    %2599 = vmax.xlane.f32.xlu0 %v2598
    %v2600 = vpop.xlane.xlu0 %2599
    %v2601 = vsub.f32 %v2587, %v2597
    %v2602 = vsub.f32 %v2592, %v2600
    %v2603 = vmul.f32 %v2601, 1.442695
    %v2604 = vpow.pop %v2603
    %v2605 = vmul.f32 %v2602, 1.442695
    %v2606 = vpow.pop %v2605
    %v2607 = vsel %vm354, %v2604, 0.0
    %2608 = vadd.xlane.f32.xlu0 %v2607
    %v2609 = vpop.xlane.xlu0 %2608
    %v2610 = vsel %vm354, %v2606, 0.0
    %2611 = vadd.xlane.f32.xlu0 %v2610
    %v2612 = vpop.xlane.xlu0 %2611
    %v2613 = vrcp.pop %v2609
    %v2614 = vrcp.pop %v2612
    %v2615 = vmul.f32 %v2604, %v2613
    %v2616 = vmul.f32 %v2606, %v2614
    %2617 = vrot.lane.b32.xlu0 %v1686, 104
    %v2618 = vpop.permute.xlu0 %2617
    %v2621 = vsel %vm354, %v2615, 0
    %v2624 = vsel %vm354, %v2616, 0
    %2626 = vmatprep.subr.mxu0 0.0
    %2627 = vmatpush1.msra.mxu0 0.0
    %2628 = vmatprep.subr.mxu0 0.0
    %2629 = vmatpush1.msra.mxu0 0.0
    %2630 = vmatprep.subr.mxu0 0.0
    %2631 = vmatpush1.msra.mxu0 0.0
    %2632 = vmatprep.subr.mxu0 0.0
    %2633 = vmatpush1.msra.mxu0 0.0
    %2634 = vmatprep.subr.mxu0 0.0
    %2635 = vmatpush1.msra.mxu0 0.0
    %2636 = vmatprep.subr.mxu0 0.0
    %2637 = vmatpush1.msra.mxu0 0.0
    %2638 = vmatprep.subr.mxu0 0.0
    %2639 = vmatpush1.msra.mxu0 0.0
    %2640 = vmatprep.subr.mxu0 0.0
    %2641 = vmatpush1.msra.mxu0 0.0
    %2642 = vmatprep.subr.mxu0 0.0
    %2643 = vmatpush1.msra.mxu0 0.0
    %2644 = vmatprep.subr.mxu0 0.0
    %2645 = vmatpush1.msra.mxu0 0.0
    %2646 = vmatprep.subr.mxu0 0.0
    %2647 = vmatpush1.msra.mxu0 0.0
    %2648 = vmatprep.subr.mxu0 0.0
    %2649 = vmatpush1.msra.mxu0 0.0
    %2650 = vmatprep.subr.mxu0 0.0
    %2651 = vmatpush1.msra.mxu0 0.0
    %2652 = vmatprep.subr.mxu0 0.0
    %2653 = vmatpush1.msra.mxu0 0.0
    %2654 = vmatprep.subr.mxu0 0.0
    %2655 = vmatpush1.msra.mxu0 0.0
    %2656 = vmatprep.subr.mxu0 0.0
    %2657 = vmatpush1.msra.mxu0 %v2618
    %2658 = vmatprep.subr.mxu0 0.0
    %2659 = vmatpush2.msra.mxu0 0.0
    %2660 = vmatprep.subr.mxu0 0.0
    %2661 = vmatpush2.msra.mxu0 0.0
    %2662 = vmatprep.subr.mxu0 0.0
    %2663 = vmatpush2.msra.mxu0 0.0
    %2664 = vmatprep.subr.mxu0 0.0
    %2665 = vmatpush2.msra.mxu0 0.0
    %2666 = vmatprep.subr.mxu0 0.0
    %2667 = vmatpush2.msra.mxu0 0.0
    %2668 = vmatprep.subr.mxu0 0.0
    %2669 = vmatpush2.msra.mxu0 0.0
    %2670 = vmatprep.subr.mxu0 0.0
    %2671 = vmatpush2.msra.mxu0 0.0
    %2672 = vmatprep.subr.mxu0 0.0
    %2673 = vmatpush2.msra.mxu0 0.0
    %2674 = vmatprep.subr.mxu0 0.0
    %2675 = vmatpush2.msra.mxu0 0.0
    %2676 = vmatprep.subr.mxu0 0.0
    %2677 = vmatpush2.msra.mxu0 0.0
    %2678 = vmatprep.subr.mxu0 0.0
    %2679 = vmatpush2.msra.mxu0 0.0
    %2680 = vmatprep.subr.mxu0 0.0
    %2681 = vmatpush2.msra.mxu0 0.0
    %2682 = vmatprep.subr.mxu0 0.0
    %2683 = vmatpush2.msra.mxu0 0.0
    %2684 = vmatprep.subr.mxu0 0.0
    %2685 = vmatpush2.msra.mxu0 0.0
    %2686 = vmatprep.subr.mxu0 0.0
    %2687 = vmatpush2.msra.mxu0 0.0
    %2688 = vmatprep.subr.mxu0 0.0
    %2689 = vmatpush2.msra.mxu0 0.0
    %2690 = vmatprep.mubr.f32.mxu0 0.0
    %2691 = vmatmul.mubr.f32.gmra.mxu0 %v2621
    %v2692 = vpop.f32.mrf.mxu0
    %v2693 = vadd.f32 0.0, %v2692
    %v2694 = vpop.f32.mrf.mxu0
    %2695 = vmatprep.mubr.f32.mxu0 0.0
    %2696 = vmatmul.mubr.f32.gmra.mxu0 %v2624
    %v2697 = vpop.f32.mrf.mxu0
    %v2698 = vadd.f32 0.0, %v2697
    %v2699 = vpop.f32.mrf.mxu0
    %2700 = vdwg.mxu0
    %v2702 = vsel %vm354, %v2693, 0
    %v2705 = vsel %vm354, %v2698, 0
    %2707 = vmatprep.subr.mxu0 0.0
    %2708 = vmatpush1.msra.mxu0 0.0
    %2709 = vmatprep.subr.mxu0 0.0
    %2710 = vmatpush1.msra.mxu0 0.0
    %2711 = vmatprep.subr.mxu0 0.0
    %2712 = vmatpush1.msra.mxu0 0.0
    %2713 = vmatprep.subr.mxu0 0.0
    %2714 = vmatpush1.msra.mxu0 0.0
    %2715 = vmatprep.subr.mxu0 0.0
    %2716 = vmatpush1.msra.mxu0 0.0
    %2717 = vmatprep.subr.mxu0 0.0
    %2718 = vmatpush1.msra.mxu0 0.0
    %2719 = vmatprep.subr.mxu0 0.0
    %2720 = vmatpush1.msra.mxu0 0.0
    %2721 = vmatprep.subr.mxu0 0.0
    %2722 = vmatpush1.msra.mxu0 0.0
    %2723 = vmatprep.subr.mxu0 0.0
    %2724 = vmatpush1.msra.mxu0 0.0
    %2725 = vmatprep.subr.mxu0 0.0
    %2726 = vmatpush1.msra.mxu0 0.0
    %2727 = vmatprep.subr.mxu0 0.0
    %2728 = vmatpush1.msra.mxu0 0.0
    %2729 = vmatprep.subr.mxu0 0.0
    %2730 = vmatpush1.msra.mxu0 0.0
    %2731 = vmatprep.subr.mxu0 0.0
    %2732 = vmatpush1.msra.mxu0 0.0
    %2733 = vmatprep.subr.mxu0 0.0
    %2734 = vmatpush1.msra.mxu0 0.0
    %2735 = vmatprep.subr.mxu0 0.0
    %2736 = vmatpush1.msra.mxu0 0.0
    %2737 = vmatprep.subr.mxu0 0.0
    %2738 = vmatpush1.msra.mxu0 %v124
    %2739 = vmatprep.subr.mxu0 0.0
    %2740 = vmatpush2.msra.mxu0 0.0
    %2741 = vmatprep.subr.mxu0 0.0
    %2742 = vmatpush2.msra.mxu0 0.0
    %2743 = vmatprep.subr.mxu0 0.0
    %2744 = vmatpush2.msra.mxu0 0.0
    %2745 = vmatprep.subr.mxu0 0.0
    %2746 = vmatpush2.msra.mxu0 0.0
    %2747 = vmatprep.subr.mxu0 0.0
    %2748 = vmatpush2.msra.mxu0 0.0
    %2749 = vmatprep.subr.mxu0 0.0
    %2750 = vmatpush2.msra.mxu0 0.0
    %2751 = vmatprep.subr.mxu0 0.0
    %2752 = vmatpush2.msra.mxu0 0.0
    %2753 = vmatprep.subr.mxu0 0.0
    %2754 = vmatpush2.msra.mxu0 0.0
    %2755 = vmatprep.subr.mxu0 0.0
    %2756 = vmatpush2.msra.mxu0 0.0
    %2757 = vmatprep.subr.mxu0 0.0
    %2758 = vmatpush2.msra.mxu0 0.0
    %2759 = vmatprep.subr.mxu0 0.0
    %2760 = vmatpush2.msra.mxu0 0.0
    %2761 = vmatprep.subr.mxu0 0.0
    %2762 = vmatpush2.msra.mxu0 0.0
    %2763 = vmatprep.subr.mxu0 0.0
    %2764 = vmatpush2.msra.mxu0 0.0
    %2765 = vmatprep.subr.mxu0 0.0
    %2766 = vmatpush2.msra.mxu0 0.0
    %2767 = vmatprep.subr.mxu0 0.0
    %2768 = vmatpush2.msra.mxu0 0.0
    %2769 = vmatprep.subr.mxu0 0.0
    %2770 = vmatpush2.msra.mxu0 0.0
    %2771 = vmatprep.mubr.f32.mxu0 0.0
    %2772 = vmatmul.mubr.f32.gmra.mxu0 %v2702
    %v2773 = vpop.f32.mrf.mxu0
    %v2774 = vadd.f32 0.0, %v2773
    %v2775 = vpop.f32.mrf.mxu0
    %2776 = vmatprep.mubr.f32.mxu0 0.0
    %2777 = vmatmul.mubr.f32.gmra.mxu0 %v2705
    %v2778 = vpop.f32.mrf.mxu0
    %v2779 = vadd.f32 0.0, %v2778
    %v2780 = vpop.f32.mrf.mxu0
    %2781 = vdwg.mxu0
    %v2782 = vadd.f32 %v2506, %v2774
    %v2783 = vadd.f32 %v2507, %v2779
    %v2784 = vadd.f32 %v2782, %v1454
    %v2785 = vadd.f32 %v2783, %v1454
    %s2786 = scalar_lea.vmem [#allocation13], 16
    %2787 = vst.msk [vmem:[%s2786] sm:$0xff] %vm129, %v2784
    %2788 = vst.msk [vmem:[%s2786 + $0x8] sm:$0xff] %vm129, %v2785
    // Predicated region
    $region54: #{tpu_custom_call.1} parent=1 // pred_check
      _
    $region55: #{tpu_custom_call.1} parent=1 // pred_check_branch
      %2790 = sbr.rel (0) target = $region57
    $region56: #{tpu_custom_call.1} parent=1 // pred_region
      %s2792 = ssub.s32 512, 512
      %2793 = vsyncadd [#allocation4], %s2792
      %s2794 = sshll.u32 [#allocation13], 4
      %s2795 = int_to_ptr.vmem [resolvable:$true] %s2794
      %2800 = dma.vmem_to_hbm [thread:$0]  %s2795, 512, %s7, [#allocation4], 128, 128, 8
    $region57: #{tpu_custom_call.1} parent=1 // pred_fallthru
      _
    // Predicated region
    $region58: #{tpu_custom_call.1} parent=1 // pred_check
      _
    $region59: #{tpu_custom_call.1} parent=1 // pred_check_branch
      %2802 = sbr.rel (0) target = $region61
    $region60: #{tpu_custom_call.1} parent=1 // pred_region
      %2803 = dma.done [#allocation4], 512
    $region61: #{tpu_custom_call.1} parent=1 // pred_fallthru
      _
    %2804 = vsyncpa [#allocation3], 1
    %2805 = vsyncpa [#allocation6], 1
    %2806 = vsyncpa [#allocation9], 1
    %2807 = vsyncpa [#allocation12], 1
    %2808 = vsyncpa [#allocation4], 1

</llo_original>
